<compile_context>
chip_gen: v5e
topology: v5e:2x2
jax: 0.10.0
libtpu: 0.0.40
codegen_flags: <defaults>
</compile_context>

<pallas_src>
import functools

import jax
import jax.numpy as jnp
from jax.experimental import pallas as pl
from jax.experimental.pallas import tpu as pltpu


def _round_up(v, m):
    return ((v + m - 1) // m) * m


def _default_vmem_limit_bytes():
    """Generation-aware VMEM budget (v3-v6: 128 MiB physical, v7x: 64 MiB)."""
    try:
        kind = jax.devices()[0].device_kind.lower()
    except Exception:
        kind = ""
    if any(tag in kind for tag in ("v3", "v4", "v5", "v6")):
        return 96 * 1024 * 1024
    return 44 * 1024 * 1024  # v7x / unknown: stay well inside 64 MiB


# ----------------------------------------------------------------------------
# Shared fused MLP + LayerNorm + residual on one (te, dim) edge tile.
# ----------------------------------------------------------------------------
def _mlp_ln_residual(xi, xj, e_ref,
                     w1a_ref, w1b_ref, w1c_ref, b1_ref,
                     w2_ref, b2_ref, w3_ref, b3_ref,
                     g_ref, beta_ref, o_ref):
    mm = xi.dtype                                   # MXU operand dtype
    f32 = jnp.float32

    # Linear(3d -> d): concat-free, three accumulated MXU dots (f32 acc).
    h = (jnp.dot(xi, w1a_ref[...], preferred_element_type=f32)
         + jnp.dot(xj, w1b_ref[...], preferred_element_type=f32)
         + jnp.dot(e_ref[...].astype(mm), w1c_ref[...],
                   preferred_element_type=f32)
         + b1_ref[...])
    # TODO(synk): on v6e/v7x the sigmoid could run in bf16 on the EUP if
    #             profiling shows the EUP slot binding; keep f32 (v5e-safe).
    h = h * jax.nn.sigmoid(h)                       # SiLU, f32

    h = jnp.dot(h.astype(mm), w2_ref[...], preferred_element_type=f32) + b2_ref[...]
    h = h * jax.nn.sigmoid(h)

    h = jnp.dot(h.astype(mm), w3_ref[...], preferred_element_type=f32) + b3_ref[...]

    # LayerNorm over the real feature dim (no lane padding anywhere).
    mu = jnp.mean(h, axis=-1, keepdims=True)
    d = h - mu
    var = jnp.mean(d * d, axis=-1, keepdims=True)
    out = d * jax.lax.rsqrt(var + 1e-5) * g_ref[...] + beta_ref[...]

    # Residual: re-read edge_attr from its VMEM block rather than keeping it
    # live across the MLP (lower vreg pressure).
    o_ref[...] = e_ref[...] + out


# ----------------------------------------------------------------------------
# Gather mode A: x resident in VMEM, one-hot MXU gather (small node counts).
# ----------------------------------------------------------------------------
def _edge_kernel_onehot(ii_ref, jj_ref, e_ref, x_ref,
                        w1a_ref, w1b_ref, w1c_ref, b1_ref,
                        w2_ref, b2_ref, w3_ref, b3_ref,
                        g_ref, beta_ref, o_ref):
    te = ii_ref.shape[0]
    n_nodes = x_ref.shape[0]
    mm = x_ref.dtype

    # Exact one-hot row selection on the MXU; accumulate directly in the
    # operand dtype (exact for a selection, avoids two full-tile cast passes).
    node_ids = jax.lax.broadcasted_iota(jnp.int32, (te, n_nodes), 1)
    onehot_i = (ii_ref[...] == node_ids).astype(mm)     # [te, N]
    onehot_j = (jj_ref[...] == node_ids).astype(mm)
    x_nodes = x_ref[...]                                 # [N, dim]
    xi = jnp.dot(onehot_i, x_nodes)
    xj = jnp.dot(onehot_j, x_nodes)

    _mlp_ln_residual(xi, xj, e_ref,
                     w1a_ref, w1b_ref, w1c_ref, b1_ref,
                     w2_ref, b2_ref, w3_ref, b3_ref,
                     g_ref, beta_ref, o_ref)


# ----------------------------------------------------------------------------
# Gather mode B: x in HBM, per-edge row DMA gather (large node counts / v7x).
# ----------------------------------------------------------------------------
def _edge_kernel_dma(ii_ref, jj_ref,                      # scalar-prefetch (SMEM)
                     e_ref, x_hbm,
                     w1a_ref, w1b_ref, w1c_ref, b1_ref,
                     w2_ref, b2_ref, w3_ref, b3_ref,
                     g_ref, beta_ref, o_ref,
                     xi_buf, xj_buf, sem, *, edge_tile):
    te = edge_tile
    base = pl.multiple_of(pl.program_id(0) * te, te)

    # Issue all 2*te row DMAs (HBM x -> VMEM scratch), then drain them.
    # TODO(synk): double-buffer the gather across grid steps to hide its
    #             latency behind the previous tile's MLP compute.
    @pl.loop(0, te)
    def _issue(r):
        pltpu.make_async_copy(x_hbm.at[ii_ref[base + r]], xi_buf.at[r],
                              sem.at[0]).start()
        pltpu.make_async_copy(x_hbm.at[jj_ref[base + r]], xj_buf.at[r],
                              sem.at[1]).start()

    @pl.loop(0, te)
    def _drain(r):
        # Same-size descriptors on the shared semaphores: one wait per copy.
        pltpu.make_async_copy(x_hbm.at[0], xi_buf.at[r], sem.at[0]).wait()
        pltpu.make_async_copy(x_hbm.at[0], xj_buf.at[r], sem.at[1]).wait()

    _mlp_ln_residual(xi_buf[...], xj_buf[...], e_ref,
                     w1a_ref, w1b_ref, w1c_ref, b1_ref,
                     w2_ref, b2_ref, w3_ref, b3_ref,
                     g_ref, beta_ref, o_ref)


# ----------------------------------------------------------------------------
# Wrapper
# ----------------------------------------------------------------------------
def edge_processor_pallas(x, edge_index, edge_attr, params, *,
                          edge_tile=512,
                          matmul_dtype=jnp.bfloat16,
                          gather_mode="auto",
                          vmem_limit_bytes=None):
    """EdgeProcessor forward.

    x:[N,dim] f32, edge_index:[2,E] int, edge_attr:[E,dim] f32 -> [E,dim] f32.
    matmul_dtype only affects MXU operands; accumulation, SiLU, LayerNorm and
    the residual are always f32 (pass jnp.float32 for f32-matching outputs).
    """
    n_nodes, dim = x.shape
    E = edge_attr.shape[0]
    w1, b1, w2, b2, w3, b3, gamma, beta = params

    if vmem_limit_bytes is None:
        vmem_limit_bytes = _default_vmem_limit_bytes()
    mm = matmul_dtype
    itemsize = jnp.dtype(mm).itemsize

    # w1 (3d, d) split into three (d, d) slabs -> concat-free first layer.
    w1a = w1[:dim].astype(mm)
    w1b = w1[dim:2 * dim].astype(mm)
    w1c = w1[2 * dim:3 * dim].astype(mm)
    w2m = w2.astype(mm)
    w3m = w3.astype(mm)
    b1r = b1.reshape(1, dim).astype(jnp.float32)
    b2r = b2.reshape(1, dim).astype(jnp.float32)
    b3r = b3.reshape(1, dim).astype(jnp.float32)
    gr = gamma.reshape(1, dim).astype(jnp.float32)
    br = beta.reshape(1, dim).astype(jnp.float32)
    x_mm = x.astype(mm)
    e_f32 = edge_attr.astype(jnp.float32)

    # Edge tile: multiple of 8 rows, never larger than the (rounded) edge count.
    te = max(8, min(_round_up(int(edge_tile), 8), _round_up(E, 8)))

    # --- VMEM accounting (conservative: double-buffered constants) ----------
    budget = int(0.7 * vmem_limit_bytes)
    const_bytes = (5 * dim * dim * itemsize + 5 * dim * 4) * 2
    x_resident_bytes = n_nodes * dim * itemsize * 2

    def tile_bytes(t, onehot):
        io = 2 * (t * dim * 4) * 2                # edge_attr in + out, f32, x2 buf
        if onehot:
            idx = 2 * (t * 128 * 4) * 2           # (t,1) i32 blocks (lane-padded)
            tmp = 2 * t * n_nodes * 4 + 6 * t * dim * 4
            return io + idx + tmp
        tmp = 2 * t * dim * itemsize + 6 * t * dim * 4   # xi/xj scratch + f32 temps
        return io + tmp

    # --- gather-mode selection ----------------------------------------------
    if gather_mode == "auto":
        cheap_gather = 2 * n_nodes <= 5 * dim     # one-hot MACs < MLP MACs
        fits = const_bytes + x_resident_bytes + tile_bytes(te, True) <= budget
        gather_mode = "onehot" if (cheap_gather and fits) else "dma"
    use_onehot = gather_mode == "onehot"

    fixed = const_bytes + (x_resident_bytes if use_onehot else 0)
    while te > 8 and fixed + tile_bytes(te, use_onehot) > budget:
        te = max(8, (te // 2 // 8) * 8)
    # TODO(synk): if even te=8 overflows (huge dim), spill the weights to HBM
    #             and pipeline them through a K-tiled inner loop as well.

    e_pad = _round_up(max(E, te), te)
    rpad = e_pad - E
    n_tiles = e_pad // te

    ii = edge_index[0].astype(jnp.int32)
    jj = edge_index[1].astype(jnp.int32)
    if rpad:
        e_f32 = jnp.pad(e_f32, ((0, rpad), (0, 0)))
        ii = jnp.pad(ii, (0, rpad))               # padded edges -> node 0 (discarded)
        jj = jnp.pad(jj, (0, rpad))
    # TODO(synk): for very large E the scalar-prefetch index arrays should be
    #             staged per-tile into SMEM instead of prefetched whole.

    # Advisory cost estimate so XLA can overlap the surrounding glue ops.
    mlp_flops = 2 * e_pad * 5 * dim * dim
    gth_flops = 2 * e_pad * 2 * n_nodes * dim if use_onehot else 0
    cost = pl.CostEstimate(
        flops=int(mlp_flops + gth_flops),
        transcendentals=int(2 * e_pad * dim),
        bytes_accessed=int(2 * e_pad * dim * 4 + 2 * e_pad * 4
                           + 5 * dim * dim * itemsize + n_nodes * dim * itemsize))

    cparams = pltpu.CompilerParams(dimension_semantics=("parallel",),
                                   vmem_limit_bytes=vmem_limit_bytes)
    out_shape = jax.ShapeDtypeStruct((e_pad, dim), jnp.float32)

    def build_and_call(const_mode):
        def cspec(arr, imap):
            if const_mode is None:
                return pl.BlockSpec(arr.shape, imap)
            return pl.BlockSpec(arr.shape, imap, pipeline_mode=const_mode)

        if use_onehot:
            cmap = lambda e: (0, 0)
            emap = lambda e: (e, 0)
            grid_spec = pltpu.PrefetchScalarGridSpec(
                num_scalar_prefetch=0,
                grid=(n_tiles,),
                in_specs=[
                    pl.BlockSpec((te, 1), emap),          # i
                    pl.BlockSpec((te, 1), emap),          # j
                    pl.BlockSpec((te, dim), emap),        # edge_attr
                    cspec(x_mm, cmap),                    # x resident in VMEM
                    cspec(w1a, cmap), cspec(w1b, cmap), cspec(w1c, cmap),
                    cspec(b1r, cmap),
                    cspec(w2m, cmap), cspec(b2r, cmap),
                    cspec(w3m, cmap), cspec(b3r, cmap),
                    cspec(gr, cmap), cspec(br, cmap),
                ],
                out_specs=pl.BlockSpec((te, dim), emap),
            )
            call = pl.pallas_call(_edge_kernel_onehot, out_shape=out_shape,
                                  grid_spec=grid_spec, compiler_params=cparams,
                                  cost_estimate=cost)
            return call(ii.reshape(e_pad, 1), jj.reshape(e_pad, 1), e_f32, x_mm,
                        w1a, w1b, w1c, b1r, w2m, b2r, w3m, b3r, gr, br)

        # DMA gather path: x stays in HBM, indices scalar-prefetched to SMEM.
        cmap = lambda e, ii_r, jj_r: (0, 0)
        emap = lambda e, ii_r, jj_r: (e, 0)
        grid_spec = pltpu.PrefetchScalarGridSpec(
            num_scalar_prefetch=2,
            grid=(n_tiles,),
            in_specs=[
                pl.BlockSpec((te, dim), emap),            # edge_attr
                pl.BlockSpec(memory_space=pl.ANY),        # x (HBM)
                cspec(w1a, cmap), cspec(w1b, cmap), cspec(w1c, cmap),
                cspec(b1r, cmap),
                cspec(w2m, cmap), cspec(b2r, cmap),
                cspec(w3m, cmap), cspec(b3r, cmap),
                cspec(gr, cmap), cspec(br, cmap),
            ],
            out_specs=pl.BlockSpec((te, dim), emap),
            scratch_shapes=[
                pltpu.VMEM((te, dim), mm),                # xi gather buffer
                pltpu.VMEM((te, dim), mm),                # xj gather buffer
                pltpu.SemaphoreType.DMA((2,)),
            ],
        )
        kernel = functools.partial(_edge_kernel_dma, edge_tile=te)
        call = pl.pallas_call(kernel, out_shape=out_shape,
                              grid_spec=grid_spec, compiler_params=cparams,
                              cost_estimate=cost)
        return call(ii, jj, e_f32, x_mm,
                    w1a, w1b, w1c, b1r, w2m, b2r, w3m, b3r, gr, br)

    try:
        # Constant-index blocks are DMA'd once; single buffering halves their
        # VMEM footprint (most valuable on v7x's 64 MiB).
        out = build_and_call(pl.Buffered(1))
    except Exception:
        # Fallback for JAX builds that reject pipeline_mode on pallas_call
        # inputs: default double buffering (only costs VMEM, not correctness).
        out = build_and_call(None)

    return out[:E] if rpad else out


# ----------------------------------------------------------------------------
# Reference + synthetic params
# ----------------------------------------------------------------------------
def init_params(key, dim):
    """Deterministic synthetic params matching nn.Linear default init shapes."""
    ks = jax.random.split(key, 6)

    def linear(kw, kb, fan_in, fan_out):
        bound = 1.0 / jnp.sqrt(fan_in)
        w = jax.random.uniform(kw, (fan_in, fan_out), jnp.float32, -bound, bound)
        b = jax.random.uniform(kb, (fan_out,), jnp.float32, -bound, bound)
        return w, b

    w1, b1 = linear(ks[0], ks[1], 3 * dim, dim)
    w2, b2 = linear(ks[2], ks[3], dim, dim)
    w3, b3 = linear(ks[4], ks[5], dim, dim)
    gamma = jnp.ones((dim,), jnp.float32)
    beta = jnp.zeros((dim,), jnp.float32)
    return (w1, b1, w2, b2, w3, b3, gamma, beta)


def edge_processor_ref(x, edge_index, edge_attr, params):
    """Pure-JAX reference for correctness checking."""
    w1, b1, w2, b2, w3, b3, gamma, beta = params
    xi = x[edge_index[0]]
    xj = x[edge_index[1]]
    h = jnp.concatenate([xi, xj, edge_attr], axis=-1)
    h = jax.nn.silu(h @ w1 + b1)
    h = jax.nn.silu(h @ w2 + b2)
    h = h @ w3 + b3
    mu = jnp.mean(h, axis=-1, keepdims=True)
    var = jnp.mean(jnp.square(h - mu), axis=-1, keepdims=True)
    hn = (h - mu) * jax.lax.rsqrt(var + 1e-5)
    return edge_attr + hn * gamma + beta


if __name__ == "__main__":
    keys = jax.random.split(jax.random.PRNGKey(0), 12)

    # --- case 1: small non-128 dim, ragged E, multi-tile, f32, one-hot path --
    N, E, dim = 16, 200, 32
    x = jax.random.normal(keys[0], (N, dim), jnp.float32)
    edge_attr = jax.random.normal(keys[1], (E, dim), jnp.float32)
    edge_index = jax.random.randint(keys[2], (2, E), 0, N, dtype=jnp.int32)
    params = init_params(keys[3], dim)

    out = edge_processor_pallas(x, edge_index, edge_attr, params,
                                edge_tile=64, matmul_dtype=jnp.float32)
    out = jax.block_until_ready(out)
    ref = edge_processor_ref(x, edge_index, edge_attr, params)
    assert out.shape == (E, dim) and out.dtype == jnp.float32
    assert jnp.max(jnp.abs(out - ref)) < 1e-4, "case 1 (f32 / onehot) mismatch"

    # --- case 2: lane-dense dim=128, default bf16 MXU operands, one-hot path -
    N2, E2, dim2 = 64, 512, 128
    x2 = jax.random.normal(keys[4], (N2, dim2), jnp.float32)
    edge_attr2 = jax.random.normal(keys[5], (E2, dim2), jnp.float32)
    edge_index2 = jax.random.randint(keys[6], (2, E2), 0, N2, dtype=jnp.int32)
    params2 = init_params(keys[7], dim2)

    out2 = edge_processor_pallas(x2, edge_index2, edge_attr2, params2)
    out2 = jax.block_until_ready(out2)
    ref2 = edge_processor_ref(x2, edge_index2, edge_attr2, params2)
    assert out2.shape == (E2, dim2) and out2.dtype == jnp.float32
    assert jnp.max(jnp.abs(out2 - ref2)) < 1e-1, "case 2 (bf16 / onehot) mismatch"

    # --- case 3: forced DMA row-gather path (x in HBM), f32, multi-tile ------
    N3, E3, dim3 = 48, 300, 64
    x3 = jax.random.normal(keys[8], (N3, dim3), jnp.float32)
    edge_attr3 = jax.random.normal(keys[9], (E3, dim3), jnp.float32)
    edge_index3 = jax.random.randint(keys[10], (2, E3), 0, N3, dtype=jnp.int32)
    params3 = init_params(keys[11], dim3)

    out3 = edge_processor_pallas(x3, edge_index3, edge_attr3, params3,
                                 edge_tile=128, matmul_dtype=jnp.float32,
                                 gather_mode="dma")
    out3 = jax.block_until_ready(out3)
    ref3 = edge_processor_ref(x3, edge_index3, edge_attr3, params3)
    assert out3.shape == (E3, dim3) and out3.dtype == jnp.float32
    assert jnp.max(jnp.abs(out3 - ref3)) < 1e-4, "case 3 (f32 / dma) mismatch"

    print("KERNEL_OK")
</pallas_src>

<mosaic_0001>
module attributes {stable_mosaic.version = 11 : i64} {
  func.func @_edge_kernel_onehot(%arg0: i32, %arg1: memref<64x1xi32, #tpu.memory_space<vmem>>, %arg2: memref<64x1xi32, #tpu.memory_space<vmem>>, %arg3: memref<64x32xf32, #tpu.memory_space<vmem>>, %arg4: memref<16x32xf32, #tpu.memory_space<vmem>>, %arg5: memref<32x32xf32, #tpu.memory_space<vmem>>, %arg6: memref<32x32xf32, #tpu.memory_space<vmem>>, %arg7: memref<32x32xf32, #tpu.memory_space<vmem>>, %arg8: memref<1x32xf32, #tpu.memory_space<vmem>>, %arg9: memref<32x32xf32, #tpu.memory_space<vmem>>, %arg10: memref<1x32xf32, #tpu.memory_space<vmem>>, %arg11: memref<32x32xf32, #tpu.memory_space<vmem>>, %arg12: memref<1x32xf32, #tpu.memory_space<vmem>>, %arg13: memref<1x32xf32, #tpu.memory_space<vmem>>, %arg14: memref<1x32xf32, #tpu.memory_space<vmem>>, %arg15: memref<64x32xf32, #tpu.memory_space<vmem>>) attributes {dimension_semantics = [#tpu.dimension_semantics<parallel>], iteration_bounds = array<i64: 4>, scalar_prefetch = 0 : i64, scratch_operands = 0 : i64, tpu.core_type = #tpu.core_type<tc>, window_params = [{transform_indices = @transform_0, window_bounds = array<i64: 64, 1>}, {transform_indices = @transform_1, window_bounds = array<i64: 64, 1>}, {transform_indices = @transform_2, window_bounds = array<i64: 64, 32>}, {pipeline_mode = #tpu.pipeline_mode<synchronous>, transform_indices = @transform_3, window_bounds = array<i64: 16, 32>}, {pipeline_mode = #tpu.pipeline_mode<synchronous>, transform_indices = @transform_4, window_bounds = array<i64: 32, 32>}, {pipeline_mode = #tpu.pipeline_mode<synchronous>, transform_indices = @transform_5, window_bounds = array<i64: 32, 32>}, {pipeline_mode = #tpu.pipeline_mode<synchronous>, transform_indices = @transform_6, window_bounds = array<i64: 32, 32>}, {pipeline_mode = #tpu.pipeline_mode<synchronous>, transform_indices = @transform_7, window_bounds = array<i64: 1, 32>}, {pipeline_mode = #tpu.pipeline_mode<synchronous>, transform_indices = @transform_8, window_bounds = array<i64: 32, 32>}, {pipeline_mode = #tpu.pipeline_mode<synchronous>, transform_indices = @transform_9, window_bounds = array<i64: 1, 32>}, {pipeline_mode = #tpu.pipeline_mode<synchronous>, transform_indices = @transform_10, window_bounds = array<i64: 32, 32>}, {pipeline_mode = #tpu.pipeline_mode<synchronous>, transform_indices = @transform_11, window_bounds = array<i64: 1, 32>}, {pipeline_mode = #tpu.pipeline_mode<synchronous>, transform_indices = @transform_12, window_bounds = array<i64: 1, 32>}, {pipeline_mode = #tpu.pipeline_mode<synchronous>, transform_indices = @transform_13, window_bounds = array<i64: 1, 32>}, {transform_indices = @transform_14, window_bounds = array<i64: 64, 32>}]} {
    %0 = tpu.iota {dimensions = array<i32: 1>} : vector<64x16xi32>
    %c0 = arith.constant 0 : index
    %c0_0 = arith.constant 0 : index
    %1 = vector.load %arg1[%c0, %c0_0] : memref<64x1xi32, #tpu.memory_space<vmem>>, vector<64x1xi32>
    %2 = vector.broadcast %1 : vector<64x1xi32> to vector<64x16xi32>
    %3 = arith.cmpi eq, %2, %0 : vector<64x16xi32>
    %4 = arith.extui %3 : vector<64x16xi1> to vector<64x16xi32>
    %5 = arith.sitofp %4 : vector<64x16xi32> to vector<64x16xf32>
    %c0_1 = arith.constant 0 : index
    %c0_2 = arith.constant 0 : index
    %6 = vector.load %arg2[%c0_1, %c0_2] : memref<64x1xi32, #tpu.memory_space<vmem>>, vector<64x1xi32>
    %7 = vector.broadcast %6 : vector<64x1xi32> to vector<64x16xi32>
    %8 = arith.cmpi eq, %7, %0 : vector<64x16xi32>
    %9 = arith.extui %8 : vector<64x16xi1> to vector<64x16xi32>
    %10 = arith.sitofp %9 : vector<64x16xi32> to vector<64x16xf32>
    %c0_3 = arith.constant 0 : index
    %c0_4 = arith.constant 0 : index
    %11 = vector.load %arg4[%c0_3, %c0_4] : memref<16x32xf32, #tpu.memory_space<vmem>>, vector<16x32xf32>
    %cst = arith.constant dense<0.000000e+00> : vector<64x32xf32>
    %12 = tpu.matmul %5, %11, %cst {dimension_numbers = #tpu.dot_dimension_numbers<[1], [0], [0], [1], [0, 0, 1, 1], [], []>} : vector<64x16xf32>, vector<16x32xf32>, vector<64x32xf32> -> vector<64x32xf32>
    %cst_5 = arith.constant dense<0.000000e+00> : vector<64x32xf32>
    %13 = tpu.matmul %10, %11, %cst_5 {dimension_numbers = #tpu.dot_dimension_numbers<[1], [0], [0], [1], [0, 0, 1, 1], [], []>} : vector<64x16xf32>, vector<16x32xf32>, vector<64x32xf32> -> vector<64x32xf32>
    %c0_6 = arith.constant 0 : index
    %c0_7 = arith.constant 0 : index
    %14 = vector.load %arg5[%c0_6, %c0_7] : memref<32x32xf32, #tpu.memory_space<vmem>>, vector<32x32xf32>
    %cst_8 = arith.constant dense<0.000000e+00> : vector<64x32xf32>
    %15 = tpu.matmul %12, %14, %cst_8 {dimension_numbers = #tpu.dot_dimension_numbers<[1], [0], [0], [1], [0, 0, 1, 1], [], []>} : vector<64x32xf32>, vector<32x32xf32>, vector<64x32xf32> -> vector<64x32xf32>
    %c0_9 = arith.constant 0 : index
    %c0_10 = arith.constant 0 : index
    %16 = vector.load %arg6[%c0_9, %c0_10] : memref<32x32xf32, #tpu.memory_space<vmem>>, vector<32x32xf32>
    %cst_11 = arith.constant dense<0.000000e+00> : vector<64x32xf32>
    %17 = tpu.matmul %13, %16, %cst_11 {dimension_numbers = #tpu.dot_dimension_numbers<[1], [0], [0], [1], [0, 0, 1, 1], [], []>} : vector<64x32xf32>, vector<32x32xf32>, vector<64x32xf32> -> vector<64x32xf32>
    %18 = arith.addf %15, %17 : vector<64x32xf32>
    %c0_12 = arith.constant 0 : index
    %c0_13 = arith.constant 0 : index
    %19 = vector.load %arg3[%c0_12, %c0_13] : memref<64x32xf32, #tpu.memory_space<vmem>>, vector<64x32xf32>
    %c0_14 = arith.constant 0 : index
    %c0_15 = arith.constant 0 : index
    %20 = vector.load %arg7[%c0_14, %c0_15] : memref<32x32xf32, #tpu.memory_space<vmem>>, vector<32x32xf32>
    %cst_16 = arith.constant dense<0.000000e+00> : vector<64x32xf32>
    %21 = tpu.matmul %19, %20, %cst_16 {dimension_numbers = #tpu.dot_dimension_numbers<[1], [0], [0], [1], [0, 0, 1, 1], [], []>} : vector<64x32xf32>, vector<32x32xf32>, vector<64x32xf32> -> vector<64x32xf32>
    %22 = arith.addf %18, %21 : vector<64x32xf32>
    %c0_17 = arith.constant 0 : index
    %c0_18 = arith.constant 0 : index
    %23 = vector.load %arg8[%c0_17, %c0_18] : memref<1x32xf32, #tpu.memory_space<vmem>>, vector<1x32xf32>
    %24 = vector.broadcast %23 : vector<1x32xf32> to vector<64x32xf32>
    %25 = arith.addf %22, %24 : vector<64x32xf32>
    %26 = arith.negf %25 : vector<64x32xf32>
    %27 = math.exp %26 : vector<64x32xf32>
    %cst_19 = arith.constant 1.000000e+00 : f32
    %28 = vector.broadcast %cst_19 : f32 to vector<64x32xf32>
    %29 = arith.addf %28, %27 : vector<64x32xf32>
    %30 = arith.divf %28, %29 : vector<64x32xf32>
    %31 = arith.mulf %25, %30 : vector<64x32xf32>
    %c0_20 = arith.constant 0 : index
    %c0_21 = arith.constant 0 : index
    %32 = vector.load %arg9[%c0_20, %c0_21] : memref<32x32xf32, #tpu.memory_space<vmem>>, vector<32x32xf32>
    %cst_22 = arith.constant dense<0.000000e+00> : vector<64x32xf32>
    %33 = tpu.matmul %31, %32, %cst_22 {dimension_numbers = #tpu.dot_dimension_numbers<[1], [0], [0], [1], [0, 0, 1, 1], [], []>} : vector<64x32xf32>, vector<32x32xf32>, vector<64x32xf32> -> vector<64x32xf32>
    %c0_23 = arith.constant 0 : index
    %c0_24 = arith.constant 0 : index
    %34 = vector.load %arg10[%c0_23, %c0_24] : memref<1x32xf32, #tpu.memory_space<vmem>>, vector<1x32xf32>
    %35 = vector.broadcast %34 : vector<1x32xf32> to vector<64x32xf32>
    %36 = arith.addf %33, %35 : vector<64x32xf32>
    %37 = arith.negf %36 : vector<64x32xf32>
    %38 = math.exp %37 : vector<64x32xf32>
    %cst_25 = arith.constant 1.000000e+00 : f32
    %39 = vector.broadcast %cst_25 : f32 to vector<64x32xf32>
    %40 = arith.addf %39, %38 : vector<64x32xf32>
    %41 = arith.divf %39, %40 : vector<64x32xf32>
    %42 = arith.mulf %36, %41 : vector<64x32xf32>
    %c0_26 = arith.constant 0 : index
    %c0_27 = arith.constant 0 : index
    %43 = vector.load %arg11[%c0_26, %c0_27] : memref<32x32xf32, #tpu.memory_space<vmem>>, vector<32x32xf32>
    %cst_28 = arith.constant dense<0.000000e+00> : vector<64x32xf32>
    %44 = tpu.matmul %42, %43, %cst_28 {dimension_numbers = #tpu.dot_dimension_numbers<[1], [0], [0], [1], [0, 0, 1, 1], [], []>} : vector<64x32xf32>, vector<32x32xf32>, vector<64x32xf32> -> vector<64x32xf32>
    %c0_29 = arith.constant 0 : index
    %c0_30 = arith.constant 0 : index
    %45 = vector.load %arg12[%c0_29, %c0_30] : memref<1x32xf32, #tpu.memory_space<vmem>>, vector<1x32xf32>
    %46 = vector.broadcast %45 : vector<1x32xf32> to vector<64x32xf32>
    %47 = arith.addf %44, %46 : vector<64x32xf32>
    %cst_31 = arith.constant dense<0.000000e+00> : vector<64xf32>
    %48 = vector.multi_reduction <add>, %47, %cst_31 [1] : vector<64x32xf32> to vector<64xf32>
    %49 = vector.shape_cast %48 : vector<64xf32> to vector<64x1xf32>
    %cst_32 = arith.constant 3.200000e+01 : f32
    %50 = vector.broadcast %cst_32 : f32 to vector<64x1xf32>
    %51 = arith.divf %49, %50 : vector<64x1xf32>
    %52 = vector.broadcast %51 : vector<64x1xf32> to vector<64x32xf32>
    %53 = arith.subf %47, %52 : vector<64x32xf32>
    %54 = arith.mulf %53, %53 : vector<64x32xf32>
    %cst_33 = arith.constant dense<0.000000e+00> : vector<64xf32>
    %55 = vector.multi_reduction <add>, %54, %cst_33 [1] : vector<64x32xf32> to vector<64xf32>
    %56 = vector.shape_cast %55 : vector<64xf32> to vector<64x1xf32>
    %cst_34 = arith.constant 3.200000e+01 : f32
    %57 = vector.broadcast %cst_34 : f32 to vector<64x1xf32>
    %58 = arith.divf %56, %57 : vector<64x1xf32>
    %cst_35 = arith.constant 9.99999974E-6 : f32
    %59 = vector.broadcast %cst_35 : f32 to vector<64x1xf32>
    %60 = arith.addf %58, %59 : vector<64x1xf32>
    %61 = math.rsqrt %60 : vector<64x1xf32>
    %62 = vector.broadcast %61 : vector<64x1xf32> to vector<64x32xf32>
    %63 = arith.mulf %53, %62 : vector<64x32xf32>
    %c0_36 = arith.constant 0 : index
    %c0_37 = arith.constant 0 : index
    %64 = vector.load %arg13[%c0_36, %c0_37] : memref<1x32xf32, #tpu.memory_space<vmem>>, vector<1x32xf32>
    %65 = vector.broadcast %64 : vector<1x32xf32> to vector<64x32xf32>
    %66 = arith.mulf %63, %65 : vector<64x32xf32>
    %c0_38 = arith.constant 0 : index
    %c0_39 = arith.constant 0 : index
    %67 = vector.load %arg14[%c0_38, %c0_39] : memref<1x32xf32, #tpu.memory_space<vmem>>, vector<1x32xf32>
    %68 = vector.broadcast %67 : vector<1x32xf32> to vector<64x32xf32>
    %69 = arith.addf %66, %68 : vector<64x32xf32>
    %c0_40 = arith.constant 0 : index
    %c0_41 = arith.constant 0 : index
    %70 = vector.load %arg3[%c0_40, %c0_41] : memref<64x32xf32, #tpu.memory_space<vmem>>, vector<64x32xf32>
    %71 = arith.addf %70, %69 : vector<64x32xf32>
    %c0_42 = arith.constant 0 : index
    %c0_43 = arith.constant 0 : index
    %72 = vector.load %arg15[%c0_42, %c0_43] : memref<64x32xf32, #tpu.memory_space<vmem>>, vector<64x32xf32>
    tpu.vector_store %arg15[%c0_42, %c0_43], %71 {strides = array<i32>} : memref<64x32xf32, #tpu.memory_space<vmem>>, vector<64x32xf32>,
    return
  }
  func.func @transform_0(%arg0: i32) -> (i32, i32) {
    %c0_i32 = arith.constant 0 : i32
    %c0_i32_0 = arith.constant 0 : i32
    return %arg0, %c0_i32 : i32, i32
  }
  func.func @transform_1(%arg0: i32) -> (i32, i32) {
    %c0_i32 = arith.constant 0 : i32
    %c0_i32_0 = arith.constant 0 : i32
    return %arg0, %c0_i32 : i32, i32
  }
  func.func @transform_2(%arg0: i32) -> (i32, i32) {
    %c0_i32 = arith.constant 0 : i32
    %c0_i32_0 = arith.constant 0 : i32
    return %arg0, %c0_i32 : i32, i32
  }
  func.func @transform_3(%arg0: i32) -> (i32, i32) {
    %c0_i32 = arith.constant 0 : i32
    %c0_i32_0 = arith.constant 0 : i32
    %c0_i32_1 = arith.constant 0 : i32
    return %c0_i32, %c0_i32_0 : i32, i32
  }
  func.func @transform_4(%arg0: i32) -> (i32, i32) {
    %c0_i32 = arith.constant 0 : i32
    %c0_i32_0 = arith.constant 0 : i32
    %c0_i32_1 = arith.constant 0 : i32
    return %c0_i32, %c0_i32_0 : i32, i32
  }
  func.func @transform_5(%arg0: i32) -> (i32, i32) {
    %c0_i32 = arith.constant 0 : i32
    %c0_i32_0 = arith.constant 0 : i32
    %c0_i32_1 = arith.constant 0 : i32
    return %c0_i32, %c0_i32_0 : i32, i32
  }
  func.func @transform_6(%arg0: i32) -> (i32, i32) {
    %c0_i32 = arith.constant 0 : i32
    %c0_i32_0 = arith.constant 0 : i32
    %c0_i32_1 = arith.constant 0 : i32
    return %c0_i32, %c0_i32_0 : i32, i32
  }
  func.func @transform_7(%arg0: i32) -> (i32, i32) {
    %c0_i32 = arith.constant 0 : i32
    %c0_i32_0 = arith.constant 0 : i32
    %c0_i32_1 = arith.constant 0 : i32
    return %c0_i32, %c0_i32_0 : i32, i32
  }
  func.func @transform_8(%arg0: i32) -> (i32, i32) {
    %c0_i32 = arith.constant 0 : i32
    %c0_i32_0 = arith.constant 0 : i32
    %c0_i32_1 = arith.constant 0 : i32
    return %c0_i32, %c0_i32_0 : i32, i32
  }
  func.func @transform_9(%arg0: i32) -> (i32, i32) {
    %c0_i32 = arith.constant 0 : i32
    %c0_i32_0 = arith.constant 0 : i32
    %c0_i32_1 = arith.constant 0 : i32
    return %c0_i32, %c0_i32_0 : i32, i32
  }
  func.func @transform_10(%arg0: i32) -> (i32, i32) {
    %c0_i32 = arith.constant 0 : i32
    %c0_i32_0 = arith.constant 0 : i32
    %c0_i32_1 = arith.constant 0 : i32
    return %c0_i32, %c0_i32_0 : i32, i32
  }
  func.func @transform_11(%arg0: i32) -> (i32, i32) {
    %c0_i32 = arith.constant 0 : i32
    %c0_i32_0 = arith.constant 0 : i32
    %c0_i32_1 = arith.constant 0 : i32
    return %c0_i32, %c0_i32_0 : i32, i32
  }
  func.func @transform_12(%arg0: i32) -> (i32, i32) {
    %c0_i32 = arith.constant 0 : i32
    %c0_i32_0 = arith.constant 0 : i32
    %c0_i32_1 = arith.constant 0 : i32
    return %c0_i32, %c0_i32_0 : i32, i32
  }
  func.func @transform_13(%arg0: i32) -> (i32, i32) {
    %c0_i32 = arith.constant 0 : i32
    %c0_i32_0 = arith.constant 0 : i32
    %c0_i32_1 = arith.constant 0 : i32
    return %c0_i32, %c0_i32_0 : i32, i32
  }
  func.func @transform_14(%arg0: i32) -> (i32, i32) {
    %c0_i32 = arith.constant 0 : i32
    %c0_i32_0 = arith.constant 0 : i32
    return %arg0, %c0_i32 : i32, i32
  }
}

module attributes {stable_mosaic.version = 11 : i64} {
  func.func @_edge_kernel_onehot(%arg0: i32, %arg1: memref<64x1xi32, #tpu.memory_space<vmem>>, %arg2: memref<64x1xi32, #tpu.memory_space<vmem>>, %arg3: memref<64x32xf32, #tpu.memory_space<vmem>>, %arg4: memref<16x32xf32, #tpu.memory_space<vmem>>, %arg5: memref<32x32xf32, #tpu.memory_space<vmem>>, %arg6: memref<32x32xf32, #tpu.memory_space<vmem>>, %arg7: memref<32x32xf32, #tpu.memory_space<vmem>>, %arg8: memref<1x32xf32, #tpu.memory_space<vmem>>, %arg9: memref<32x32xf32, #tpu.memory_space<vmem>>, %arg10: memref<1x32xf32, #tpu.memory_space<vmem>>, %arg11: memref<32x32xf32, #tpu.memory_space<vmem>>, %arg12: memref<1x32xf32, #tpu.memory_space<vmem>>, %arg13: memref<1x32xf32, #tpu.memory_space<vmem>>, %arg14: memref<1x32xf32, #tpu.memory_space<vmem>>, %arg15: memref<64x32xf32, #tpu.memory_space<vmem>>) attributes {dimension_semantics = [#tpu.dimension_semantics<parallel>], iteration_bounds = array<i64: 4>, scalar_prefetch = 0 : i64, scratch_operands = 0 : i64, tpu.core_type = #tpu.core_type<tc>, window_params = [{transform_indices = @transform_0, window_bounds = array<i64: 64, 1>}, {transform_indices = @transform_1, window_bounds = array<i64: 64, 1>}, {transform_indices = @transform_2, window_bounds = array<i64: 64, 32>}, {pipeline_mode = #tpu.pipeline_mode<synchronous>, transform_indices = @transform_3, window_bounds = array<i64: 16, 32>}, {pipeline_mode = #tpu.pipeline_mode<synchronous>, transform_indices = @transform_4, window_bounds = array<i64: 32, 32>}, {pipeline_mode = #tpu.pipeline_mode<synchronous>, transform_indices = @transform_5, window_bounds = array<i64: 32, 32>}, {pipeline_mode = #tpu.pipeline_mode<synchronous>, transform_indices = @transform_6, window_bounds = array<i64: 32, 32>}, {pipeline_mode = #tpu.pipeline_mode<synchronous>, transform_indices = @transform_7, window_bounds = array<i64: 1, 32>}, {pipeline_mode = #tpu.pipeline_mode<synchronous>, transform_indices = @transform_8, window_bounds = array<i64: 32, 32>}, {pipeline_mode = #tpu.pipeline_mode<synchronous>, transform_indices = @transform_9, window_bounds = array<i64: 1, 32>}, {pipeline_mode = #tpu.pipeline_mode<synchronous>, transform_indices = @transform_10, window_bounds = array<i64: 32, 32>}, {pipeline_mode = #tpu.pipeline_mode<synchronous>, transform_indices = @transform_11, window_bounds = array<i64: 1, 32>}, {pipeline_mode = #tpu.pipeline_mode<synchronous>, transform_indices = @transform_12, window_bounds = array<i64: 1, 32>}, {pipeline_mode = #tpu.pipeline_mode<synchronous>, transform_indices = @transform_13, window_bounds = array<i64: 1, 32>}, {transform_indices = @transform_14, window_bounds = array<i64: 64, 32>}]} {
    %0 = tpu.iota {dimensions = array<i32: 1>} : vector<64x16xi32>
    %c0 = arith.constant 0 : index
    %c0_0 = arith.constant 0 : index
    %1 = vector.load %arg1[%c0, %c0_0] : memref<64x1xi32, #tpu.memory_space<vmem>>, vector<64x1xi32>
    %2 = vector.broadcast %1 : vector<64x1xi32> to vector<64x16xi32>
    %3 = arith.cmpi eq, %2, %0 : vector<64x16xi32>
    %4 = arith.extui %3 : vector<64x16xi1> to vector<64x16xi32>
    %5 = arith.sitofp %4 : vector<64x16xi32> to vector<64x16xf32>
    %c0_1 = arith.constant 0 : index
    %c0_2 = arith.constant 0 : index
    %6 = vector.load %arg2[%c0_1, %c0_2] : memref<64x1xi32, #tpu.memory_space<vmem>>, vector<64x1xi32>
    %7 = vector.broadcast %6 : vector<64x1xi32> to vector<64x16xi32>
    %8 = arith.cmpi eq, %7, %0 : vector<64x16xi32>
    %9 = arith.extui %8 : vector<64x16xi1> to vector<64x16xi32>
    %10 = arith.sitofp %9 : vector<64x16xi32> to vector<64x16xf32>
    %c0_3 = arith.constant 0 : index
    %c0_4 = arith.constant 0 : index
    %11 = vector.load %arg4[%c0_3, %c0_4] : memref<16x32xf32, #tpu.memory_space<vmem>>, vector<16x32xf32>
    %cst = arith.constant dense<0.000000e+00> : vector<64x32xf32>
    %12 = tpu.matmul %5, %11, %cst {dimension_numbers = #tpu.dot_dimension_numbers<[1], [0], [0], [1], [0, 0, 1, 1], [], []>} : vector<64x16xf32>, vector<16x32xf32>, vector<64x32xf32> -> vector<64x32xf32>
    %cst_5 = arith.constant dense<0.000000e+00> : vector<64x32xf32>
    %13 = tpu.matmul %10, %11, %cst_5 {dimension_numbers = #tpu.dot_dimension_numbers<[1], [0], [0], [1], [0, 0, 1, 1], [], []>} : vector<64x16xf32>, vector<16x32xf32>, vector<64x32xf32> -> vector<64x32xf32>
    %c0_6 = arith.constant 0 : index
    %c0_7 = arith.constant 0 : index
    %14 = vector.load %arg5[%c0_6, %c0_7] : memref<32x32xf32, #tpu.memory_space<vmem>>, vector<32x32xf32>
    %cst_8 = arith.constant dense<0.000000e+00> : vector<64x32xf32>
    %15 = tpu.matmul %12, %14, %cst_8 {dimension_numbers = #tpu.dot_dimension_numbers<[1], [0], [0], [1], [0, 0, 1, 1], [], []>} : vector<64x32xf32>, vector<32x32xf32>, vector<64x32xf32> -> vector<64x32xf32>
    %c0_9 = arith.constant 0 : index
    %c0_10 = arith.constant 0 : index
    %16 = vector.load %arg6[%c0_9, %c0_10] : memref<32x32xf32, #tpu.memory_space<vmem>>, vector<32x32xf32>
    %cst_11 = arith.constant dense<0.000000e+00> : vector<64x32xf32>
    %17 = tpu.matmul %13, %16, %cst_11 {dimension_numbers = #tpu.dot_dimension_numbers<[1], [0], [0], [1], [0, 0, 1, 1], [], []>} : vector<64x32xf32>, vector<32x32xf32>, vector<64x32xf32> -> vector<64x32xf32>
    %18 = arith.addf %15, %17 : vector<64x32xf32>
    %c0_12 = arith.constant 0 : index
    %c0_13 = arith.constant 0 : index
    %19 = vector.load %arg3[%c0_12, %c0_13] : memref<64x32xf32, #tpu.memory_space<vmem>>, vector<64x32xf32>
    %c0_14 = arith.constant 0 : index
    %c0_15 = arith.constant 0 : index
    %20 = vector.load %arg7[%c0_14, %c0_15] : memref<32x32xf32, #tpu.memory_space<vmem>>, vector<32x32xf32>
    %cst_16 = arith.constant dense<0.000000e+00> : vector<64x32xf32>
    %21 = tpu.matmul %19, %20, %cst_16 {dimension_numbers = #tpu.dot_dimension_numbers<[1], [0], [0], [1], [0, 0, 1, 1], [], []>} : vector<64x32xf32>, vector<32x32xf32>, vector<64x32xf32> -> vector<64x32xf32>
    %22 = arith.addf %18, %21 : vector<64x32xf32>
    %c0_17 = arith.constant 0 : index
    %c0_18 = arith.constant 0 : index
    %23 = vector.load %arg8[%c0_17, %c0_18] : memref<1x32xf32, #tpu.memory_space<vmem>>, vector<1x32xf32>
    %24 = vector.broadcast %23 : vector<1x32xf32> to vector<64x32xf32>
    %25 = arith.addf %22, %24 : vector<64x32xf32>
    %26 = arith.negf %25 : vector<64x32xf32>
    %27 = math.exp %26 : vector<64x32xf32>
    %cst_19 = arith.constant 1.000000e+00 : f32
    %28 = vector.broadcast %cst_19 : f32 to vector<64x32xf32>
    %29 = arith.addf %28, %27 : vector<64x32xf32>
    %30 = arith.divf %28, %29 : vector<64x32xf32>
    %31 = arith.mulf %25, %30 : vector<64x32xf32>
    %c0_20 = arith.constant 0 : index
    %c0_21 = arith.constant 0 : index
    %32 = vector.load %arg9[%c0_20, %c0_21] : memref<32x32xf32, #tpu.memory_space<vmem>>, vector<32x32xf32>
    %cst_22 = arith.constant dense<0.000000e+00> : vector<64x32xf32>
    %33 = tpu.matmul %31, %32, %cst_22 {dimension_numbers = #tpu.dot_dimension_numbers<[1], [0], [0], [1], [0, 0, 1, 1], [], []>} : vector<64x32xf32>, vector<32x32xf32>, vector<64x32xf32> -> vector<64x32xf32>
    %c0_23 = arith.constant 0 : index
    %c0_24 = arith.constant 0 : index
    %34 = vector.load %arg10[%c0_23, %c0_24] : memref<1x32xf32, #tpu.memory_space<vmem>>, vector<1x32xf32>
    %35 = vector.broadcast %34 : vector<1x32xf32> to vector<64x32xf32>
    %36 = arith.addf %33, %35 : vector<64x32xf32>
    %37 = arith.negf %36 : vector<64x32xf32>
    %38 = math.exp %37 : vector<64x32xf32>
    %cst_25 = arith.constant 1.000000e+00 : f32
    %39 = vector.broadcast %cst_25 : f32 to vector<64x32xf32>
    %40 = arith.addf %39, %38 : vector<64x32xf32>
    %41 = arith.divf %39, %40 : vector<64x32xf32>
    %42 = arith.mulf %36, %41 : vector<64x32xf32>
    %c0_26 = arith.constant 0 : index
    %c0_27 = arith.constant 0 : index
    %43 = vector.load %arg11[%c0_26, %c0_27] : memref<32x32xf32, #tpu.memory_space<vmem>>, vector<32x32xf32>
    %cst_28 = arith.constant dense<0.000000e+00> : vector<64x32xf32>
    %44 = tpu.matmul %42, %43, %cst_28 {dimension_numbers = #tpu.dot_dimension_numbers<[1], [0], [0], [1], [0, 0, 1, 1], [], []>} : vector<64x32xf32>, vector<32x32xf32>, vector<64x32xf32> -> vector<64x32xf32>
    %c0_29 = arith.constant 0 : index
    %c0_30 = arith.constant 0 : index
    %45 = vector.load %arg12[%c0_29, %c0_30] : memref<1x32xf32, #tpu.memory_space<vmem>>, vector<1x32xf32>
    %46 = vector.broadcast %45 : vector<1x32xf32> to vector<64x32xf32>
    %47 = arith.addf %44, %46 : vector<64x32xf32>
    %cst_31 = arith.constant dense<0.000000e+00> : vector<64xf32>
    %48 = vector.multi_reduction <add>, %47, %cst_31 [1] : vector<64x32xf32> to vector<64xf32>
    %49 = vector.shape_cast %48 : vector<64xf32> to vector<64x1xf32>
    %cst_32 = arith.constant 3.200000e+01 : f32
    %50 = vector.broadcast %cst_32 : f32 to vector<64x1xf32>
    %51 = arith.divf %49, %50 : vector<64x1xf32>
    %52 = vector.broadcast %51 : vector<64x1xf32> to vector<64x32xf32>
    %53 = arith.subf %47, %52 : vector<64x32xf32>
    %54 = arith.mulf %53, %53 : vector<64x32xf32>
    %cst_33 = arith.constant dense<0.000000e+00> : vector<64xf32>
    %55 = vector.multi_reduction <add>, %54, %cst_33 [1] : vector<64x32xf32> to vector<64xf32>
    %56 = vector.shape_cast %55 : vector<64xf32> to vector<64x1xf32>
    %cst_34 = arith.constant 3.200000e+01 : f32
    %57 = vector.broadcast %cst_34 : f32 to vector<64x1xf32>
    %58 = arith.divf %56, %57 : vector<64x1xf32>
    %cst_35 = arith.constant 9.99999974E-6 : f32
    %59 = vector.broadcast %cst_35 : f32 to vector<64x1xf32>
    %60 = arith.addf %58, %59 : vector<64x1xf32>
    %61 = math.rsqrt %60 : vector<64x1xf32>
    %62 = vector.broadcast %61 : vector<64x1xf32> to vector<64x32xf32>
    %63 = arith.mulf %53, %62 : vector<64x32xf32>
    %c0_36 = arith.constant 0 : index
    %c0_37 = arith.constant 0 : index
    %64 = vector.load %arg13[%c0_36, %c0_37] : memref<1x32xf32, #tpu.memory_space<vmem>>, vector<1x32xf32>
    %65 = vector.broadcast %64 : vector<1x32xf32> to vector<64x32xf32>
    %66 = arith.mulf %63, %65 : vector<64x32xf32>
    %c0_38 = arith.constant 0 : index
    %c0_39 = arith.constant 0 : index
    %67 = vector.load %arg14[%c0_38, %c0_39] : memref<1x32xf32, #tpu.memory_space<vmem>>, vector<1x32xf32>
    %68 = vector.broadcast %67 : vector<1x32xf32> to vector<64x32xf32>
    %69 = arith.addf %66, %68 : vector<64x32xf32>
    %c0_40 = arith.constant 0 : index
    %c0_41 = arith.constant 0 : index
    %70 = vector.load %arg3[%c0_40, %c0_41] : memref<64x32xf32, #tpu.memory_space<vmem>>, vector<64x32xf32>
    %71 = arith.addf %70, %69 : vector<64x32xf32>
    %c0_42 = arith.constant 0 : index
    %c0_43 = arith.constant 0 : index
    %72 = vector.load %arg15[%c0_42, %c0_43] : memref<64x32xf32, #tpu.memory_space<vmem>>, vector<64x32xf32>
    tpu.vector_store %arg15[%c0_42, %c0_43], %71 {strides = array<i32>} : memref<64x32xf32, #tpu.memory_space<vmem>>, vector<64x32xf32>,
    return
  }
  func.func @transform_0(%arg0: i32) -> (i32, i32) {
    %c0_i32 = arith.constant 0 : i32
    %c0_i32_0 = arith.constant 0 : i32
    return %arg0, %c0_i32 : i32, i32
  }
  func.func @transform_1(%arg0: i32) -> (i32, i32) {
    %c0_i32 = arith.constant 0 : i32
    %c0_i32_0 = arith.constant 0 : i32
    return %arg0, %c0_i32 : i32, i32
  }
  func.func @transform_2(%arg0: i32) -> (i32, i32) {
    %c0_i32 = arith.constant 0 : i32
    %c0_i32_0 = arith.constant 0 : i32
    return %arg0, %c0_i32 : i32, i32
  }
  func.func @transform_3(%arg0: i32) -> (i32, i32) {
    %c0_i32 = arith.constant 0 : i32
    %c0_i32_0 = arith.constant 0 : i32
    %c0_i32_1 = arith.constant 0 : i32
    return %c0_i32, %c0_i32_0 : i32, i32
  }
  func.func @transform_4(%arg0: i32) -> (i32, i32) {
    %c0_i32 = arith.constant 0 : i32
    %c0_i32_0 = arith.constant 0 : i32
    %c0_i32_1 = arith.constant 0 : i32
    return %c0_i32, %c0_i32_0 : i32, i32
  }
  func.func @transform_5(%arg0: i32) -> (i32, i32) {
    %c0_i32 = arith.constant 0 : i32
    %c0_i32_0 = arith.constant 0 : i32
    %c0_i32_1 = arith.constant 0 : i32
    return %c0_i32, %c0_i32_0 : i32, i32
  }
  func.func @transform_6(%arg0: i32) -> (i32, i32) {
    %c0_i32 = arith.constant 0 : i32
    %c0_i32_0 = arith.constant 0 : i32
    %c0_i32_1 = arith.constant 0 : i32
    return %c0_i32, %c0_i32_0 : i32, i32
  }
  func.func @transform_7(%arg0: i32) -> (i32, i32) {
    %c0_i32 = arith.constant 0 : i32
    %c0_i32_0 = arith.constant 0 : i32
    %c0_i32_1 = arith.constant 0 : i32
    return %c0_i32, %c0_i32_0 : i32, i32
  }
  func.func @transform_8(%arg0: i32) -> (i32, i32) {
    %c0_i32 = arith.constant 0 : i32
    %c0_i32_0 = arith.constant 0 : i32
    %c0_i32_1 = arith.constant 0 : i32
    return %c0_i32, %c0_i32_0 : i32, i32
  }
  func.func @transform_9(%arg0: i32) -> (i32, i32) {
    %c0_i32 = arith.constant 0 : i32
    %c0_i32_0 = arith.constant 0 : i32
    %c0_i32_1 = arith.constant 0 : i32
    return %c0_i32, %c0_i32_0 : i32, i32
  }
  func.func @transform_10(%arg0: i32) -> (i32, i32) {
    %c0_i32 = arith.constant 0 : i32
    %c0_i32_0 = arith.constant 0 : i32
    %c0_i32_1 = arith.constant 0 : i32
    return %c0_i32, %c0_i32_0 : i32, i32
  }
  func.func @transform_11(%arg0: i32) -> (i32, i32) {
    %c0_i32 = arith.constant 0 : i32
    %c0_i32_0 = arith.constant 0 : i32
    %c0_i32_1 = arith.constant 0 : i32
    return %c0_i32, %c0_i32_0 : i32, i32
  }
  func.func @transform_12(%arg0: i32) -> (i32, i32) {
    %c0_i32 = arith.constant 0 : i32
    %c0_i32_0 = arith.constant 0 : i32
    %c0_i32_1 = arith.constant 0 : i32
    return %c0_i32, %c0_i32_0 : i32, i32
  }
  func.func @transform_13(%arg0: i32) -> (i32, i32) {
    %c0_i32 = arith.constant 0 : i32
    %c0_i32_0 = arith.constant 0 : i32
    %c0_i32_1 = arith.constant 0 : i32
    return %c0_i32, %c0_i32_0 : i32, i32
  }
  func.func @transform_14(%arg0: i32) -> (i32, i32) {
    %c0_i32 = arith.constant 0 : i32
    %c0_i32_0 = arith.constant 0 : i32
    return %arg0, %c0_i32 : i32, i32
  }
}

</mosaic_0001>

<llo_original>
// kernel: tpu_custom_call.1
$region0: #{tpu_custom_call.1}
  #allocation0 [shape = 'u32[]', space=smem, size = 0x4, offset = 0x4, fixed_abs, tag = 'smem constant byte address 0x4 - core index']
  #allocation1 [shape = 'u32[72,128]{1,0:T(1,128)}', space=vmem, size = 0x9000, scoped, tag = 'internal scratch']
  %s0 = inlined_call_operand.vmem [shape: s32[256,1], index: 0, kind: input, shape index: {}]
  %s1 = inlined_call_operand.vmem [shape: s32[256,1], index: 1, kind: input, shape index: {}]
  %s2 = inlined_call_operand.vmem [shape: f32[256,32], index: 2, kind: input, shape index: {}]
  %s3 = inlined_call_operand.vmem [shape: f32[16,32], index: 3, kind: input, shape index: {}]
  %s4 = inlined_call_operand.vmem [shape: f32[32,32], index: 4, kind: input, shape index: {}]
  %s5 = inlined_call_operand.vmem [shape: f32[32,32], index: 5, kind: input, shape index: {}]
  %s6 = inlined_call_operand.vmem [shape: f32[32,32], index: 6, kind: input, shape index: {}]
  %s7 = inlined_call_operand.vmem [shape: f32[1,32], index: 7, kind: input, shape index: {}]
  %s8 = inlined_call_operand.vmem [shape: f32[32,32], index: 8, kind: input, shape index: {}]
  %s9 = inlined_call_operand.vmem [shape: f32[1,32], index: 9, kind: input, shape index: {}]
  %s10 = inlined_call_operand.vmem [shape: f32[32,32], index: 10, kind: input, shape index: {}]
  %s11 = inlined_call_operand.vmem [shape: f32[1,32], index: 11, kind: input, shape index: {}]
  %s12 = inlined_call_operand.vmem [shape: f32[1,32], index: 12, kind: input, shape index: {}]
  %s13 = inlined_call_operand.vmem [shape: f32[1,32], index: 13, kind: input, shape index: {}]
  %s14 = inlined_call_operand.vmem [shape: f32[256,32], index: 14, kind: output, shape index: {}]
  %s15 = sld [smem:[#allocation0]]
  $region89: #{tpu_custom_call.1} parent=0
    _
  %s17 = ssub.s32 1, %s15
  %s18 = scalar_select 0, %s17, %s15
  loop: start=0, step=1, limit=6
  $region2: #{tpu_custom_call.1} parent=0 // loop_pre_header
    _
  $region3: #{tpu_custom_call.1} parent=0 // loop_header
    %s20 = sphi 0, %s24
    %p21 = scmp.ge.s32.totalorder %s20, 6
    %s30 = sphi 0, %s32
    %s33 = sphi 0, %s30
    %s34 = sphi 0, %s33
    %s50 = sphi 0, %s34
    %s56 = sphi 0, %s58
    %s59 = sphi 0, %s56
    %s60 = sphi 0, %s59
    %s76 = sphi 0, %s60
    %s82 = sphi 0, %s84
    %s85 = sphi 0, %s82
    %s86 = sphi 0, %s85
    %s102 = sphi 0, %s86
    %s106 = sphi 0, %s106
    %s108 = sphi 0, %s106
    %s109 = sphi 0, %s108
    %s123 = sphi 0, %s109
    %s127 = sphi 0, %s127
    %s129 = sphi 0, %s127
    %s130 = sphi 0, %s129
    %s144 = sphi 0, %s130
    %s148 = sphi 0, %s148
    %s150 = sphi 0, %s148
    %s151 = sphi 0, %s150
    %s165 = sphi 0, %s151
    %s169 = sphi 0, %s169
    %s171 = sphi 0, %s169
    %s172 = sphi 0, %s171
    %s186 = sphi 0, %s172
    %s190 = sphi 0, %s190
    %s192 = sphi 0, %s190
    %s193 = sphi 0, %s192
    %s207 = sphi 0, %s193
    %s211 = sphi 0, %s211
    %s213 = sphi 0, %s211
    %s214 = sphi 0, %s213
    %s228 = sphi 0, %s214
    %s232 = sphi 0, %s232
    %s234 = sphi 0, %s232
    %s235 = sphi 0, %s234
    %s249 = sphi 0, %s235
    %s253 = sphi 0, %s253
    %s255 = sphi 0, %s253
    %s256 = sphi 0, %s255
    %s270 = sphi 0, %s256
    %s274 = sphi 0, %s274
    %s276 = sphi 0, %s274
    %s277 = sphi 0, %s276
    %s291 = sphi 0, %s277
    %s295 = sphi 0, %s295
    %s297 = sphi 0, %s295
    %s298 = sphi 0, %s297
    %s312 = sphi 0, %s298
    %s316 = sphi 0, %s316
    %s318 = sphi 0, %s316
    %s319 = sphi 0, %s318
    %s333 = sphi 0, %s319
    %s339 = sphi 0, %s341
    %s342 = sphi 0, %s339
    %s343 = sphi 0, %s342
    %s359 = sphi 0, %s343
  $region4: #{tpu_custom_call.1} parent=0 // loop_header_branch
    %23 = sbr.rel (%p21) target = $region8
  $region5: #{tpu_custom_call.1} parent=0 // loop_body
    %s25 = ssub.s32 %s20, 1
    %s26 = ssub.s32 %s20, 2
    %s27 = sadd.s32 %s20, 1
    %s28 = ssub.s32 %s20, %s27
    %p29 = scmp.eq.s32.totalorder %s28, 0
    %s31 = sadd.s32 %s30, 1
    %s32 = scalar_select %p29, %s30, %s31
    %p35 = pneg %p29
    %p36 = scmp.eq.s32.totalorder %s20, 3
    %p37 = por %p35, %p36
    %p38 = scmp.ne.s32.totalorder %s30, %s33
    %p39 = scmp.eq.s32.totalorder %s20, 0
    %p40 = por %p38, %p39
    %p41 = scmp.ne.s32.totalorder %s30, %s33
    %p42 = scmp.eq.s32.totalorder %s25, 3
    %p43 = por %p41, %p42
    %p44 = scmp.ne.s32.totalorder %s33, %s34
    %p45 = scmp.eq.s32.totalorder %s25, 0
    %p46 = por %p44, %p45
    %p47 = scmp.ne.s32.totalorder %s33, %s34
    %p48 = scmp.eq.s32.totalorder %s26, 3
    %p49 = por %p47, %p48
    %p51 = scmp.ne.s32.totalorder %s34, %s50
    %p52 = scmp.eq.s32.totalorder %s26, 0
    %p53 = por %p51, %p52
    %s54 = ssub.s32 %s20, %s27
    %p55 = scmp.eq.s32.totalorder %s54, 0
    %s57 = sadd.s32 %s56, 1
    %s58 = scalar_select %p55, %s56, %s57
    %p61 = pneg %p55
    %p62 = scmp.eq.s32.totalorder %s20, 3
    %p63 = por %p61, %p62
    %p64 = scmp.ne.s32.totalorder %s56, %s59
    %p65 = scmp.eq.s32.totalorder %s20, 0
    %p66 = por %p64, %p65
    %p67 = scmp.ne.s32.totalorder %s56, %s59
    %p68 = scmp.eq.s32.totalorder %s25, 3
    %p69 = por %p67, %p68
    %p70 = scmp.ne.s32.totalorder %s59, %s60
    %p71 = scmp.eq.s32.totalorder %s25, 0
    %p72 = por %p70, %p71
    %p73 = scmp.ne.s32.totalorder %s59, %s60
    %p74 = scmp.eq.s32.totalorder %s26, 3
    %p75 = por %p73, %p74
    %p77 = scmp.ne.s32.totalorder %s60, %s76
    %p78 = scmp.eq.s32.totalorder %s26, 0
    %p79 = por %p77, %p78
    %s80 = ssub.s32 %s20, %s27
    %p81 = scmp.eq.s32.totalorder %s80, 0
    %s83 = sadd.s32 %s82, 1
    %s84 = scalar_select %p81, %s82, %s83
    %p87 = pneg %p81
    %p88 = scmp.eq.s32.totalorder %s20, 3
    %p89 = por %p87, %p88
    %p90 = scmp.ne.s32.totalorder %s82, %s85
    %p91 = scmp.eq.s32.totalorder %s20, 0
    %p92 = por %p90, %p91
    %p93 = scmp.ne.s32.totalorder %s82, %s85
    %p94 = scmp.eq.s32.totalorder %s25, 3
    %p95 = por %p93, %p94
    %p96 = scmp.ne.s32.totalorder %s85, %s86
    %p97 = scmp.eq.s32.totalorder %s25, 0
    %p98 = por %p96, %p97
    %p99 = scmp.ne.s32.totalorder %s85, %s86
    %p100 = scmp.eq.s32.totalorder %s26, 3
    %p101 = por %p99, %p100
    %p103 = scmp.ne.s32.totalorder %s86, %s102
    %p104 = scmp.eq.s32.totalorder %s26, 0
    %p105 = por %p103, %p104
    %s107 = sadd.s32 %s106, 1
    %p110 = scmp.eq.s32.totalorder %s20, 3
    %p111 = scmp.ne.s32.totalorder %s106, %s108
    %p112 = scmp.eq.s32.totalorder %s20, 0
    %p113 = por %p111, %p112
    %p114 = scmp.ne.s32.totalorder %s106, %s108
    %p115 = scmp.eq.s32.totalorder %s25, 3
    %p116 = por %p114, %p115
    %p117 = scmp.ne.s32.totalorder %s108, %s109
    %p118 = scmp.eq.s32.totalorder %s25, 0
    %p119 = por %p117, %p118
    %p120 = scmp.ne.s32.totalorder %s108, %s109
    %p121 = scmp.eq.s32.totalorder %s26, 3
    %p122 = por %p120, %p121
    %p124 = scmp.ne.s32.totalorder %s109, %s123
    %p125 = scmp.eq.s32.totalorder %s26, 0
    %p126 = por %p124, %p125
    %s128 = sadd.s32 %s127, 1
    %p131 = scmp.eq.s32.totalorder %s20, 3
    %p132 = scmp.ne.s32.totalorder %s127, %s129
    %p133 = scmp.eq.s32.totalorder %s20, 0
    %p134 = por %p132, %p133
    %p135 = scmp.ne.s32.totalorder %s127, %s129
    %p136 = scmp.eq.s32.totalorder %s25, 3
    %p137 = por %p135, %p136
    %p138 = scmp.ne.s32.totalorder %s129, %s130
    %p139 = scmp.eq.s32.totalorder %s25, 0
    %p140 = por %p138, %p139
    %p141 = scmp.ne.s32.totalorder %s129, %s130
    %p142 = scmp.eq.s32.totalorder %s26, 3
    %p143 = por %p141, %p142
    %p145 = scmp.ne.s32.totalorder %s130, %s144
    %p146 = scmp.eq.s32.totalorder %s26, 0
    %p147 = por %p145, %p146
    %s149 = sadd.s32 %s148, 1
    %p152 = scmp.eq.s32.totalorder %s20, 3
    %p153 = scmp.ne.s32.totalorder %s148, %s150
    %p154 = scmp.eq.s32.totalorder %s20, 0
    %p155 = por %p153, %p154
    %p156 = scmp.ne.s32.totalorder %s148, %s150
    %p157 = scmp.eq.s32.totalorder %s25, 3
    %p158 = por %p156, %p157
    %p159 = scmp.ne.s32.totalorder %s150, %s151
    %p160 = scmp.eq.s32.totalorder %s25, 0
    %p161 = por %p159, %p160
    %p162 = scmp.ne.s32.totalorder %s150, %s151
    %p163 = scmp.eq.s32.totalorder %s26, 3
    %p164 = por %p162, %p163
    %p166 = scmp.ne.s32.totalorder %s151, %s165
    %p167 = scmp.eq.s32.totalorder %s26, 0
    %p168 = por %p166, %p167
    %s170 = sadd.s32 %s169, 1
    %p173 = scmp.eq.s32.totalorder %s20, 3
    %p174 = scmp.ne.s32.totalorder %s169, %s171
    %p175 = scmp.eq.s32.totalorder %s20, 0
    %p176 = por %p174, %p175
    %p177 = scmp.ne.s32.totalorder %s169, %s171
    %p178 = scmp.eq.s32.totalorder %s25, 3
    %p179 = por %p177, %p178
    %p180 = scmp.ne.s32.totalorder %s171, %s172
    %p181 = scmp.eq.s32.totalorder %s25, 0
    %p182 = por %p180, %p181
    %p183 = scmp.ne.s32.totalorder %s171, %s172
    %p184 = scmp.eq.s32.totalorder %s26, 3
    %p185 = por %p183, %p184
    %p187 = scmp.ne.s32.totalorder %s172, %s186
    %p188 = scmp.eq.s32.totalorder %s26, 0
    %p189 = por %p187, %p188
    %s191 = sadd.s32 %s190, 1
    %p194 = scmp.eq.s32.totalorder %s20, 3
    %p195 = scmp.ne.s32.totalorder %s190, %s192
    %p196 = scmp.eq.s32.totalorder %s20, 0
    %p197 = por %p195, %p196
    %p198 = scmp.ne.s32.totalorder %s190, %s192
    %p199 = scmp.eq.s32.totalorder %s25, 3
    %p200 = por %p198, %p199
    %p201 = scmp.ne.s32.totalorder %s192, %s193
    %p202 = scmp.eq.s32.totalorder %s25, 0
    %p203 = por %p201, %p202
    %p204 = scmp.ne.s32.totalorder %s192, %s193
    %p205 = scmp.eq.s32.totalorder %s26, 3
    %p206 = por %p204, %p205
    %p208 = scmp.ne.s32.totalorder %s193, %s207
    %p209 = scmp.eq.s32.totalorder %s26, 0
    %p210 = por %p208, %p209
    %s212 = sadd.s32 %s211, 1
    %p215 = scmp.eq.s32.totalorder %s20, 3
    %p216 = scmp.ne.s32.totalorder %s211, %s213
    %p217 = scmp.eq.s32.totalorder %s20, 0
    %p218 = por %p216, %p217
    %p219 = scmp.ne.s32.totalorder %s211, %s213
    %p220 = scmp.eq.s32.totalorder %s25, 3
    %p221 = por %p219, %p220
    %p222 = scmp.ne.s32.totalorder %s213, %s214
    %p223 = scmp.eq.s32.totalorder %s25, 0
    %p224 = por %p222, %p223
    %p225 = scmp.ne.s32.totalorder %s213, %s214
    %p226 = scmp.eq.s32.totalorder %s26, 3
    %p227 = por %p225, %p226
    %p229 = scmp.ne.s32.totalorder %s214, %s228
    %p230 = scmp.eq.s32.totalorder %s26, 0
    %p231 = por %p229, %p230
    %s233 = sadd.s32 %s232, 1
    %p236 = scmp.eq.s32.totalorder %s20, 3
    %p237 = scmp.ne.s32.totalorder %s232, %s234
    %p238 = scmp.eq.s32.totalorder %s20, 0
    %p239 = por %p237, %p238
    %p240 = scmp.ne.s32.totalorder %s232, %s234
    %p241 = scmp.eq.s32.totalorder %s25, 3
    %p242 = por %p240, %p241
    %p243 = scmp.ne.s32.totalorder %s234, %s235
    %p244 = scmp.eq.s32.totalorder %s25, 0
    %p245 = por %p243, %p244
    %p246 = scmp.ne.s32.totalorder %s234, %s235
    %p247 = scmp.eq.s32.totalorder %s26, 3
    %p248 = por %p246, %p247
    %p250 = scmp.ne.s32.totalorder %s235, %s249
    %p251 = scmp.eq.s32.totalorder %s26, 0
    %p252 = por %p250, %p251
    %s254 = sadd.s32 %s253, 1
    %p257 = scmp.eq.s32.totalorder %s20, 3
    %p258 = scmp.ne.s32.totalorder %s253, %s255
    %p259 = scmp.eq.s32.totalorder %s20, 0
    %p260 = por %p258, %p259
    %p261 = scmp.ne.s32.totalorder %s253, %s255
    %p262 = scmp.eq.s32.totalorder %s25, 3
    %p263 = por %p261, %p262
    %p264 = scmp.ne.s32.totalorder %s255, %s256
    %p265 = scmp.eq.s32.totalorder %s25, 0
    %p266 = por %p264, %p265
    %p267 = scmp.ne.s32.totalorder %s255, %s256
    %p268 = scmp.eq.s32.totalorder %s26, 3
    %p269 = por %p267, %p268
    %p271 = scmp.ne.s32.totalorder %s256, %s270
    %p272 = scmp.eq.s32.totalorder %s26, 0
    %p273 = por %p271, %p272
    %s275 = sadd.s32 %s274, 1
    %p278 = scmp.eq.s32.totalorder %s20, 3
    %p279 = scmp.ne.s32.totalorder %s274, %s276
    %p280 = scmp.eq.s32.totalorder %s20, 0
    %p281 = por %p279, %p280
    %p282 = scmp.ne.s32.totalorder %s274, %s276
    %p283 = scmp.eq.s32.totalorder %s25, 3
    %p284 = por %p282, %p283
    %p285 = scmp.ne.s32.totalorder %s276, %s277
    %p286 = scmp.eq.s32.totalorder %s25, 0
    %p287 = por %p285, %p286
    %p288 = scmp.ne.s32.totalorder %s276, %s277
    %p289 = scmp.eq.s32.totalorder %s26, 3
    %p290 = por %p288, %p289
    %p292 = scmp.ne.s32.totalorder %s277, %s291
    %p293 = scmp.eq.s32.totalorder %s26, 0
    %p294 = por %p292, %p293
    %s296 = sadd.s32 %s295, 1
    %p299 = scmp.eq.s32.totalorder %s20, 3
    %p300 = scmp.ne.s32.totalorder %s295, %s297
    %p301 = scmp.eq.s32.totalorder %s20, 0
    %p302 = por %p300, %p301
    %p303 = scmp.ne.s32.totalorder %s295, %s297
    %p304 = scmp.eq.s32.totalorder %s25, 3
    %p305 = por %p303, %p304
    %p306 = scmp.ne.s32.totalorder %s297, %s298
    %p307 = scmp.eq.s32.totalorder %s25, 0
    %p308 = por %p306, %p307
    %p309 = scmp.ne.s32.totalorder %s297, %s298
    %p310 = scmp.eq.s32.totalorder %s26, 3
    %p311 = por %p309, %p310
    %p313 = scmp.ne.s32.totalorder %s298, %s312
    %p314 = scmp.eq.s32.totalorder %s26, 0
    %p315 = por %p313, %p314
    %s317 = sadd.s32 %s316, 1
    %p320 = scmp.eq.s32.totalorder %s20, 3
    %p321 = scmp.ne.s32.totalorder %s316, %s318
    %p322 = scmp.eq.s32.totalorder %s20, 0
    %p323 = por %p321, %p322
    %p324 = scmp.ne.s32.totalorder %s316, %s318
    %p325 = scmp.eq.s32.totalorder %s25, 3
    %p326 = por %p324, %p325
    %p327 = scmp.ne.s32.totalorder %s318, %s319
    %p328 = scmp.eq.s32.totalorder %s25, 0
    %p329 = por %p327, %p328
    %p330 = scmp.ne.s32.totalorder %s318, %s319
    %p331 = scmp.eq.s32.totalorder %s26, 3
    %p332 = por %p330, %p331
    %p334 = scmp.ne.s32.totalorder %s319, %s333
    %p335 = scmp.eq.s32.totalorder %s26, 0
    %p336 = por %p334, %p335
    %s337 = ssub.s32 %s20, %s27
    %p338 = scmp.eq.s32.totalorder %s337, 0
    %s340 = sadd.s32 %s339, 1
    %s341 = scalar_select %p338, %s339, %s340
    %p344 = pneg %p338
    %p345 = scmp.eq.s32.totalorder %s20, 3
    %p346 = por %p344, %p345
    %p347 = scmp.ne.s32.totalorder %s339, %s342
    %p348 = scmp.eq.s32.totalorder %s20, 0
    %p349 = por %p347, %p348
    %p350 = scmp.ne.s32.totalorder %s339, %s342
    %p351 = scmp.eq.s32.totalorder %s25, 3
    %p352 = por %p350, %p351
    %p353 = scmp.ne.s32.totalorder %s342, %s343
    %p354 = scmp.eq.s32.totalorder %s25, 0
    %p355 = por %p353, %p354
    %p356 = scmp.ne.s32.totalorder %s342, %s343
    %p357 = scmp.eq.s32.totalorder %s26, 3
    %p358 = por %p356, %p357
    %p360 = scmp.ne.s32.totalorder %s343, %s359
    %p361 = scmp.eq.s32.totalorder %s26, 0
    %p362 = por %p360, %p361
    %p363 = scmp.le.s32.totalorder 1, %s20
    %p364 = scmp.lt.s32.totalorder %s20, 5
    %p365 = pnand %p363, %p364
    %p366 = pneg %p365
    // Predicated region
    $region9: #{tpu_custom_call.1} parent=5 // pred_check
      _
    $region10: #{tpu_custom_call.1} parent=5 // pred_check_branch
      %368 = sbr.rel (%p365) target = $region12
    $region11: #{tpu_custom_call.1} parent=5 // pred_region
      %s369 = ssub.s32 %s20, 1
      // Predicated region
      $region13: #{tpu_custom_call.1} parent=11 // pred_check
        %p370 = pneg %p119
      $region14: #{tpu_custom_call.1} parent=11 // pred_check_branch
        %372 = sbr.rel (%p370) target = $region16
      $region15: #{tpu_custom_call.1} parent=11 // pred_region
        _
      $region16: #{tpu_custom_call.1} parent=11 // pred_fallthru
        _
      // Predicated region
      $region17: #{tpu_custom_call.1} parent=11 // pred_check
        %p373 = pneg %p140
      $region18: #{tpu_custom_call.1} parent=11 // pred_check_branch
        %375 = sbr.rel (%p373) target = $region20
      $region19: #{tpu_custom_call.1} parent=11 // pred_region
        _
      $region20: #{tpu_custom_call.1} parent=11 // pred_fallthru
        _
      // Predicated region
      $region21: #{tpu_custom_call.1} parent=11 // pred_check
        %p376 = pneg %p161
      $region22: #{tpu_custom_call.1} parent=11 // pred_check_branch
        %378 = sbr.rel (%p376) target = $region24
      $region23: #{tpu_custom_call.1} parent=11 // pred_region
        _
      $region24: #{tpu_custom_call.1} parent=11 // pred_fallthru
        _
      // Predicated region
      $region25: #{tpu_custom_call.1} parent=11 // pred_check
        %p379 = pneg %p182
      $region26: #{tpu_custom_call.1} parent=11 // pred_check_branch
        %381 = sbr.rel (%p379) target = $region28
      $region27: #{tpu_custom_call.1} parent=11 // pred_region
        _
      $region28: #{tpu_custom_call.1} parent=11 // pred_fallthru
        _
      // Predicated region
      $region29: #{tpu_custom_call.1} parent=11 // pred_check
        %p382 = pneg %p203
      $region30: #{tpu_custom_call.1} parent=11 // pred_check_branch
        %384 = sbr.rel (%p382) target = $region32
      $region31: #{tpu_custom_call.1} parent=11 // pred_region
        _
      $region32: #{tpu_custom_call.1} parent=11 // pred_fallthru
        _
      // Predicated region
      $region33: #{tpu_custom_call.1} parent=11 // pred_check
        %p385 = pneg %p224
      $region34: #{tpu_custom_call.1} parent=11 // pred_check_branch
        %387 = sbr.rel (%p385) target = $region36
      $region35: #{tpu_custom_call.1} parent=11 // pred_region
        _
      $region36: #{tpu_custom_call.1} parent=11 // pred_fallthru
        _
      // Predicated region
      $region37: #{tpu_custom_call.1} parent=11 // pred_check
        %p388 = pneg %p245
      $region38: #{tpu_custom_call.1} parent=11 // pred_check_branch
        %390 = sbr.rel (%p388) target = $region40
      $region39: #{tpu_custom_call.1} parent=11 // pred_region
        _
      $region40: #{tpu_custom_call.1} parent=11 // pred_fallthru
        _
      // Predicated region
      $region41: #{tpu_custom_call.1} parent=11 // pred_check
        %p391 = pneg %p266
      $region42: #{tpu_custom_call.1} parent=11 // pred_check_branch
        %393 = sbr.rel (%p391) target = $region44
      $region43: #{tpu_custom_call.1} parent=11 // pred_region
        _
      $region44: #{tpu_custom_call.1} parent=11 // pred_fallthru
        _
      // Predicated region
      $region45: #{tpu_custom_call.1} parent=11 // pred_check
        %p394 = pneg %p287
      $region46: #{tpu_custom_call.1} parent=11 // pred_check_branch
        %396 = sbr.rel (%p394) target = $region48
      $region47: #{tpu_custom_call.1} parent=11 // pred_region
        _
      $region48: #{tpu_custom_call.1} parent=11 // pred_fallthru
        _
      // Predicated region
      $region49: #{tpu_custom_call.1} parent=11 // pred_check
        %p397 = pneg %p308
      $region50: #{tpu_custom_call.1} parent=11 // pred_check_branch
        %399 = sbr.rel (%p397) target = $region52
      $region51: #{tpu_custom_call.1} parent=11 // pred_region
        _
      $region52: #{tpu_custom_call.1} parent=11 // pred_fallthru
        _
      // Predicated region
      $region53: #{tpu_custom_call.1} parent=11 // pred_check
        %p400 = pneg %p329
      $region54: #{tpu_custom_call.1} parent=11 // pred_check_branch
        %402 = sbr.rel (%p400) target = $region56
      $region55: #{tpu_custom_call.1} parent=11 // pred_region
        _
      $region56: #{tpu_custom_call.1} parent=11 // pred_fallthru
        _
    $region12: #{tpu_custom_call.1} parent=5 // pred_fallthru
      _
    %p403 = scmp.lt.s32.totalorder %s20, 4
    // Predicated region
    $region57: #{tpu_custom_call.1} parent=5 // pred_check
      %p404 = pneg %p403
    $region58: #{tpu_custom_call.1} parent=5 // pred_check_branch
      %406 = sbr.rel (%p404) target = $region60
    $region59: #{tpu_custom_call.1} parent=5 // pred_region
      // Predicated region
      $region61: #{tpu_custom_call.1} parent=59 // pred_check
        %p407 = pneg %p40
      $region62: #{tpu_custom_call.1} parent=59 // pred_check_branch
        %409 = sbr.rel (%p407) target = $region64
      $region63: #{tpu_custom_call.1} parent=59 // pred_region
        %s410 = smul.u32 8, %s20
        %p411 = scmp.lt.s32.totalorder %s410, 31
        %s412 = scalar_select %p411, %s410, 31
        %s413 = smul.addr %s412, 8
        %s414 = scalar_lea.vmem %s0, %s413
        %s415 = smul.u32 8, %s20
      $region64: #{tpu_custom_call.1} parent=59 // pred_fallthru
        _
      // Predicated region
      $region65: #{tpu_custom_call.1} parent=59 // pred_check
        %p416 = pneg %p66
      $region66: #{tpu_custom_call.1} parent=59 // pred_check_branch
        %418 = sbr.rel (%p416) target = $region68
      $region67: #{tpu_custom_call.1} parent=59 // pred_region
        %s419 = smul.u32 8, %s20
        %p420 = scmp.lt.s32.totalorder %s419, 31
        %s421 = scalar_select %p420, %s419, 31
        %s422 = smul.addr %s421, 8
        %s423 = scalar_lea.vmem %s1, %s422
        %s424 = smul.u32 8, %s20
      $region68: #{tpu_custom_call.1} parent=59 // pred_fallthru
        _
      // Predicated region
      $region69: #{tpu_custom_call.1} parent=59 // pred_check
        %p425 = pneg %p92
      $region70: #{tpu_custom_call.1} parent=59 // pred_check_branch
        %427 = sbr.rel (%p425) target = $region72
      $region71: #{tpu_custom_call.1} parent=59 // pred_region
        %s428 = smul.u32 8, %s20
        %p429 = scmp.lt.s32.totalorder %s428, 31
        %s430 = scalar_select %p429, %s428, 31
        %s431 = smul.addr %s430, 8
        %s432 = scalar_lea.vmem %s2, %s431
        %s433 = smul.u32 8, %s20
      $region72: #{tpu_custom_call.1} parent=59 // pred_fallthru
        _
    $region60: #{tpu_custom_call.1} parent=5 // pred_fallthru
      _
    %p434 = scmp.le.s32.totalorder 1, %s20
    %p435 = scmp.lt.s32.totalorder %s20, 5
    %p436 = pnand %p434, %p435
    %p437 = pneg %p436
    // Predicated region
    $region73: #{tpu_custom_call.1} parent=5 // pred_check
      _
    $region74: #{tpu_custom_call.1} parent=5 // pred_check_branch
      %439 = sbr.rel (%p436) target = $region76
    $region75: #{tpu_custom_call.1} parent=5 // pred_region
      %s440 = ssub.s32 %s20, 1
      %s441 = smul.u32 8, %s25
      %p442 = scmp.lt.s32.totalorder %s441, 31
      %s443 = scalar_select %p442, %s441, 31
      %s444 = smul.addr %s443, 8
      %s445 = scalar_lea.vmem %s0, %s444
      %p446 = pneg %p46
      %p447 = pneg %p43
      %s448 = smul.u32 8, %s25
      %p449 = scmp.lt.s32.totalorder %s448, 31
      %s450 = scalar_select %p449, %s448, 31
      %s451 = smul.addr %s450, 8
      %s452 = scalar_lea.vmem %s1, %s451
      %p453 = pneg %p72
      %p454 = pneg %p69
      %s455 = smul.u32 8, %s25
      %p456 = scmp.lt.s32.totalorder %s455, 31
      %s457 = scalar_select %p456, %s455, 31
      %s458 = smul.addr %s457, 8
      %s459 = scalar_lea.vmem %s2, %s458
      %p460 = pneg %p98
      %p461 = pneg %p95
      %p462 = pneg %p119
      %p463 = pneg %p116
      %p464 = pneg %p140
      %p465 = pneg %p137
      %p466 = pneg %p161
      %p467 = pneg %p158
      %p468 = pneg %p182
      %p469 = pneg %p179
      %p470 = pneg %p203
      %p471 = pneg %p200
      %p472 = pneg %p224
      %p473 = pneg %p221
      %p474 = pneg %p245
      %p475 = pneg %p242
      %p476 = pneg %p266
      %p477 = pneg %p263
      %p478 = pneg %p287
      %p479 = pneg %p284
      %p480 = pneg %p308
      %p481 = pneg %p305
      %p482 = pneg %p329
      %p483 = pneg %p326
      %p484 = pneg %p355
      %p485 = pneg %p352
      %s486 = smul.u32 8, %s25
      %p487 = scmp.lt.s32.totalorder %s486, 31
      %s488 = scalar_select %p487, %s486, 31
      %s489 = smul.addr %s488, 8
      %s490 = scalar_lea.vmem %s14, %s489
      %s491 = smul.u32 8, %s25
      %p492 = scmp.lt.s32.totalorder %s491, 31
      %s493 = scalar_select %p492, %s491, 31
      %s494 = smul.addr %s493, 8
      %s495 = scalar_lea.vmem %s0, %s494
      %s496 = smul.u32 8, %s25
      %s497 = smul.u32 8, %s25
      %p498 = scmp.lt.s32.totalorder %s497, 31
      %s499 = scalar_select %p498, %s497, 31
      %s500 = smul.addr %s499, 8
      %s501 = scalar_lea.vmem %s1, %s500
      %s502 = smul.u32 8, %s25
      %s503 = smul.u32 8, %s25
      %p504 = scmp.lt.s32.totalorder %s503, 31
      %s505 = scalar_select %p504, %s503, 31
      %s506 = smul.addr %s505, 8
      %s507 = scalar_lea.vmem %s2, %s506
      %s508 = smul.u32 8, %s25
      %s509 = smul.u32 8, %s25
      %p510 = scmp.lt.s32.totalorder %s509, 31
      %s511 = scalar_select %p510, %s509, 31
      %s512 = smul.addr %s511, 8
      %s513 = scalar_lea.vmem %s14, %s512
      %s514 = smul.u32 8, %s25
      %v515 = vlaneseq
      %v516 = vand.u32 %v515, 127
      %v517 = vld [vmem:[%s495] sm:$0xff]
      %v518 = vld [vmem:[%s495 + $0x8] sm:$0xff]
      %v519 = vld [vmem:[%s495 + $0x10] sm:$0xff]
      %v520 = vld [vmem:[%s495 + $0x18] sm:$0xff]
      %v521 = vld [vmem:[%s495 + $0x20] sm:$0xff]
      %v522 = vld [vmem:[%s495 + $0x28] sm:$0xff]
      %v523 = vld [vmem:[%s495 + $0x30] sm:$0xff]
      %v524 = vld [vmem:[%s495 + $0x38] sm:$0xff]
      %525 = vset.pattern.permute.xlu0 0
      %526 = vperm.xlu0 %525, %v517
      %v527 = vpop.permute.xlu0 %526
      %528 = vset.pattern.permute.xlu0 0
      %529 = vperm.xlu0 %528, %v518
      %v530 = vpop.permute.xlu0 %529
      %531 = vset.pattern.permute.xlu0 0
      %532 = vperm.xlu0 %531, %v519
      %v533 = vpop.permute.xlu0 %532
      %534 = vset.pattern.permute.xlu0 0
      %535 = vperm.xlu0 %534, %v520
      %v536 = vpop.permute.xlu0 %535
      %537 = vset.pattern.permute.xlu0 0
      %538 = vperm.xlu0 %537, %v521
      %v539 = vpop.permute.xlu0 %538
      %540 = vset.pattern.permute.xlu0 0
      %541 = vperm.xlu0 %540, %v522
      %v542 = vpop.permute.xlu0 %541
      %543 = vset.pattern.permute.xlu0 0
      %544 = vperm.xlu0 %543, %v523
      %v545 = vpop.permute.xlu0 %544
      %546 = vset.pattern.permute.xlu0 0
      %547 = vperm.xlu0 %546, %v524
      %v548 = vpop.permute.xlu0 %547
      %vm549 = vcmp.eq.s32.totalorder %v527, %v516
      %vm550 = vcmp.eq.s32.totalorder %v530, %v516
      %vm551 = vcmp.eq.s32.totalorder %v533, %v516
      %vm552 = vcmp.eq.s32.totalorder %v536, %v516
      %vm553 = vcmp.eq.s32.totalorder %v539, %v516
      %vm554 = vcmp.eq.s32.totalorder %v542, %v516
      %vm555 = vcmp.eq.s32.totalorder %v545, %v516
      %vm556 = vcmp.eq.s32.totalorder %v548, %v516
      %v557 = vsel %vm549, 1, 0
      %v558 = vsel %vm550, 1, 0
      %v559 = vsel %vm551, 1, 0
      %v560 = vsel %vm552, 1, 0
      %v561 = vsel %vm553, 1, 0
      %v562 = vsel %vm554, 1, 0
      %v563 = vsel %vm555, 1, 0
      %v564 = vsel %vm556, 1, 0
      %v565 = vcvt.s32.f32 %v557
      %v566 = vcvt.s32.f32 %v558
      %v567 = vcvt.s32.f32 %v559
      %v568 = vcvt.s32.f32 %v560
      %v569 = vcvt.s32.f32 %v561
      %v570 = vcvt.s32.f32 %v562
      %v571 = vcvt.s32.f32 %v563
      %v572 = vcvt.s32.f32 %v564
      %v573 = vld [vmem:[%s501] sm:$0xff]
      %v574 = vld [vmem:[%s501 + $0x8] sm:$0xff]
      %v575 = vld [vmem:[%s501 + $0x10] sm:$0xff]
      %v576 = vld [vmem:[%s501 + $0x18] sm:$0xff]
      %v577 = vld [vmem:[%s501 + $0x20] sm:$0xff]
      %v578 = vld [vmem:[%s501 + $0x28] sm:$0xff]
      %v579 = vld [vmem:[%s501 + $0x30] sm:$0xff]
      %v580 = vld [vmem:[%s501 + $0x38] sm:$0xff]
      %581 = vset.pattern.permute.xlu0 0
      %582 = vperm.xlu0 %581, %v573
      %v583 = vpop.permute.xlu0 %582
      %584 = vset.pattern.permute.xlu0 0
      %585 = vperm.xlu0 %584, %v574
      %v586 = vpop.permute.xlu0 %585
      %587 = vset.pattern.permute.xlu0 0
      %588 = vperm.xlu0 %587, %v575
      %v589 = vpop.permute.xlu0 %588
      %590 = vset.pattern.permute.xlu0 0
      %591 = vperm.xlu0 %590, %v576
      %v592 = vpop.permute.xlu0 %591
      %593 = vset.pattern.permute.xlu0 0
      %594 = vperm.xlu0 %593, %v577
      %v595 = vpop.permute.xlu0 %594
      %596 = vset.pattern.permute.xlu0 0
      %597 = vperm.xlu0 %596, %v578
      %v598 = vpop.permute.xlu0 %597
      %599 = vset.pattern.permute.xlu0 0
      %600 = vperm.xlu0 %599, %v579
      %v601 = vpop.permute.xlu0 %600
      %602 = vset.pattern.permute.xlu0 0
      %603 = vperm.xlu0 %602, %v580
      %v604 = vpop.permute.xlu0 %603
      %vm605 = vcmp.eq.s32.totalorder %v583, %v516
      %vm606 = vcmp.eq.s32.totalorder %v586, %v516
      %vm607 = vcmp.eq.s32.totalorder %v589, %v516
      %vm608 = vcmp.eq.s32.totalorder %v592, %v516
      %vm609 = vcmp.eq.s32.totalorder %v595, %v516
      %vm610 = vcmp.eq.s32.totalorder %v598, %v516
      %vm611 = vcmp.eq.s32.totalorder %v601, %v516
      %vm612 = vcmp.eq.s32.totalorder %v604, %v516
      %v613 = vsel %vm605, 1, 0
      %v614 = vsel %vm606, 1, 0
      %v615 = vsel %vm607, 1, 0
      %v616 = vsel %vm608, 1, 0
      %v617 = vsel %vm609, 1, 0
      %v618 = vsel %vm610, 1, 0
      %v619 = vsel %vm611, 1, 0
      %v620 = vsel %vm612, 1, 0
      %v621 = vcvt.s32.f32 %v613
      %v622 = vcvt.s32.f32 %v614
      %v623 = vcvt.s32.f32 %v615
      %v624 = vcvt.s32.f32 %v616
      %v625 = vcvt.s32.f32 %v617
      %v626 = vcvt.s32.f32 %v618
      %v627 = vcvt.s32.f32 %v619
      %v628 = vcvt.s32.f32 %v620
      %v629 = vld [vmem:[%s3] sm:$0xff]
      %v630 = vld [vmem:[%s3 + $0x8] sm:$0xff]
      %vm631 = vcmask 130048
      %v633 = vsel %vm631, %v565, 0
      %v636 = vsel %vm631, %v566, 0
      %v639 = vsel %vm631, %v567, 0
      %v642 = vsel %vm631, %v568, 0
      %v645 = vsel %vm631, %v569, 0
      %v648 = vsel %vm631, %v570, 0
      %v651 = vsel %vm631, %v571, 0
      %v654 = vsel %vm631, %v572, 0
      %656 = vmatpush.msra.mxu0 0.0
      %657 = vmatpush.msra.mxu0 0.0
      %658 = vmatpush.msra.mxu0 0.0
      %659 = vmatpush.msra.mxu0 0.0
      %660 = vmatpush.msra.mxu0 0.0
      %661 = vmatpush.msra.mxu0 0.0
      %662 = vmatpush.msra.mxu0 0.0
      %663 = vmatpush.msra.mxu0 0.0
      %664 = vmatpush.msra.mxu0 0.0
      %665 = vmatpush.msra.mxu0 0.0
      %666 = vmatpush.msra.mxu0 0.0
      %667 = vmatpush.msra.mxu0 0.0
      %668 = vmatpush.msra.mxu0 0.0
      %669 = vmatpush.msra.mxu0 0.0
      %670 = vmatpush.msra.mxu0 %v630
      %671 = vmatpush.msra.mxu0 %v629
      %672 = vmatmul.f32.gmra.mxu0 %v633
      %v673 = vpop.f32.mrf.mxu0
      %v674 = vadd.f32 0.0, %v673
      %675 = vmatmul.f32.gmra.mxu0 %v636
      %v676 = vpop.f32.mrf.mxu0
      %v677 = vadd.f32 0.0, %v676
      %678 = vmatmul.f32.gmra.mxu0 %v639
      %v679 = vpop.f32.mrf.mxu0
      %v680 = vadd.f32 0.0, %v679
      %681 = vmatmul.f32.gmra.mxu0 %v642
      %v682 = vpop.f32.mrf.mxu0
      %v683 = vadd.f32 0.0, %v682
      %684 = vmatmul.f32.gmra.mxu0 %v645
      %v685 = vpop.f32.mrf.mxu0
      %v686 = vadd.f32 0.0, %v685
      %687 = vmatmul.f32.gmra.mxu0 %v648
      %v688 = vpop.f32.mrf.mxu0
      %v689 = vadd.f32 0.0, %v688
      %690 = vmatmul.f32.gmra.mxu0 %v651
      %v691 = vpop.f32.mrf.mxu0
      %v692 = vadd.f32 0.0, %v691
      %693 = vmatmul.f32.gmra.mxu0 %v654
      %v694 = vpop.f32.mrf.mxu0
      %v695 = vadd.f32 0.0, %v694
      %696 = vdwg.mxu0
      %v698 = vsel %vm631, %v621, 0
      %v701 = vsel %vm631, %v622, 0
      %v704 = vsel %vm631, %v623, 0
      %v707 = vsel %vm631, %v624, 0
      %v710 = vsel %vm631, %v625, 0
      %v713 = vsel %vm631, %v626, 0
      %v716 = vsel %vm631, %v627, 0
      %v719 = vsel %vm631, %v628, 0
      %721 = vmatpush.msra.mxu0 0.0
      %722 = vmatpush.msra.mxu0 0.0
      %723 = vmatpush.msra.mxu0 0.0
      %724 = vmatpush.msra.mxu0 0.0
      %725 = vmatpush.msra.mxu0 0.0
      %726 = vmatpush.msra.mxu0 0.0
      %727 = vmatpush.msra.mxu0 0.0
      %728 = vmatpush.msra.mxu0 0.0
      %729 = vmatpush.msra.mxu0 0.0
      %730 = vmatpush.msra.mxu0 0.0
      %731 = vmatpush.msra.mxu0 0.0
      %732 = vmatpush.msra.mxu0 0.0
      %733 = vmatpush.msra.mxu0 0.0
      %734 = vmatpush.msra.mxu0 0.0
      %735 = vmatpush.msra.mxu0 %v630
      %736 = vmatpush.msra.mxu0 %v629
      %737 = vmatmul.f32.gmra.mxu0 %v698
      %v738 = vpop.f32.mrf.mxu0
      %v739 = vadd.f32 0.0, %v738
      %740 = vmatmul.f32.gmra.mxu0 %v701
      %v741 = vpop.f32.mrf.mxu0
      %v742 = vadd.f32 0.0, %v741
      %743 = vmatmul.f32.gmra.mxu0 %v704
      %v744 = vpop.f32.mrf.mxu0
      %v745 = vadd.f32 0.0, %v744
      %746 = vmatmul.f32.gmra.mxu0 %v707
      %v747 = vpop.f32.mrf.mxu0
      %v748 = vadd.f32 0.0, %v747
      %749 = vmatmul.f32.gmra.mxu0 %v710
      %v750 = vpop.f32.mrf.mxu0
      %v751 = vadd.f32 0.0, %v750
      %752 = vmatmul.f32.gmra.mxu0 %v713
      %v753 = vpop.f32.mrf.mxu0
      %v754 = vadd.f32 0.0, %v753
      %755 = vmatmul.f32.gmra.mxu0 %v716
      %v756 = vpop.f32.mrf.mxu0
      %v757 = vadd.f32 0.0, %v756
      %758 = vmatmul.f32.gmra.mxu0 %v719
      %v759 = vpop.f32.mrf.mxu0
      %v760 = vadd.f32 0.0, %v759
      %761 = vdwg.mxu0
      %v762 = vld [vmem:[%s4] sm:$0xff]
      %v763 = vld [vmem:[%s4 + $0x8] sm:$0xff]
      %v764 = vld [vmem:[%s4 + $0x10] sm:$0xff]
      %v765 = vld [vmem:[%s4 + $0x18] sm:$0xff]
      %v766 = vld [vmem:[%s5] sm:$0xff]
      %v767 = vld [vmem:[%s5 + $0x8] sm:$0xff]
      %v768 = vld [vmem:[%s5 + $0x10] sm:$0xff]
      %v769 = vld [vmem:[%s5 + $0x18] sm:$0xff]
      %vm770 = vcmask 261120
      %v772 = vsel %vm770, %v739, 0
      %v775 = vsel %vm770, %v742, 0
      %v778 = vsel %vm770, %v745, 0
      %v781 = vsel %vm770, %v748, 0
      %v784 = vsel %vm770, %v751, 0
      %v787 = vsel %vm770, %v754, 0
      %v790 = vsel %vm770, %v757, 0
      %v793 = vsel %vm770, %v760, 0
      %795 = vmatpush.msra.mxu0 0.0
      %796 = vmatpush.msra.mxu0 0.0
      %797 = vmatpush.msra.mxu0 0.0
      %798 = vmatpush.msra.mxu0 0.0
      %799 = vmatpush.msra.mxu0 0.0
      %800 = vmatpush.msra.mxu0 0.0
      %801 = vmatpush.msra.mxu0 0.0
      %802 = vmatpush.msra.mxu0 0.0
      %803 = vmatpush.msra.mxu0 0.0
      %804 = vmatpush.msra.mxu0 0.0
      %805 = vmatpush.msra.mxu0 0.0
      %806 = vmatpush.msra.mxu0 0.0
      %807 = vmatpush.msra.mxu0 %v769
      %808 = vmatpush.msra.mxu0 %v768
      %809 = vmatpush.msra.mxu0 %v767
      %810 = vmatpush.msra.mxu0 %v766
      %811 = vmatmul.f32.gmra.mxu0 %v772
      %v812 = vpop.f32.mrf.mxu0
      %v813 = vadd.f32 0.0, %v812
      %814 = vmatmul.f32.gmra.mxu0 %v775
      %v815 = vpop.f32.mrf.mxu0
      %v816 = vadd.f32 0.0, %v815
      %817 = vmatmul.f32.gmra.mxu0 %v778
      %v818 = vpop.f32.mrf.mxu0
      %v819 = vadd.f32 0.0, %v818
      %820 = vmatmul.f32.gmra.mxu0 %v781
      %v821 = vpop.f32.mrf.mxu0
      %v822 = vadd.f32 0.0, %v821
      %823 = vmatmul.f32.gmra.mxu0 %v784
      %v824 = vpop.f32.mrf.mxu0
      %v825 = vadd.f32 0.0, %v824
      %826 = vmatmul.f32.gmra.mxu0 %v787
      %v827 = vpop.f32.mrf.mxu0
      %v828 = vadd.f32 0.0, %v827
      %829 = vmatmul.f32.gmra.mxu0 %v790
      %v830 = vpop.f32.mrf.mxu0
      %v831 = vadd.f32 0.0, %v830
      %832 = vmatmul.f32.gmra.mxu0 %v793
      %v833 = vpop.f32.mrf.mxu0
      %v834 = vadd.f32 0.0, %v833
      %835 = vdwg.mxu0
      %v837 = vsel %vm770, %v674, 0
      %v840 = vsel %vm770, %v677, 0
      %v843 = vsel %vm770, %v680, 0
      %v846 = vsel %vm770, %v683, 0
      %v849 = vsel %vm770, %v686, 0
      %v852 = vsel %vm770, %v689, 0
      %v855 = vsel %vm770, %v692, 0
      %v858 = vsel %vm770, %v695, 0
      %860 = vmatpush.msra.mxu0 0.0
      %861 = vmatpush.msra.mxu0 0.0
      %862 = vmatpush.msra.mxu0 0.0
      %863 = vmatpush.msra.mxu0 0.0
      %864 = vmatpush.msra.mxu0 0.0
      %865 = vmatpush.msra.mxu0 0.0
      %866 = vmatpush.msra.mxu0 0.0
      %867 = vmatpush.msra.mxu0 0.0
      %868 = vmatpush.msra.mxu0 0.0
      %869 = vmatpush.msra.mxu0 0.0
      %870 = vmatpush.msra.mxu0 0.0
      %871 = vmatpush.msra.mxu0 0.0
      %872 = vmatpush.msra.mxu0 %v765
      %873 = vmatpush.msra.mxu0 %v764
      %874 = vmatpush.msra.mxu0 %v763
      %875 = vmatpush.msra.mxu0 %v762
      %876 = vmatmul.f32.gmra.mxu0 %v837
      %v877 = vpop.f32.mrf.mxu0
      %v878 = vadd.f32 %v813, %v877
      %879 = vmatmul.f32.gmra.mxu0 %v840
      %v880 = vpop.f32.mrf.mxu0
      %v881 = vadd.f32 %v816, %v880
      %882 = vmatmul.f32.gmra.mxu0 %v843
      %v883 = vpop.f32.mrf.mxu0
      %v884 = vadd.f32 %v819, %v883
      %885 = vmatmul.f32.gmra.mxu0 %v846
      %v886 = vpop.f32.mrf.mxu0
      %v887 = vadd.f32 %v822, %v886
      %888 = vmatmul.f32.gmra.mxu0 %v849
      %v889 = vpop.f32.mrf.mxu0
      %v890 = vadd.f32 %v825, %v889
      %891 = vmatmul.f32.gmra.mxu0 %v852
      %v892 = vpop.f32.mrf.mxu0
      %v893 = vadd.f32 %v828, %v892
      %894 = vmatmul.f32.gmra.mxu0 %v855
      %v895 = vpop.f32.mrf.mxu0
      %v896 = vadd.f32 %v831, %v895
      %897 = vmatmul.f32.gmra.mxu0 %v858
      %v898 = vpop.f32.mrf.mxu0
      %v899 = vadd.f32 %v834, %v898
      %900 = vdwg.mxu0
      %v901 = vld [vmem:[%s507] sm:$0xff]
      %v902 = vld [vmem:[%s507 + $0x8] sm:$0xff]
      %v903 = vld [vmem:[%s507 + $0x10] sm:$0xff]
      %v904 = vld [vmem:[%s507 + $0x18] sm:$0xff]
      %v905 = vld [vmem:[%s507 + $0x20] sm:$0xff]
      %v906 = vld [vmem:[%s507 + $0x28] sm:$0xff]
      %v907 = vld [vmem:[%s507 + $0x30] sm:$0xff]
      %v908 = vld [vmem:[%s507 + $0x38] sm:$0xff]
      %v909 = vld [vmem:[%s6] sm:$0xff]
      %v910 = vld [vmem:[%s6 + $0x8] sm:$0xff]
      %v911 = vld [vmem:[%s6 + $0x10] sm:$0xff]
      %v912 = vld [vmem:[%s6 + $0x18] sm:$0xff]
      %v914 = vsel %vm770, %v901, 0
      %v917 = vsel %vm770, %v902, 0
      %v920 = vsel %vm770, %v903, 0
      %v923 = vsel %vm770, %v904, 0
      %v926 = vsel %vm770, %v905, 0
      %v929 = vsel %vm770, %v906, 0
      %v932 = vsel %vm770, %v907, 0
      %v935 = vsel %vm770, %v908, 0
      %937 = vmatpush.msra.mxu0 0.0
      %938 = vmatpush.msra.mxu0 0.0
      %939 = vmatpush.msra.mxu0 0.0
      %940 = vmatpush.msra.mxu0 0.0
      %941 = vmatpush.msra.mxu0 0.0
      %942 = vmatpush.msra.mxu0 0.0
      %943 = vmatpush.msra.mxu0 0.0
      %944 = vmatpush.msra.mxu0 0.0
      %945 = vmatpush.msra.mxu0 0.0
      %946 = vmatpush.msra.mxu0 0.0
      %947 = vmatpush.msra.mxu0 0.0
      %948 = vmatpush.msra.mxu0 0.0
      %949 = vmatpush.msra.mxu0 %v912
      %950 = vmatpush.msra.mxu0 %v911
      %951 = vmatpush.msra.mxu0 %v910
      %952 = vmatpush.msra.mxu0 %v909
      %953 = vmatmul.f32.gmra.mxu0 %v914
      %v954 = vpop.f32.mrf.mxu0
      %v955 = vadd.f32 0.0, %v954
      %956 = vmatmul.f32.gmra.mxu0 %v917
      %v957 = vpop.f32.mrf.mxu0
      %v958 = vadd.f32 0.0, %v957
      %959 = vmatmul.f32.gmra.mxu0 %v920
      %v960 = vpop.f32.mrf.mxu0
      %v961 = vadd.f32 0.0, %v960
      %962 = vmatmul.f32.gmra.mxu0 %v923
      %v963 = vpop.f32.mrf.mxu0
      %v964 = vadd.f32 0.0, %v963
      %965 = vmatmul.f32.gmra.mxu0 %v926
      %v966 = vpop.f32.mrf.mxu0
      %v967 = vadd.f32 0.0, %v966
      %968 = vmatmul.f32.gmra.mxu0 %v929
      %v969 = vpop.f32.mrf.mxu0
      %v970 = vadd.f32 0.0, %v969
      %971 = vmatmul.f32.gmra.mxu0 %v932
      %v972 = vpop.f32.mrf.mxu0
      %v973 = vadd.f32 0.0, %v972
      %974 = vmatmul.f32.gmra.mxu0 %v935
      %v975 = vpop.f32.mrf.mxu0
      %v976 = vadd.f32 0.0, %v975
      %977 = vdwg.mxu0
      %v978 = vadd.f32 %v878, %v955
      %v979 = vadd.f32 %v881, %v958
      %v980 = vadd.f32 %v884, %v961
      %v981 = vadd.f32 %v887, %v964
      %v982 = vadd.f32 %v890, %v967
      %v983 = vadd.f32 %v893, %v970
      %v984 = vadd.f32 %v896, %v973
      %v985 = vadd.f32 %v899, %v976
      %v986 = vld [vmem:[%s7] sm:$0x1]
      %v988 = vperm.slane %v986, 0
      %v990 = vadd.f32 %v978, %v988
      %v991 = vadd.f32 %v979, %v988
      %v992 = vadd.f32 %v980, %v988
      %v993 = vadd.f32 %v981, %v988
      %v994 = vadd.f32 %v982, %v988
      %v995 = vadd.f32 %v983, %v988
      %v996 = vadd.f32 %v984, %v988
      %v997 = vadd.f32 %v985, %v988
      %v998 = vxor.u32 %v990, 2147483648
      %v999 = vxor.u32 %v991, 2147483648
      %v1000 = vxor.u32 %v992, 2147483648
      %v1001 = vxor.u32 %v993, 2147483648
      %v1002 = vxor.u32 %v994, 2147483648
      %v1003 = vxor.u32 %v995, 2147483648
      %v1004 = vxor.u32 %v996, 2147483648
      %v1005 = vxor.u32 %v997, 2147483648
      %v1006 = vmul.f32 %v998, 1.442695
      %v1007 = vpow.pop %v1006
      %v1008 = vmul.f32 %v999, 1.442695
      %v1009 = vpow.pop %v1008
      %v1010 = vmul.f32 %v1000, 1.442695
      %v1011 = vpow.pop %v1010
      %v1012 = vmul.f32 %v1001, 1.442695
      %v1013 = vpow.pop %v1012
      %v1014 = vmul.f32 %v1002, 1.442695
      %v1015 = vpow.pop %v1014
      %v1016 = vmul.f32 %v1003, 1.442695
      %v1017 = vpow.pop %v1016
      %v1018 = vmul.f32 %v1004, 1.442695
      %v1019 = vpow.pop %v1018
      %v1020 = vmul.f32 %v1005, 1.442695
      %v1021 = vpow.pop %v1020
      %v1022 = vadd.f32 %v1007, 1.0
      %v1023 = vadd.f32 %v1009, 1.0
      %v1024 = vadd.f32 %v1011, 1.0
      %v1025 = vadd.f32 %v1013, 1.0
      %v1026 = vadd.f32 %v1015, 1.0
      %v1027 = vadd.f32 %v1017, 1.0
      %v1028 = vadd.f32 %v1019, 1.0
      %v1029 = vadd.f32 %v1021, 1.0
      %v1030 = vrcp.pop %v1022
      %v1031 = vmul.f32 %v1022, %v1030
      %v1032 = vsub.f32 1.0, %v1031
      %v1033 = vmul.f32 %v1030, %v1032
      %v1034 = vadd.f32 %v1030, %v1033
      %vm1035 = vweird.f32 %v1022
      %vm1036 = vweird.f32 %v1030
      %vm1037 = vmor %vm1035, %vm1036
      %v1038 = vsel %vm1037, %v1030, %v1034
      %v1039 = vand.u32 2147483647, %v1022
      %vm1040 = vcmp.eq.f32.partialorder %v1039, 8.507059e+37
      %v1041 = vand.u32 %v1022, 2147483648
      %v1042 = vor.u32 1.1754944e-38, %v1041
      %v1043 = vsel %vm1040, %v1042, %v1038
      %v1044 = vmul.f32 1.0, %v1043
      %v1045 = vrcp.pop %v1023
      %v1046 = vmul.f32 %v1023, %v1045
      %v1047 = vsub.f32 1.0, %v1046
      %v1048 = vmul.f32 %v1045, %v1047
      %v1049 = vadd.f32 %v1045, %v1048
      %vm1050 = vweird.f32 %v1023
      %vm1051 = vweird.f32 %v1045
      %vm1052 = vmor %vm1050, %vm1051
      %v1053 = vsel %vm1052, %v1045, %v1049
      %v1054 = vand.u32 2147483647, %v1023
      %vm1055 = vcmp.eq.f32.partialorder %v1054, 8.507059e+37
      %v1056 = vand.u32 %v1023, 2147483648
      %v1057 = vor.u32 1.1754944e-38, %v1056
      %v1058 = vsel %vm1055, %v1057, %v1053
      %v1059 = vmul.f32 1.0, %v1058
      %v1060 = vrcp.pop %v1024
      %v1061 = vmul.f32 %v1024, %v1060
      %v1062 = vsub.f32 1.0, %v1061
      %v1063 = vmul.f32 %v1060, %v1062
      %v1064 = vadd.f32 %v1060, %v1063
      %vm1065 = vweird.f32 %v1024
      %vm1066 = vweird.f32 %v1060
      %vm1067 = vmor %vm1065, %vm1066
      %v1068 = vsel %vm1067, %v1060, %v1064
      %v1069 = vand.u32 2147483647, %v1024
      %vm1070 = vcmp.eq.f32.partialorder %v1069, 8.507059e+37
      %v1071 = vand.u32 %v1024, 2147483648
      %v1072 = vor.u32 1.1754944e-38, %v1071
      %v1073 = vsel %vm1070, %v1072, %v1068
      %v1074 = vmul.f32 1.0, %v1073
      %v1075 = vrcp.pop %v1025
      %v1076 = vmul.f32 %v1025, %v1075
      %v1077 = vsub.f32 1.0, %v1076
      %v1078 = vmul.f32 %v1075, %v1077
      %v1079 = vadd.f32 %v1075, %v1078
      %vm1080 = vweird.f32 %v1025
      %vm1081 = vweird.f32 %v1075
      %vm1082 = vmor %vm1080, %vm1081
      %v1083 = vsel %vm1082, %v1075, %v1079
      %v1084 = vand.u32 2147483647, %v1025
      %vm1085 = vcmp.eq.f32.partialorder %v1084, 8.507059e+37
      %v1086 = vand.u32 %v1025, 2147483648
      %v1087 = vor.u32 1.1754944e-38, %v1086
      %v1088 = vsel %vm1085, %v1087, %v1083
      %v1089 = vmul.f32 1.0, %v1088
      %v1090 = vrcp.pop %v1026
      %v1091 = vmul.f32 %v1026, %v1090
      %v1092 = vsub.f32 1.0, %v1091
      %v1093 = vmul.f32 %v1090, %v1092
      %v1094 = vadd.f32 %v1090, %v1093
      %vm1095 = vweird.f32 %v1026
      %vm1096 = vweird.f32 %v1090
      %vm1097 = vmor %vm1095, %vm1096
      %v1098 = vsel %vm1097, %v1090, %v1094
      %v1099 = vand.u32 2147483647, %v1026
      %vm1100 = vcmp.eq.f32.partialorder %v1099, 8.507059e+37
      %v1101 = vand.u32 %v1026, 2147483648
      %v1102 = vor.u32 1.1754944e-38, %v1101
      %v1103 = vsel %vm1100, %v1102, %v1098
      %v1104 = vmul.f32 1.0, %v1103
      %v1105 = vrcp.pop %v1027
      %v1106 = vmul.f32 %v1027, %v1105
      %v1107 = vsub.f32 1.0, %v1106
      %v1108 = vmul.f32 %v1105, %v1107
      %v1109 = vadd.f32 %v1105, %v1108
      %vm1110 = vweird.f32 %v1027
      %vm1111 = vweird.f32 %v1105
      %vm1112 = vmor %vm1110, %vm1111
      %v1113 = vsel %vm1112, %v1105, %v1109
      %v1114 = vand.u32 2147483647, %v1027
      %vm1115 = vcmp.eq.f32.partialorder %v1114, 8.507059e+37
      %v1116 = vand.u32 %v1027, 2147483648
      %v1117 = vor.u32 1.1754944e-38, %v1116
      %v1118 = vsel %vm1115, %v1117, %v1113
      %v1119 = vmul.f32 1.0, %v1118
      %v1120 = vrcp.pop %v1028
      %v1121 = vmul.f32 %v1028, %v1120
      %v1122 = vsub.f32 1.0, %v1121
      %v1123 = vmul.f32 %v1120, %v1122
      %v1124 = vadd.f32 %v1120, %v1123
      %vm1125 = vweird.f32 %v1028
      %vm1126 = vweird.f32 %v1120
      %vm1127 = vmor %vm1125, %vm1126
      %v1128 = vsel %vm1127, %v1120, %v1124
      %v1129 = vand.u32 2147483647, %v1028
      %vm1130 = vcmp.eq.f32.partialorder %v1129, 8.507059e+37
      %v1131 = vand.u32 %v1028, 2147483648
      %v1132 = vor.u32 1.1754944e-38, %v1131
      %v1133 = vsel %vm1130, %v1132, %v1128
      %v1134 = vmul.f32 1.0, %v1133
      %v1135 = vrcp.pop %v1029
      %v1136 = vmul.f32 %v1029, %v1135
      %v1137 = vsub.f32 1.0, %v1136
      %v1138 = vmul.f32 %v1135, %v1137
      %v1139 = vadd.f32 %v1135, %v1138
      %vm1140 = vweird.f32 %v1029
      %vm1141 = vweird.f32 %v1135
      %vm1142 = vmor %vm1140, %vm1141
      %v1143 = vsel %vm1142, %v1135, %v1139
      %v1144 = vand.u32 2147483647, %v1029
      %vm1145 = vcmp.eq.f32.partialorder %v1144, 8.507059e+37
      %v1146 = vand.u32 %v1029, 2147483648
      %v1147 = vor.u32 1.1754944e-38, %v1146
      %v1148 = vsel %vm1145, %v1147, %v1143
      %v1149 = vmul.f32 1.0, %v1148
      %v1150 = vmul.f32 %v990, %v1044
      %v1151 = vmul.f32 %v991, %v1059
      %v1152 = vmul.f32 %v992, %v1074
      %v1153 = vmul.f32 %v993, %v1089
      %v1154 = vmul.f32 %v994, %v1104
      %v1155 = vmul.f32 %v995, %v1119
      %v1156 = vmul.f32 %v996, %v1134
      %v1157 = vmul.f32 %v997, %v1149
      %v1158 = vld [vmem:[%s8] sm:$0xff]
      %v1159 = vld [vmem:[%s8 + $0x8] sm:$0xff]
      %v1160 = vld [vmem:[%s8 + $0x10] sm:$0xff]
      %v1161 = vld [vmem:[%s8 + $0x18] sm:$0xff]
      %v1162 = vld [vmem:[%s9] sm:$0x1]
      %v1164 = vperm.slane %v1162, 0
      %v1167 = vsel %vm770, %v1150, 0
      %v1170 = vsel %vm770, %v1151, 0
      %v1173 = vsel %vm770, %v1152, 0
      %v1176 = vsel %vm770, %v1153, 0
      %v1179 = vsel %vm770, %v1154, 0
      %v1182 = vsel %vm770, %v1155, 0
      %v1185 = vsel %vm770, %v1156, 0
      %v1188 = vsel %vm770, %v1157, 0
      %1190 = vmatpush.msra.mxu0 0.0
      %1191 = vmatpush.msra.mxu0 0.0
      %1192 = vmatpush.msra.mxu0 0.0
      %1193 = vmatpush.msra.mxu0 0.0
      %1194 = vmatpush.msra.mxu0 0.0
      %1195 = vmatpush.msra.mxu0 0.0
      %1196 = vmatpush.msra.mxu0 0.0
      %1197 = vmatpush.msra.mxu0 0.0
      %1198 = vmatpush.msra.mxu0 0.0
      %1199 = vmatpush.msra.mxu0 0.0
      %1200 = vmatpush.msra.mxu0 0.0
      %1201 = vmatpush.msra.mxu0 0.0
      %1202 = vmatpush.msra.mxu0 %v1161
      %1203 = vmatpush.msra.mxu0 %v1160
      %1204 = vmatpush.msra.mxu0 %v1159
      %1205 = vmatpush.msra.mxu0 %v1158
      %1206 = vmatmul.f32.gmra.mxu0 %v1167
      %v1207 = vpop.f32.mrf.mxu0
      %v1208 = vadd.f32 %v1164, %v1207
      %1209 = vmatmul.f32.gmra.mxu0 %v1170
      %v1210 = vpop.f32.mrf.mxu0
      %v1211 = vadd.f32 %v1164, %v1210
      %1212 = vmatmul.f32.gmra.mxu0 %v1173
      %v1213 = vpop.f32.mrf.mxu0
      %v1214 = vadd.f32 %v1164, %v1213
      %1215 = vmatmul.f32.gmra.mxu0 %v1176
      %v1216 = vpop.f32.mrf.mxu0
      %v1217 = vadd.f32 %v1164, %v1216
      %1218 = vmatmul.f32.gmra.mxu0 %v1179
      %v1219 = vpop.f32.mrf.mxu0
      %v1220 = vadd.f32 %v1164, %v1219
      %1221 = vmatmul.f32.gmra.mxu0 %v1182
      %v1222 = vpop.f32.mrf.mxu0
      %v1223 = vadd.f32 %v1164, %v1222
      %1224 = vmatmul.f32.gmra.mxu0 %v1185
      %v1225 = vpop.f32.mrf.mxu0
      %v1226 = vadd.f32 %v1164, %v1225
      %1227 = vmatmul.f32.gmra.mxu0 %v1188
      %v1228 = vpop.f32.mrf.mxu0
      %v1229 = vadd.f32 %v1164, %v1228
      %1230 = vdwg.mxu0
      %v1231 = vxor.u32 %v1208, 2147483648
      %v1232 = vxor.u32 %v1211, 2147483648
      %v1233 = vxor.u32 %v1214, 2147483648
      %v1234 = vxor.u32 %v1217, 2147483648
      %v1235 = vxor.u32 %v1220, 2147483648
      %v1236 = vxor.u32 %v1223, 2147483648
      %v1237 = vxor.u32 %v1226, 2147483648
      %v1238 = vxor.u32 %v1229, 2147483648
      %v1239 = vmul.f32 %v1231, 1.442695
      %v1240 = vpow.pop %v1239
      %v1241 = vmul.f32 %v1232, 1.442695
      %v1242 = vpow.pop %v1241
      %v1243 = vmul.f32 %v1233, 1.442695
      %v1244 = vpow.pop %v1243
      %v1245 = vmul.f32 %v1234, 1.442695
      %v1246 = vpow.pop %v1245
      %v1247 = vmul.f32 %v1235, 1.442695
      %v1248 = vpow.pop %v1247
      %v1249 = vmul.f32 %v1236, 1.442695
      %v1250 = vpow.pop %v1249
      %v1251 = vmul.f32 %v1237, 1.442695
      %v1252 = vpow.pop %v1251
      %v1253 = vmul.f32 %v1238, 1.442695
      %v1254 = vpow.pop %v1253
      %v1255 = vadd.f32 %v1240, 1.0
      %v1256 = vadd.f32 %v1242, 1.0
      %v1257 = vadd.f32 %v1244, 1.0
      %v1258 = vadd.f32 %v1246, 1.0
      %v1259 = vadd.f32 %v1248, 1.0
      %v1260 = vadd.f32 %v1250, 1.0
      %v1261 = vadd.f32 %v1252, 1.0
      %v1262 = vadd.f32 %v1254, 1.0
      %v1263 = vrcp.pop %v1255
      %v1264 = vmul.f32 %v1255, %v1263
      %v1265 = vsub.f32 1.0, %v1264
      %v1266 = vmul.f32 %v1263, %v1265
      %v1267 = vadd.f32 %v1263, %v1266
      %vm1268 = vweird.f32 %v1255
      %vm1269 = vweird.f32 %v1263
      %vm1270 = vmor %vm1268, %vm1269
      %v1271 = vsel %vm1270, %v1263, %v1267
      %v1272 = vand.u32 2147483647, %v1255
      %vm1273 = vcmp.eq.f32.partialorder %v1272, 8.507059e+37
      %v1274 = vand.u32 %v1255, 2147483648
      %v1275 = vor.u32 1.1754944e-38, %v1274
      %v1276 = vsel %vm1273, %v1275, %v1271
      %v1277 = vmul.f32 1.0, %v1276
      %v1278 = vrcp.pop %v1256
      %v1279 = vmul.f32 %v1256, %v1278
      %v1280 = vsub.f32 1.0, %v1279
      %v1281 = vmul.f32 %v1278, %v1280
      %v1282 = vadd.f32 %v1278, %v1281
      %vm1283 = vweird.f32 %v1256
      %vm1284 = vweird.f32 %v1278
      %vm1285 = vmor %vm1283, %vm1284
      %v1286 = vsel %vm1285, %v1278, %v1282
      %v1287 = vand.u32 2147483647, %v1256
      %vm1288 = vcmp.eq.f32.partialorder %v1287, 8.507059e+37
      %v1289 = vand.u32 %v1256, 2147483648
      %v1290 = vor.u32 1.1754944e-38, %v1289
      %v1291 = vsel %vm1288, %v1290, %v1286
      %v1292 = vmul.f32 1.0, %v1291
      %v1293 = vrcp.pop %v1257
      %v1294 = vmul.f32 %v1257, %v1293
      %v1295 = vsub.f32 1.0, %v1294
      %v1296 = vmul.f32 %v1293, %v1295
      %v1297 = vadd.f32 %v1293, %v1296
      %vm1298 = vweird.f32 %v1257
      %vm1299 = vweird.f32 %v1293
      %vm1300 = vmor %vm1298, %vm1299
      %v1301 = vsel %vm1300, %v1293, %v1297
      %v1302 = vand.u32 2147483647, %v1257
      %vm1303 = vcmp.eq.f32.partialorder %v1302, 8.507059e+37
      %v1304 = vand.u32 %v1257, 2147483648
      %v1305 = vor.u32 1.1754944e-38, %v1304
      %v1306 = vsel %vm1303, %v1305, %v1301
      %v1307 = vmul.f32 1.0, %v1306
      %v1308 = vrcp.pop %v1258
      %v1309 = vmul.f32 %v1258, %v1308
      %v1310 = vsub.f32 1.0, %v1309
      %v1311 = vmul.f32 %v1308, %v1310
      %v1312 = vadd.f32 %v1308, %v1311
      %vm1313 = vweird.f32 %v1258
      %vm1314 = vweird.f32 %v1308
      %vm1315 = vmor %vm1313, %vm1314
      %v1316 = vsel %vm1315, %v1308, %v1312
      %v1317 = vand.u32 2147483647, %v1258
      %vm1318 = vcmp.eq.f32.partialorder %v1317, 8.507059e+37
      %v1319 = vand.u32 %v1258, 2147483648
      %v1320 = vor.u32 1.1754944e-38, %v1319
      %v1321 = vsel %vm1318, %v1320, %v1316
      %v1322 = vmul.f32 1.0, %v1321
      %v1323 = vrcp.pop %v1259
      %v1324 = vmul.f32 %v1259, %v1323
      %v1325 = vsub.f32 1.0, %v1324
      %v1326 = vmul.f32 %v1323, %v1325
      %v1327 = vadd.f32 %v1323, %v1326
      %vm1328 = vweird.f32 %v1259
      %vm1329 = vweird.f32 %v1323
      %vm1330 = vmor %vm1328, %vm1329
      %v1331 = vsel %vm1330, %v1323, %v1327
      %v1332 = vand.u32 2147483647, %v1259
      %vm1333 = vcmp.eq.f32.partialorder %v1332, 8.507059e+37
      %v1334 = vand.u32 %v1259, 2147483648
      %v1335 = vor.u32 1.1754944e-38, %v1334
      %v1336 = vsel %vm1333, %v1335, %v1331
      %v1337 = vmul.f32 1.0, %v1336
      %v1338 = vrcp.pop %v1260
      %v1339 = vmul.f32 %v1260, %v1338
      %v1340 = vsub.f32 1.0, %v1339
      %v1341 = vmul.f32 %v1338, %v1340
      %v1342 = vadd.f32 %v1338, %v1341
      %vm1343 = vweird.f32 %v1260
      %vm1344 = vweird.f32 %v1338
      %vm1345 = vmor %vm1343, %vm1344
      %v1346 = vsel %vm1345, %v1338, %v1342
      %v1347 = vand.u32 2147483647, %v1260
      %vm1348 = vcmp.eq.f32.partialorder %v1347, 8.507059e+37
      %v1349 = vand.u32 %v1260, 2147483648
      %v1350 = vor.u32 1.1754944e-38, %v1349
      %v1351 = vsel %vm1348, %v1350, %v1346
      %v1352 = vmul.f32 1.0, %v1351
      %v1353 = vrcp.pop %v1261
      %v1354 = vmul.f32 %v1261, %v1353
      %v1355 = vsub.f32 1.0, %v1354
      %v1356 = vmul.f32 %v1353, %v1355
      %v1357 = vadd.f32 %v1353, %v1356
      %vm1358 = vweird.f32 %v1261
      %vm1359 = vweird.f32 %v1353
      %vm1360 = vmor %vm1358, %vm1359
      %v1361 = vsel %vm1360, %v1353, %v1357
      %v1362 = vand.u32 2147483647, %v1261
      %vm1363 = vcmp.eq.f32.partialorder %v1362, 8.507059e+37
      %v1364 = vand.u32 %v1261, 2147483648
      %v1365 = vor.u32 1.1754944e-38, %v1364
      %v1366 = vsel %vm1363, %v1365, %v1361
      %v1367 = vmul.f32 1.0, %v1366
      %v1368 = vrcp.pop %v1262
      %v1369 = vmul.f32 %v1262, %v1368
      %v1370 = vsub.f32 1.0, %v1369
      %v1371 = vmul.f32 %v1368, %v1370
      %v1372 = vadd.f32 %v1368, %v1371
      %vm1373 = vweird.f32 %v1262
      %vm1374 = vweird.f32 %v1368
      %vm1375 = vmor %vm1373, %vm1374
      %v1376 = vsel %vm1375, %v1368, %v1372
      %v1377 = vand.u32 2147483647, %v1262
      %vm1378 = vcmp.eq.f32.partialorder %v1377, 8.507059e+37
      %v1379 = vand.u32 %v1262, 2147483648
      %v1380 = vor.u32 1.1754944e-38, %v1379
      %v1381 = vsel %vm1378, %v1380, %v1376
      %v1382 = vmul.f32 1.0, %v1381
      %v1383 = vmul.f32 %v1208, %v1277
      %v1384 = vmul.f32 %v1211, %v1292
      %v1385 = vmul.f32 %v1214, %v1307
      %v1386 = vmul.f32 %v1217, %v1322
      %v1387 = vmul.f32 %v1220, %v1337
      %v1388 = vmul.f32 %v1223, %v1352
      %v1389 = vmul.f32 %v1226, %v1367
      %v1390 = vmul.f32 %v1229, %v1382
      %v1391 = vld [vmem:[%s10] sm:$0xff]
      %v1392 = vld [vmem:[%s10 + $0x8] sm:$0xff]
      %v1393 = vld [vmem:[%s10 + $0x10] sm:$0xff]
      %v1394 = vld [vmem:[%s10 + $0x18] sm:$0xff]
      %v1395 = vld [vmem:[%s11] sm:$0x1]
      %v1397 = vperm.slane %v1395, 0
      %v1400 = vsel %vm770, %v1383, 0
      %v1403 = vsel %vm770, %v1384, 0
      %v1406 = vsel %vm770, %v1385, 0
      %v1409 = vsel %vm770, %v1386, 0
      %v1412 = vsel %vm770, %v1387, 0
      %v1415 = vsel %vm770, %v1388, 0
      %v1418 = vsel %vm770, %v1389, 0
      %v1421 = vsel %vm770, %v1390, 0
      %1423 = vmatpush.msra.mxu0 0.0
      %1424 = vmatpush.msra.mxu0 0.0
      %1425 = vmatpush.msra.mxu0 0.0
      %1426 = vmatpush.msra.mxu0 0.0
      %1427 = vmatpush.msra.mxu0 0.0
      %1428 = vmatpush.msra.mxu0 0.0
      %1429 = vmatpush.msra.mxu0 0.0
      %1430 = vmatpush.msra.mxu0 0.0
      %1431 = vmatpush.msra.mxu0 0.0
      %1432 = vmatpush.msra.mxu0 0.0
      %1433 = vmatpush.msra.mxu0 0.0
      %1434 = vmatpush.msra.mxu0 0.0
      %1435 = vmatpush.msra.mxu0 %v1394
      %1436 = vmatpush.msra.mxu0 %v1393
      %1437 = vmatpush.msra.mxu0 %v1392
      %1438 = vmatpush.msra.mxu0 %v1391
      %1439 = vmatmul.f32.gmra.mxu0 %v1400
      %v1440 = vpop.f32.mrf.mxu0
      %v1441 = vadd.f32 %v1397, %v1440
      %1442 = vmatmul.f32.gmra.mxu0 %v1403
      %v1443 = vpop.f32.mrf.mxu0
      %v1444 = vadd.f32 %v1397, %v1443
      %1445 = vmatmul.f32.gmra.mxu0 %v1406
      %v1446 = vpop.f32.mrf.mxu0
      %v1447 = vadd.f32 %v1397, %v1446
      %1448 = vmatmul.f32.gmra.mxu0 %v1409
      %v1449 = vpop.f32.mrf.mxu0
      %v1450 = vadd.f32 %v1397, %v1449
      %1451 = vmatmul.f32.gmra.mxu0 %v1412
      %v1452 = vpop.f32.mrf.mxu0
      %v1453 = vadd.f32 %v1397, %v1452
      %1454 = vmatmul.f32.gmra.mxu0 %v1415
      %v1455 = vpop.f32.mrf.mxu0
      %v1456 = vadd.f32 %v1397, %v1455
      %1457 = vmatmul.f32.gmra.mxu0 %v1418
      %v1458 = vpop.f32.mrf.mxu0
      %v1459 = vadd.f32 %v1397, %v1458
      %1460 = vmatmul.f32.gmra.mxu0 %v1421
      %v1461 = vpop.f32.mrf.mxu0
      %v1462 = vadd.f32 %v1397, %v1461
      %1463 = vdwg.mxu0
      %v1464 = vsel %vm770, %v1441, 0.0
      %1465 = vadd.xlane.f32.xlu0 %v1464
      %v1466 = vpop.xlane.xlu0 %1465
      %v1467 = vsel %vm770, %v1444, 0.0
      %1468 = vadd.xlane.f32.xlu0 %v1467
      %v1469 = vpop.xlane.xlu0 %1468
      %v1470 = vsel %vm770, %v1447, 0.0
      %1471 = vadd.xlane.f32.xlu0 %v1470
      %v1472 = vpop.xlane.xlu0 %1471
      %v1473 = vsel %vm770, %v1450, 0.0
      %1474 = vadd.xlane.f32.xlu0 %v1473
      %v1475 = vpop.xlane.xlu0 %1474
      %v1476 = vsel %vm770, %v1453, 0.0
      %1477 = vadd.xlane.f32.xlu0 %v1476
      %v1478 = vpop.xlane.xlu0 %1477
      %v1479 = vsel %vm770, %v1456, 0.0
      %1480 = vadd.xlane.f32.xlu0 %v1479
      %v1481 = vpop.xlane.xlu0 %1480
      %v1482 = vsel %vm770, %v1459, 0.0
      %1483 = vadd.xlane.f32.xlu0 %v1482
      %v1484 = vpop.xlane.xlu0 %1483
      %v1485 = vsel %vm770, %v1462, 0.0
      %1486 = vadd.xlane.f32.xlu0 %v1485
      %v1487 = vpop.xlane.xlu0 %1486
      %v1488 = vrcp.pop 32.0
      %v1489 = vmul.f32 32.0, %v1488
      %v1490 = vsub.f32 1.0, %v1489
      %v1491 = vmul.f32 %v1488, %v1490
      %v1492 = vadd.f32 %v1488, %v1491
      %vm1493 = vweird.f32 %v1488
      %v1494 = vsel %vm1493, %v1488, %v1492
      %v1495 = vmul.f32 %v1466, %v1494
      %v1496 = vmul.f32 %v1469, %v1494
      %v1497 = vmul.f32 %v1472, %v1494
      %v1498 = vmul.f32 %v1475, %v1494
      %v1499 = vmul.f32 %v1478, %v1494
      %v1500 = vmul.f32 %v1481, %v1494
      %v1501 = vmul.f32 %v1484, %v1494
      %v1502 = vmul.f32 %v1487, %v1494
      %v1503 = vsub.f32 %v1441, %v1495
      %v1504 = vsub.f32 %v1444, %v1496
      %v1505 = vsub.f32 %v1447, %v1497
      %v1506 = vsub.f32 %v1450, %v1498
      %v1507 = vsub.f32 %v1453, %v1499
      %v1508 = vsub.f32 %v1456, %v1500
      %v1509 = vsub.f32 %v1459, %v1501
      %v1510 = vsub.f32 %v1462, %v1502
      %v1511 = vmul.f32 %v1503, %v1503
      %v1512 = vmul.f32 %v1504, %v1504
      %v1513 = vmul.f32 %v1505, %v1505
      %v1514 = vmul.f32 %v1506, %v1506
      %v1515 = vmul.f32 %v1507, %v1507
      %v1516 = vmul.f32 %v1508, %v1508
      %v1517 = vmul.f32 %v1509, %v1509
      %v1518 = vmul.f32 %v1510, %v1510
      %v1519 = vsel %vm770, %v1511, 0.0
      %1520 = vadd.xlane.f32.xlu0 %v1519
      %v1521 = vpop.xlane.xlu0 %1520
      %v1522 = vsel %vm770, %v1512, 0.0
      %1523 = vadd.xlane.f32.xlu0 %v1522
      %v1524 = vpop.xlane.xlu0 %1523
      %v1525 = vsel %vm770, %v1513, 0.0
      %1526 = vadd.xlane.f32.xlu0 %v1525
      %v1527 = vpop.xlane.xlu0 %1526
      %v1528 = vsel %vm770, %v1514, 0.0
      %1529 = vadd.xlane.f32.xlu0 %v1528
      %v1530 = vpop.xlane.xlu0 %1529
      %v1531 = vsel %vm770, %v1515, 0.0
      %1532 = vadd.xlane.f32.xlu0 %v1531
      %v1533 = vpop.xlane.xlu0 %1532
      %v1534 = vsel %vm770, %v1516, 0.0
      %1535 = vadd.xlane.f32.xlu0 %v1534
      %v1536 = vpop.xlane.xlu0 %1535
      %v1537 = vsel %vm770, %v1517, 0.0
      %1538 = vadd.xlane.f32.xlu0 %v1537
      %v1539 = vpop.xlane.xlu0 %1538
      %v1540 = vsel %vm770, %v1518, 0.0
      %1541 = vadd.xlane.f32.xlu0 %v1540
      %v1542 = vpop.xlane.xlu0 %1541
      %v1543 = vmul.f32 %v1521, %v1494
      %v1544 = vmul.f32 %v1524, %v1494
      %v1545 = vmul.f32 %v1527, %v1494
      %v1546 = vmul.f32 %v1530, %v1494
      %v1547 = vmul.f32 %v1533, %v1494
      %v1548 = vmul.f32 %v1536, %v1494
      %v1549 = vmul.f32 %v1539, %v1494
      %v1550 = vmul.f32 %v1542, %v1494
      %v1551 = vadd.f32 %v1543, 1e-05
      %v1552 = vadd.f32 %v1544, 1e-05
      %v1553 = vadd.f32 %v1545, 1e-05
      %v1554 = vadd.f32 %v1546, 1e-05
      %v1555 = vadd.f32 %v1547, 1e-05
      %v1556 = vadd.f32 %v1548, 1e-05
      %v1557 = vadd.f32 %v1549, 1e-05
      %v1558 = vadd.f32 %v1550, 1e-05
      %v1559 = vrsqrt.pop %v1551
      %v1560 = vmul.f32 %v1559, %v1551
      %v1561 = vmul.f32 %v1560, %v1559
      %v1562 = vmul.f32 0.5, %v1561
      %v1563 = vsub.f32 1.5, %v1562
      %v1564 = vmul.f32 %v1559, %v1563
      %vm1565 = vweird.f32 %v1551
      %vm1566 = vweird.f32 %v1559
      %vm1567 = vmor %vm1565, %vm1566
      %v1568 = vsel %vm1567, %v1559, %v1564
      %v1569 = vrsqrt.pop %v1552
      %v1570 = vmul.f32 %v1569, %v1552
      %v1571 = vmul.f32 %v1570, %v1569
      %v1572 = vmul.f32 0.5, %v1571
      %v1573 = vsub.f32 1.5, %v1572
      %v1574 = vmul.f32 %v1569, %v1573
      %vm1575 = vweird.f32 %v1552
      %vm1576 = vweird.f32 %v1569
      %vm1577 = vmor %vm1575, %vm1576
      %v1578 = vsel %vm1577, %v1569, %v1574
      %v1579 = vrsqrt.pop %v1553
      %v1580 = vmul.f32 %v1579, %v1553
      %v1581 = vmul.f32 %v1580, %v1579
      %v1582 = vmul.f32 0.5, %v1581
      %v1583 = vsub.f32 1.5, %v1582
      %v1584 = vmul.f32 %v1579, %v1583
      %vm1585 = vweird.f32 %v1553
      %vm1586 = vweird.f32 %v1579
      %vm1587 = vmor %vm1585, %vm1586
      %v1588 = vsel %vm1587, %v1579, %v1584
      %v1589 = vrsqrt.pop %v1554
      %v1590 = vmul.f32 %v1589, %v1554
      %v1591 = vmul.f32 %v1590, %v1589
      %v1592 = vmul.f32 0.5, %v1591
      %v1593 = vsub.f32 1.5, %v1592
      %v1594 = vmul.f32 %v1589, %v1593
      %vm1595 = vweird.f32 %v1554
      %vm1596 = vweird.f32 %v1589
      %vm1597 = vmor %vm1595, %vm1596
      %v1598 = vsel %vm1597, %v1589, %v1594
      %v1599 = vrsqrt.pop %v1555
      %v1600 = vmul.f32 %v1599, %v1555
      %v1601 = vmul.f32 %v1600, %v1599
      %v1602 = vmul.f32 0.5, %v1601
      %v1603 = vsub.f32 1.5, %v1602
      %v1604 = vmul.f32 %v1599, %v1603
      %vm1605 = vweird.f32 %v1555
      %vm1606 = vweird.f32 %v1599
      %vm1607 = vmor %vm1605, %vm1606
      %v1608 = vsel %vm1607, %v1599, %v1604
      %v1609 = vrsqrt.pop %v1556
      %v1610 = vmul.f32 %v1609, %v1556
      %v1611 = vmul.f32 %v1610, %v1609
      %v1612 = vmul.f32 0.5, %v1611
      %v1613 = vsub.f32 1.5, %v1612
      %v1614 = vmul.f32 %v1609, %v1613
      %vm1615 = vweird.f32 %v1556
      %vm1616 = vweird.f32 %v1609
      %vm1617 = vmor %vm1615, %vm1616
      %v1618 = vsel %vm1617, %v1609, %v1614
      %v1619 = vrsqrt.pop %v1557
      %v1620 = vmul.f32 %v1619, %v1557
      %v1621 = vmul.f32 %v1620, %v1619
      %v1622 = vmul.f32 0.5, %v1621
      %v1623 = vsub.f32 1.5, %v1622
      %v1624 = vmul.f32 %v1619, %v1623
      %vm1625 = vweird.f32 %v1557
      %vm1626 = vweird.f32 %v1619
      %vm1627 = vmor %vm1625, %vm1626
      %v1628 = vsel %vm1627, %v1619, %v1624
      %v1629 = vrsqrt.pop %v1558
      %v1630 = vmul.f32 %v1629, %v1558
      %v1631 = vmul.f32 %v1630, %v1629
      %v1632 = vmul.f32 0.5, %v1631
      %v1633 = vsub.f32 1.5, %v1632
      %v1634 = vmul.f32 %v1629, %v1633
      %vm1635 = vweird.f32 %v1558
      %vm1636 = vweird.f32 %v1629
      %vm1637 = vmor %vm1635, %vm1636
      %v1638 = vsel %vm1637, %v1629, %v1634
      %v1639 = vmul.f32 %v1503, %v1568
      %v1640 = vmul.f32 %v1504, %v1578
      %v1641 = vmul.f32 %v1505, %v1588
      %v1642 = vmul.f32 %v1506, %v1598
      %v1643 = vmul.f32 %v1507, %v1608
      %v1644 = vmul.f32 %v1508, %v1618
      %v1645 = vmul.f32 %v1509, %v1628
      %v1646 = vmul.f32 %v1510, %v1638
      %v1647 = vld [vmem:[%s12] sm:$0x1]
      %v1649 = vperm.slane %v1647, 0
      %v1651 = vmul.f32 %v1639, %v1649
      %v1652 = vmul.f32 %v1640, %v1649
      %v1653 = vmul.f32 %v1641, %v1649
      %v1654 = vmul.f32 %v1642, %v1649
      %v1655 = vmul.f32 %v1643, %v1649
      %v1656 = vmul.f32 %v1644, %v1649
      %v1657 = vmul.f32 %v1645, %v1649
      %v1658 = vmul.f32 %v1646, %v1649
      %v1659 = vld [vmem:[%s13] sm:$0x1]
      %v1661 = vperm.slane %v1659, 0
      %v1663 = vadd.f32 %v1651, %v1661
      %v1664 = vadd.f32 %v1652, %v1661
      %v1665 = vadd.f32 %v1653, %v1661
      %v1666 = vadd.f32 %v1654, %v1661
      %v1667 = vadd.f32 %v1655, %v1661
      %v1668 = vadd.f32 %v1656, %v1661
      %v1669 = vadd.f32 %v1657, %v1661
      %v1670 = vadd.f32 %v1658, %v1661
      %v1671 = vadd.f32 %v901, %v1663
      %v1672 = vadd.f32 %v902, %v1664
      %v1673 = vadd.f32 %v903, %v1665
      %v1674 = vadd.f32 %v904, %v1666
      %v1675 = vadd.f32 %v905, %v1667
      %v1676 = vadd.f32 %v906, %v1668
      %v1677 = vadd.f32 %v907, %v1669
      %v1678 = vadd.f32 %v908, %v1670
      %1679 = vst.msk [vmem:[%s513] sm:$0xff] %vm770, %v1671
      %1680 = vst.msk [vmem:[%s513 + $0x8] sm:$0xff] %vm770, %v1672
      %1681 = vst.msk [vmem:[%s513 + $0x10] sm:$0xff] %vm770, %v1673
      %1682 = vst.msk [vmem:[%s513 + $0x18] sm:$0xff] %vm770, %v1674
      %1683 = vst.msk [vmem:[%s513 + $0x20] sm:$0xff] %vm770, %v1675
      %1684 = vst.msk [vmem:[%s513 + $0x28] sm:$0xff] %vm770, %v1676
      %1685 = vst.msk [vmem:[%s513 + $0x30] sm:$0xff] %vm770, %v1677
      %1686 = vst.msk [vmem:[%s513 + $0x38] sm:$0xff] %vm770, %v1678
      %s1687 = smul.u32 8, %s25
      %p1688 = scmp.lt.s32.totalorder %s1687, 31
      %s1689 = scalar_select %p1688, %s1687, 31
      %s1690 = smul.addr %s1689, 8
      %s1691 = scalar_lea.vmem %s14, %s1690
      // Predicated region
      $region77: #{tpu_custom_call.1} parent=75 // pred_check
        %p1692 = pneg %p352
      $region78: #{tpu_custom_call.1} parent=75 // pred_check_branch
        %1694 = sbr.rel (%p1692) target = $region80
      $region79: #{tpu_custom_call.1} parent=75 // pred_region
        %s1695 = smul.u32 8, %s25
      $region80: #{tpu_custom_call.1} parent=75 // pred_fallthru
        _
    $region76: #{tpu_custom_call.1} parent=5 // pred_fallthru
      _
    %p1696 = scmp.le.s32.totalorder 2, %s20
    // Predicated region
    $region81: #{tpu_custom_call.1} parent=5 // pred_check
      %p1697 = pneg %p1696
    $region82: #{tpu_custom_call.1} parent=5 // pred_check_branch
      %1699 = sbr.rel (%p1697) target = $region84
    $region83: #{tpu_custom_call.1} parent=5 // pred_region
      %s1700 = ssub.s32 %s20, 2
      // Predicated region
      $region85: #{tpu_custom_call.1} parent=83 // pred_check
        %p1701 = pneg %p358
      $region86: #{tpu_custom_call.1} parent=83 // pred_check_branch
        %1703 = sbr.rel (%p1701) target = $region88
      $region87: #{tpu_custom_call.1} parent=83 // pred_region
        %s1704 = smul.u32 8, %s26
        %p1705 = scmp.lt.s32.totalorder %s1704, 31
        %s1706 = scalar_select %p1705, %s1704, 31
        %s1707 = smul.addr %s1706, 8
        %s1708 = scalar_lea.vmem %s14, %s1707
      $region88: #{tpu_custom_call.1} parent=83 // pred_fallthru
        _
    $region84: #{tpu_custom_call.1} parent=5 // pred_fallthru
      _
  $region6: #{tpu_custom_call.1} parent=0 // loop_footer
    %s24 = sadd.s32 1, %s20
  $region7: #{tpu_custom_call.1} parent=0 // loop_footer_branch
    %19 = sbr.rel target = $region3
  $region8: #{tpu_custom_call.1} parent=0 // loop_exit
    _

// kernel: tpu_custom_call.1
$region0: #{tpu_custom_call.1}
  #allocation0 [shape = 'u32[]', space=smem, size = 0x4, offset = 0x4, fixed_abs, tag = 'smem constant byte address 0x4 - core index']
  #allocation1 [shape = 'u32[72,128]{1,0:T(1,128)}', space=vmem, size = 0x9000, scoped, tag = 'internal scratch']
  %s0 = inlined_call_operand.vmem [shape: s32[256,1], index: 0, kind: input, shape index: {}]
  %s1 = inlined_call_operand.vmem [shape: s32[256,1], index: 1, kind: input, shape index: {}]
  %s2 = inlined_call_operand.vmem [shape: f32[256,32], index: 2, kind: input, shape index: {}]
  %s3 = inlined_call_operand.vmem [shape: f32[16,32], index: 3, kind: input, shape index: {}]
  %s4 = inlined_call_operand.vmem [shape: f32[32,32], index: 4, kind: input, shape index: {}]
  %s5 = inlined_call_operand.vmem [shape: f32[32,32], index: 5, kind: input, shape index: {}]
  %s6 = inlined_call_operand.vmem [shape: f32[32,32], index: 6, kind: input, shape index: {}]
  %s7 = inlined_call_operand.vmem [shape: f32[1,32], index: 7, kind: input, shape index: {}]
  %s8 = inlined_call_operand.vmem [shape: f32[32,32], index: 8, kind: input, shape index: {}]
  %s9 = inlined_call_operand.vmem [shape: f32[1,32], index: 9, kind: input, shape index: {}]
  %s10 = inlined_call_operand.vmem [shape: f32[32,32], index: 10, kind: input, shape index: {}]
  %s11 = inlined_call_operand.vmem [shape: f32[1,32], index: 11, kind: input, shape index: {}]
  %s12 = inlined_call_operand.vmem [shape: f32[1,32], index: 12, kind: input, shape index: {}]
  %s13 = inlined_call_operand.vmem [shape: f32[1,32], index: 13, kind: input, shape index: {}]
  %s14 = inlined_call_operand.vmem [shape: f32[256,32], index: 14, kind: output, shape index: {}]
  %s15 = sld [smem:[#allocation0]]
  $region89: #{tpu_custom_call.1} parent=0
    _
  %s17 = ssub.s32 1, %s15
  %s18 = scalar_select 0, %s17, %s15
  loop: start=0, step=1, limit=6
  $region2: #{tpu_custom_call.1} parent=0 // loop_pre_header
    _
  $region3: #{tpu_custom_call.1} parent=0 // loop_header
    %s20 = sphi 0, %s24
    %p21 = scmp.ge.s32.totalorder %s20, 6
    %s30 = sphi 0, %s32
    %s33 = sphi 0, %s30
    %s34 = sphi 0, %s33
    %s50 = sphi 0, %s34
    %s56 = sphi 0, %s58
    %s59 = sphi 0, %s56
    %s60 = sphi 0, %s59
    %s76 = sphi 0, %s60
    %s82 = sphi 0, %s84
    %s85 = sphi 0, %s82
    %s86 = sphi 0, %s85
    %s102 = sphi 0, %s86
    %s106 = sphi 0, %s106
    %s108 = sphi 0, %s106
    %s109 = sphi 0, %s108
    %s123 = sphi 0, %s109
    %s127 = sphi 0, %s127
    %s129 = sphi 0, %s127
    %s130 = sphi 0, %s129
    %s144 = sphi 0, %s130
    %s148 = sphi 0, %s148
    %s150 = sphi 0, %s148
    %s151 = sphi 0, %s150
    %s165 = sphi 0, %s151
    %s169 = sphi 0, %s169
    %s171 = sphi 0, %s169
    %s172 = sphi 0, %s171
    %s186 = sphi 0, %s172
    %s190 = sphi 0, %s190
    %s192 = sphi 0, %s190
    %s193 = sphi 0, %s192
    %s207 = sphi 0, %s193
    %s211 = sphi 0, %s211
    %s213 = sphi 0, %s211
    %s214 = sphi 0, %s213
    %s228 = sphi 0, %s214
    %s232 = sphi 0, %s232
    %s234 = sphi 0, %s232
    %s235 = sphi 0, %s234
    %s249 = sphi 0, %s235
    %s253 = sphi 0, %s253
    %s255 = sphi 0, %s253
    %s256 = sphi 0, %s255
    %s270 = sphi 0, %s256
    %s274 = sphi 0, %s274
    %s276 = sphi 0, %s274
    %s277 = sphi 0, %s276
    %s291 = sphi 0, %s277
    %s295 = sphi 0, %s295
    %s297 = sphi 0, %s295
    %s298 = sphi 0, %s297
    %s312 = sphi 0, %s298
    %s316 = sphi 0, %s316
    %s318 = sphi 0, %s316
    %s319 = sphi 0, %s318
    %s333 = sphi 0, %s319
    %s339 = sphi 0, %s341
    %s342 = sphi 0, %s339
    %s343 = sphi 0, %s342
    %s359 = sphi 0, %s343
  $region4: #{tpu_custom_call.1} parent=0 // loop_header_branch
    %23 = sbr.rel (%p21) target = $region8
  $region5: #{tpu_custom_call.1} parent=0 // loop_body
    %s25 = ssub.s32 %s20, 1
    %s26 = ssub.s32 %s20, 2
    %s27 = sadd.s32 %s20, 1
    %s28 = ssub.s32 %s20, %s27
    %p29 = scmp.eq.s32.totalorder %s28, 0
    %s31 = sadd.s32 %s30, 1
    %s32 = scalar_select %p29, %s30, %s31
    %p35 = pneg %p29
    %p36 = scmp.eq.s32.totalorder %s20, 3
    %p37 = por %p35, %p36
    %p38 = scmp.ne.s32.totalorder %s30, %s33
    %p39 = scmp.eq.s32.totalorder %s20, 0
    %p40 = por %p38, %p39
    %p41 = scmp.ne.s32.totalorder %s30, %s33
    %p42 = scmp.eq.s32.totalorder %s25, 3
    %p43 = por %p41, %p42
    %p44 = scmp.ne.s32.totalorder %s33, %s34
    %p45 = scmp.eq.s32.totalorder %s25, 0
    %p46 = por %p44, %p45
    %p47 = scmp.ne.s32.totalorder %s33, %s34
    %p48 = scmp.eq.s32.totalorder %s26, 3
    %p49 = por %p47, %p48
    %p51 = scmp.ne.s32.totalorder %s34, %s50
    %p52 = scmp.eq.s32.totalorder %s26, 0
    %p53 = por %p51, %p52
    %s54 = ssub.s32 %s20, %s27
    %p55 = scmp.eq.s32.totalorder %s54, 0
    %s57 = sadd.s32 %s56, 1
    %s58 = scalar_select %p55, %s56, %s57
    %p61 = pneg %p55
    %p62 = scmp.eq.s32.totalorder %s20, 3
    %p63 = por %p61, %p62
    %p64 = scmp.ne.s32.totalorder %s56, %s59
    %p65 = scmp.eq.s32.totalorder %s20, 0
    %p66 = por %p64, %p65
    %p67 = scmp.ne.s32.totalorder %s56, %s59
    %p68 = scmp.eq.s32.totalorder %s25, 3
    %p69 = por %p67, %p68
    %p70 = scmp.ne.s32.totalorder %s59, %s60
    %p71 = scmp.eq.s32.totalorder %s25, 0
    %p72 = por %p70, %p71
    %p73 = scmp.ne.s32.totalorder %s59, %s60
    %p74 = scmp.eq.s32.totalorder %s26, 3
    %p75 = por %p73, %p74
    %p77 = scmp.ne.s32.totalorder %s60, %s76
    %p78 = scmp.eq.s32.totalorder %s26, 0
    %p79 = por %p77, %p78
    %s80 = ssub.s32 %s20, %s27
    %p81 = scmp.eq.s32.totalorder %s80, 0
    %s83 = sadd.s32 %s82, 1
    %s84 = scalar_select %p81, %s82, %s83
    %p87 = pneg %p81
    %p88 = scmp.eq.s32.totalorder %s20, 3
    %p89 = por %p87, %p88
    %p90 = scmp.ne.s32.totalorder %s82, %s85
    %p91 = scmp.eq.s32.totalorder %s20, 0
    %p92 = por %p90, %p91
    %p93 = scmp.ne.s32.totalorder %s82, %s85
    %p94 = scmp.eq.s32.totalorder %s25, 3
    %p95 = por %p93, %p94
    %p96 = scmp.ne.s32.totalorder %s85, %s86
    %p97 = scmp.eq.s32.totalorder %s25, 0
    %p98 = por %p96, %p97
    %p99 = scmp.ne.s32.totalorder %s85, %s86
    %p100 = scmp.eq.s32.totalorder %s26, 3
    %p101 = por %p99, %p100
    %p103 = scmp.ne.s32.totalorder %s86, %s102
    %p104 = scmp.eq.s32.totalorder %s26, 0
    %p105 = por %p103, %p104
    %s107 = sadd.s32 %s106, 1
    %p110 = scmp.eq.s32.totalorder %s20, 3
    %p111 = scmp.ne.s32.totalorder %s106, %s108
    %p112 = scmp.eq.s32.totalorder %s20, 0
    %p113 = por %p111, %p112
    %p114 = scmp.ne.s32.totalorder %s106, %s108
    %p115 = scmp.eq.s32.totalorder %s25, 3
    %p116 = por %p114, %p115
    %p117 = scmp.ne.s32.totalorder %s108, %s109
    %p118 = scmp.eq.s32.totalorder %s25, 0
    %p119 = por %p117, %p118
    %p120 = scmp.ne.s32.totalorder %s108, %s109
    %p121 = scmp.eq.s32.totalorder %s26, 3
    %p122 = por %p120, %p121
    %p124 = scmp.ne.s32.totalorder %s109, %s123
    %p125 = scmp.eq.s32.totalorder %s26, 0
    %p126 = por %p124, %p125
    %s128 = sadd.s32 %s127, 1
    %p131 = scmp.eq.s32.totalorder %s20, 3
    %p132 = scmp.ne.s32.totalorder %s127, %s129
    %p133 = scmp.eq.s32.totalorder %s20, 0
    %p134 = por %p132, %p133
    %p135 = scmp.ne.s32.totalorder %s127, %s129
    %p136 = scmp.eq.s32.totalorder %s25, 3
    %p137 = por %p135, %p136
    %p138 = scmp.ne.s32.totalorder %s129, %s130
    %p139 = scmp.eq.s32.totalorder %s25, 0
    %p140 = por %p138, %p139
    %p141 = scmp.ne.s32.totalorder %s129, %s130
    %p142 = scmp.eq.s32.totalorder %s26, 3
    %p143 = por %p141, %p142
    %p145 = scmp.ne.s32.totalorder %s130, %s144
    %p146 = scmp.eq.s32.totalorder %s26, 0
    %p147 = por %p145, %p146
    %s149 = sadd.s32 %s148, 1
    %p152 = scmp.eq.s32.totalorder %s20, 3
    %p153 = scmp.ne.s32.totalorder %s148, %s150
    %p154 = scmp.eq.s32.totalorder %s20, 0
    %p155 = por %p153, %p154
    %p156 = scmp.ne.s32.totalorder %s148, %s150
    %p157 = scmp.eq.s32.totalorder %s25, 3
    %p158 = por %p156, %p157
    %p159 = scmp.ne.s32.totalorder %s150, %s151
    %p160 = scmp.eq.s32.totalorder %s25, 0
    %p161 = por %p159, %p160
    %p162 = scmp.ne.s32.totalorder %s150, %s151
    %p163 = scmp.eq.s32.totalorder %s26, 3
    %p164 = por %p162, %p163
    %p166 = scmp.ne.s32.totalorder %s151, %s165
    %p167 = scmp.eq.s32.totalorder %s26, 0
    %p168 = por %p166, %p167
    %s170 = sadd.s32 %s169, 1
    %p173 = scmp.eq.s32.totalorder %s20, 3
    %p174 = scmp.ne.s32.totalorder %s169, %s171
    %p175 = scmp.eq.s32.totalorder %s20, 0
    %p176 = por %p174, %p175
    %p177 = scmp.ne.s32.totalorder %s169, %s171
    %p178 = scmp.eq.s32.totalorder %s25, 3
    %p179 = por %p177, %p178
    %p180 = scmp.ne.s32.totalorder %s171, %s172
    %p181 = scmp.eq.s32.totalorder %s25, 0
    %p182 = por %p180, %p181
    %p183 = scmp.ne.s32.totalorder %s171, %s172
    %p184 = scmp.eq.s32.totalorder %s26, 3
    %p185 = por %p183, %p184
    %p187 = scmp.ne.s32.totalorder %s172, %s186
    %p188 = scmp.eq.s32.totalorder %s26, 0
    %p189 = por %p187, %p188
    %s191 = sadd.s32 %s190, 1
    %p194 = scmp.eq.s32.totalorder %s20, 3
    %p195 = scmp.ne.s32.totalorder %s190, %s192
    %p196 = scmp.eq.s32.totalorder %s20, 0
    %p197 = por %p195, %p196
    %p198 = scmp.ne.s32.totalorder %s190, %s192
    %p199 = scmp.eq.s32.totalorder %s25, 3
    %p200 = por %p198, %p199
    %p201 = scmp.ne.s32.totalorder %s192, %s193
    %p202 = scmp.eq.s32.totalorder %s25, 0
    %p203 = por %p201, %p202
    %p204 = scmp.ne.s32.totalorder %s192, %s193
    %p205 = scmp.eq.s32.totalorder %s26, 3
    %p206 = por %p204, %p205
    %p208 = scmp.ne.s32.totalorder %s193, %s207
    %p209 = scmp.eq.s32.totalorder %s26, 0
    %p210 = por %p208, %p209
    %s212 = sadd.s32 %s211, 1
    %p215 = scmp.eq.s32.totalorder %s20, 3
    %p216 = scmp.ne.s32.totalorder %s211, %s213
    %p217 = scmp.eq.s32.totalorder %s20, 0
    %p218 = por %p216, %p217
    %p219 = scmp.ne.s32.totalorder %s211, %s213
    %p220 = scmp.eq.s32.totalorder %s25, 3
    %p221 = por %p219, %p220
    %p222 = scmp.ne.s32.totalorder %s213, %s214
    %p223 = scmp.eq.s32.totalorder %s25, 0
    %p224 = por %p222, %p223
    %p225 = scmp.ne.s32.totalorder %s213, %s214
    %p226 = scmp.eq.s32.totalorder %s26, 3
    %p227 = por %p225, %p226
    %p229 = scmp.ne.s32.totalorder %s214, %s228
    %p230 = scmp.eq.s32.totalorder %s26, 0
    %p231 = por %p229, %p230
    %s233 = sadd.s32 %s232, 1
    %p236 = scmp.eq.s32.totalorder %s20, 3
    %p237 = scmp.ne.s32.totalorder %s232, %s234
    %p238 = scmp.eq.s32.totalorder %s20, 0
    %p239 = por %p237, %p238
    %p240 = scmp.ne.s32.totalorder %s232, %s234
    %p241 = scmp.eq.s32.totalorder %s25, 3
    %p242 = por %p240, %p241
    %p243 = scmp.ne.s32.totalorder %s234, %s235
    %p244 = scmp.eq.s32.totalorder %s25, 0
    %p245 = por %p243, %p244
    %p246 = scmp.ne.s32.totalorder %s234, %s235
    %p247 = scmp.eq.s32.totalorder %s26, 3
    %p248 = por %p246, %p247
    %p250 = scmp.ne.s32.totalorder %s235, %s249
    %p251 = scmp.eq.s32.totalorder %s26, 0
    %p252 = por %p250, %p251
    %s254 = sadd.s32 %s253, 1
    %p257 = scmp.eq.s32.totalorder %s20, 3
    %p258 = scmp.ne.s32.totalorder %s253, %s255
    %p259 = scmp.eq.s32.totalorder %s20, 0
    %p260 = por %p258, %p259
    %p261 = scmp.ne.s32.totalorder %s253, %s255
    %p262 = scmp.eq.s32.totalorder %s25, 3
    %p263 = por %p261, %p262
    %p264 = scmp.ne.s32.totalorder %s255, %s256
    %p265 = scmp.eq.s32.totalorder %s25, 0
    %p266 = por %p264, %p265
    %p267 = scmp.ne.s32.totalorder %s255, %s256
    %p268 = scmp.eq.s32.totalorder %s26, 3
    %p269 = por %p267, %p268
    %p271 = scmp.ne.s32.totalorder %s256, %s270
    %p272 = scmp.eq.s32.totalorder %s26, 0
    %p273 = por %p271, %p272
    %s275 = sadd.s32 %s274, 1
    %p278 = scmp.eq.s32.totalorder %s20, 3
    %p279 = scmp.ne.s32.totalorder %s274, %s276
    %p280 = scmp.eq.s32.totalorder %s20, 0
    %p281 = por %p279, %p280
    %p282 = scmp.ne.s32.totalorder %s274, %s276
    %p283 = scmp.eq.s32.totalorder %s25, 3
    %p284 = por %p282, %p283
    %p285 = scmp.ne.s32.totalorder %s276, %s277
    %p286 = scmp.eq.s32.totalorder %s25, 0
    %p287 = por %p285, %p286
    %p288 = scmp.ne.s32.totalorder %s276, %s277
    %p289 = scmp.eq.s32.totalorder %s26, 3
    %p290 = por %p288, %p289
    %p292 = scmp.ne.s32.totalorder %s277, %s291
    %p293 = scmp.eq.s32.totalorder %s26, 0
    %p294 = por %p292, %p293
    %s296 = sadd.s32 %s295, 1
    %p299 = scmp.eq.s32.totalorder %s20, 3
    %p300 = scmp.ne.s32.totalorder %s295, %s297
    %p301 = scmp.eq.s32.totalorder %s20, 0
    %p302 = por %p300, %p301
    %p303 = scmp.ne.s32.totalorder %s295, %s297
    %p304 = scmp.eq.s32.totalorder %s25, 3
    %p305 = por %p303, %p304
    %p306 = scmp.ne.s32.totalorder %s297, %s298
    %p307 = scmp.eq.s32.totalorder %s25, 0
    %p308 = por %p306, %p307
    %p309 = scmp.ne.s32.totalorder %s297, %s298
    %p310 = scmp.eq.s32.totalorder %s26, 3
    %p311 = por %p309, %p310
    %p313 = scmp.ne.s32.totalorder %s298, %s312
    %p314 = scmp.eq.s32.totalorder %s26, 0
    %p315 = por %p313, %p314
    %s317 = sadd.s32 %s316, 1
    %p320 = scmp.eq.s32.totalorder %s20, 3
    %p321 = scmp.ne.s32.totalorder %s316, %s318
    %p322 = scmp.eq.s32.totalorder %s20, 0
    %p323 = por %p321, %p322
    %p324 = scmp.ne.s32.totalorder %s316, %s318
    %p325 = scmp.eq.s32.totalorder %s25, 3
    %p326 = por %p324, %p325
    %p327 = scmp.ne.s32.totalorder %s318, %s319
    %p328 = scmp.eq.s32.totalorder %s25, 0
    %p329 = por %p327, %p328
    %p330 = scmp.ne.s32.totalorder %s318, %s319
    %p331 = scmp.eq.s32.totalorder %s26, 3
    %p332 = por %p330, %p331
    %p334 = scmp.ne.s32.totalorder %s319, %s333
    %p335 = scmp.eq.s32.totalorder %s26, 0
    %p336 = por %p334, %p335
    %s337 = ssub.s32 %s20, %s27
    %p338 = scmp.eq.s32.totalorder %s337, 0
    %s340 = sadd.s32 %s339, 1
    %s341 = scalar_select %p338, %s339, %s340
    %p344 = pneg %p338
    %p345 = scmp.eq.s32.totalorder %s20, 3
    %p346 = por %p344, %p345
    %p347 = scmp.ne.s32.totalorder %s339, %s342
    %p348 = scmp.eq.s32.totalorder %s20, 0
    %p349 = por %p347, %p348
    %p350 = scmp.ne.s32.totalorder %s339, %s342
    %p351 = scmp.eq.s32.totalorder %s25, 3
    %p352 = por %p350, %p351
    %p353 = scmp.ne.s32.totalorder %s342, %s343
    %p354 = scmp.eq.s32.totalorder %s25, 0
    %p355 = por %p353, %p354
    %p356 = scmp.ne.s32.totalorder %s342, %s343
    %p357 = scmp.eq.s32.totalorder %s26, 3
    %p358 = por %p356, %p357
    %p360 = scmp.ne.s32.totalorder %s343, %s359
    %p361 = scmp.eq.s32.totalorder %s26, 0
    %p362 = por %p360, %p361
    %p363 = scmp.le.s32.totalorder 1, %s20
    %p364 = scmp.lt.s32.totalorder %s20, 5
    %p365 = pnand %p363, %p364
    %p366 = pneg %p365
    // Predicated region
    $region9: #{tpu_custom_call.1} parent=5 // pred_check
      _
    $region10: #{tpu_custom_call.1} parent=5 // pred_check_branch
      %368 = sbr.rel (%p365) target = $region12
    $region11: #{tpu_custom_call.1} parent=5 // pred_region
      %s369 = ssub.s32 %s20, 1
      // Predicated region
      $region13: #{tpu_custom_call.1} parent=11 // pred_check
        %p370 = pneg %p119
      $region14: #{tpu_custom_call.1} parent=11 // pred_check_branch
        %372 = sbr.rel (%p370) target = $region16
      $region15: #{tpu_custom_call.1} parent=11 // pred_region
        _
      $region16: #{tpu_custom_call.1} parent=11 // pred_fallthru
        _
      // Predicated region
      $region17: #{tpu_custom_call.1} parent=11 // pred_check
        %p373 = pneg %p140
      $region18: #{tpu_custom_call.1} parent=11 // pred_check_branch
        %375 = sbr.rel (%p373) target = $region20
      $region19: #{tpu_custom_call.1} parent=11 // pred_region
        _
      $region20: #{tpu_custom_call.1} parent=11 // pred_fallthru
        _
      // Predicated region
      $region21: #{tpu_custom_call.1} parent=11 // pred_check
        %p376 = pneg %p161
      $region22: #{tpu_custom_call.1} parent=11 // pred_check_branch
        %378 = sbr.rel (%p376) target = $region24
      $region23: #{tpu_custom_call.1} parent=11 // pred_region
        _
      $region24: #{tpu_custom_call.1} parent=11 // pred_fallthru
        _
      // Predicated region
      $region25: #{tpu_custom_call.1} parent=11 // pred_check
        %p379 = pneg %p182
      $region26: #{tpu_custom_call.1} parent=11 // pred_check_branch
        %381 = sbr.rel (%p379) target = $region28
      $region27: #{tpu_custom_call.1} parent=11 // pred_region
        _
      $region28: #{tpu_custom_call.1} parent=11 // pred_fallthru
        _
      // Predicated region
      $region29: #{tpu_custom_call.1} parent=11 // pred_check
        %p382 = pneg %p203
      $region30: #{tpu_custom_call.1} parent=11 // pred_check_branch
        %384 = sbr.rel (%p382) target = $region32
      $region31: #{tpu_custom_call.1} parent=11 // pred_region
        _
      $region32: #{tpu_custom_call.1} parent=11 // pred_fallthru
        _
      // Predicated region
      $region33: #{tpu_custom_call.1} parent=11 // pred_check
        %p385 = pneg %p224
      $region34: #{tpu_custom_call.1} parent=11 // pred_check_branch
        %387 = sbr.rel (%p385) target = $region36
      $region35: #{tpu_custom_call.1} parent=11 // pred_region
        _
      $region36: #{tpu_custom_call.1} parent=11 // pred_fallthru
        _
      // Predicated region
      $region37: #{tpu_custom_call.1} parent=11 // pred_check
        %p388 = pneg %p245
      $region38: #{tpu_custom_call.1} parent=11 // pred_check_branch
        %390 = sbr.rel (%p388) target = $region40
      $region39: #{tpu_custom_call.1} parent=11 // pred_region
        _
      $region40: #{tpu_custom_call.1} parent=11 // pred_fallthru
        _
      // Predicated region
      $region41: #{tpu_custom_call.1} parent=11 // pred_check
        %p391 = pneg %p266
      $region42: #{tpu_custom_call.1} parent=11 // pred_check_branch
        %393 = sbr.rel (%p391) target = $region44
      $region43: #{tpu_custom_call.1} parent=11 // pred_region
        _
      $region44: #{tpu_custom_call.1} parent=11 // pred_fallthru
        _
      // Predicated region
      $region45: #{tpu_custom_call.1} parent=11 // pred_check
        %p394 = pneg %p287
      $region46: #{tpu_custom_call.1} parent=11 // pred_check_branch
        %396 = sbr.rel (%p394) target = $region48
      $region47: #{tpu_custom_call.1} parent=11 // pred_region
        _
      $region48: #{tpu_custom_call.1} parent=11 // pred_fallthru
        _
      // Predicated region
      $region49: #{tpu_custom_call.1} parent=11 // pred_check
        %p397 = pneg %p308
      $region50: #{tpu_custom_call.1} parent=11 // pred_check_branch
        %399 = sbr.rel (%p397) target = $region52
      $region51: #{tpu_custom_call.1} parent=11 // pred_region
        _
      $region52: #{tpu_custom_call.1} parent=11 // pred_fallthru
        _
      // Predicated region
      $region53: #{tpu_custom_call.1} parent=11 // pred_check
        %p400 = pneg %p329
      $region54: #{tpu_custom_call.1} parent=11 // pred_check_branch
        %402 = sbr.rel (%p400) target = $region56
      $region55: #{tpu_custom_call.1} parent=11 // pred_region
        _
      $region56: #{tpu_custom_call.1} parent=11 // pred_fallthru
        _
    $region12: #{tpu_custom_call.1} parent=5 // pred_fallthru
      _
    %p403 = scmp.lt.s32.totalorder %s20, 4
    // Predicated region
    $region57: #{tpu_custom_call.1} parent=5 // pred_check
      %p404 = pneg %p403
    $region58: #{tpu_custom_call.1} parent=5 // pred_check_branch
      %406 = sbr.rel (%p404) target = $region60
    $region59: #{tpu_custom_call.1} parent=5 // pred_region
      // Predicated region
      $region61: #{tpu_custom_call.1} parent=59 // pred_check
        %p407 = pneg %p40
      $region62: #{tpu_custom_call.1} parent=59 // pred_check_branch
        %409 = sbr.rel (%p407) target = $region64
      $region63: #{tpu_custom_call.1} parent=59 // pred_region
        %s410 = smul.u32 8, %s20
        %p411 = scmp.lt.s32.totalorder %s410, 31
        %s412 = scalar_select %p411, %s410, 31
        %s413 = smul.addr %s412, 8
        %s414 = scalar_lea.vmem %s0, %s413
        %s415 = smul.u32 8, %s20
      $region64: #{tpu_custom_call.1} parent=59 // pred_fallthru
        _
      // Predicated region
      $region65: #{tpu_custom_call.1} parent=59 // pred_check
        %p416 = pneg %p66
      $region66: #{tpu_custom_call.1} parent=59 // pred_check_branch
        %418 = sbr.rel (%p416) target = $region68
      $region67: #{tpu_custom_call.1} parent=59 // pred_region
        %s419 = smul.u32 8, %s20
        %p420 = scmp.lt.s32.totalorder %s419, 31
        %s421 = scalar_select %p420, %s419, 31
        %s422 = smul.addr %s421, 8
        %s423 = scalar_lea.vmem %s1, %s422
        %s424 = smul.u32 8, %s20
      $region68: #{tpu_custom_call.1} parent=59 // pred_fallthru
        _
      // Predicated region
      $region69: #{tpu_custom_call.1} parent=59 // pred_check
        %p425 = pneg %p92
      $region70: #{tpu_custom_call.1} parent=59 // pred_check_branch
        %427 = sbr.rel (%p425) target = $region72
      $region71: #{tpu_custom_call.1} parent=59 // pred_region
        %s428 = smul.u32 8, %s20
        %p429 = scmp.lt.s32.totalorder %s428, 31
        %s430 = scalar_select %p429, %s428, 31
        %s431 = smul.addr %s430, 8
        %s432 = scalar_lea.vmem %s2, %s431
        %s433 = smul.u32 8, %s20
      $region72: #{tpu_custom_call.1} parent=59 // pred_fallthru
        _
    $region60: #{tpu_custom_call.1} parent=5 // pred_fallthru
      _
    %p434 = scmp.le.s32.totalorder 1, %s20
    %p435 = scmp.lt.s32.totalorder %s20, 5
    %p436 = pnand %p434, %p435
    %p437 = pneg %p436
    // Predicated region
    $region73: #{tpu_custom_call.1} parent=5 // pred_check
      _
    $region74: #{tpu_custom_call.1} parent=5 // pred_check_branch
      %439 = sbr.rel (%p436) target = $region76
    $region75: #{tpu_custom_call.1} parent=5 // pred_region
      %s440 = ssub.s32 %s20, 1
      %s441 = smul.u32 8, %s25
      %p442 = scmp.lt.s32.totalorder %s441, 31
      %s443 = scalar_select %p442, %s441, 31
      %s444 = smul.addr %s443, 8
      %s445 = scalar_lea.vmem %s0, %s444
      %p446 = pneg %p46
      %p447 = pneg %p43
      %s448 = smul.u32 8, %s25
      %p449 = scmp.lt.s32.totalorder %s448, 31
      %s450 = scalar_select %p449, %s448, 31
      %s451 = smul.addr %s450, 8
      %s452 = scalar_lea.vmem %s1, %s451
      %p453 = pneg %p72
      %p454 = pneg %p69
      %s455 = smul.u32 8, %s25
      %p456 = scmp.lt.s32.totalorder %s455, 31
      %s457 = scalar_select %p456, %s455, 31
      %s458 = smul.addr %s457, 8
      %s459 = scalar_lea.vmem %s2, %s458
      %p460 = pneg %p98
      %p461 = pneg %p95
      %p462 = pneg %p119
      %p463 = pneg %p116
      %p464 = pneg %p140
      %p465 = pneg %p137
      %p466 = pneg %p161
      %p467 = pneg %p158
      %p468 = pneg %p182
      %p469 = pneg %p179
      %p470 = pneg %p203
      %p471 = pneg %p200
      %p472 = pneg %p224
      %p473 = pneg %p221
      %p474 = pneg %p245
      %p475 = pneg %p242
      %p476 = pneg %p266
      %p477 = pneg %p263
      %p478 = pneg %p287
      %p479 = pneg %p284
      %p480 = pneg %p308
      %p481 = pneg %p305
      %p482 = pneg %p329
      %p483 = pneg %p326
      %p484 = pneg %p355
      %p485 = pneg %p352
      %s486 = smul.u32 8, %s25
      %p487 = scmp.lt.s32.totalorder %s486, 31
      %s488 = scalar_select %p487, %s486, 31
      %s489 = smul.addr %s488, 8
      %s490 = scalar_lea.vmem %s14, %s489
      %s491 = smul.u32 8, %s25
      %p492 = scmp.lt.s32.totalorder %s491, 31
      %s493 = scalar_select %p492, %s491, 31
      %s494 = smul.addr %s493, 8
      %s495 = scalar_lea.vmem %s0, %s494
      %s496 = smul.u32 8, %s25
      %s497 = smul.u32 8, %s25
      %p498 = scmp.lt.s32.totalorder %s497, 31
      %s499 = scalar_select %p498, %s497, 31
      %s500 = smul.addr %s499, 8
      %s501 = scalar_lea.vmem %s1, %s500
      %s502 = smul.u32 8, %s25
      %s503 = smul.u32 8, %s25
      %p504 = scmp.lt.s32.totalorder %s503, 31
      %s505 = scalar_select %p504, %s503, 31
      %s506 = smul.addr %s505, 8
      %s507 = scalar_lea.vmem %s2, %s506
      %s508 = smul.u32 8, %s25
      %s509 = smul.u32 8, %s25
      %p510 = scmp.lt.s32.totalorder %s509, 31
      %s511 = scalar_select %p510, %s509, 31
      %s512 = smul.addr %s511, 8
      %s513 = scalar_lea.vmem %s14, %s512
      %s514 = smul.u32 8, %s25
      %v515 = vlaneseq
      %v516 = vand.u32 %v515, 127
      %v517 = vld [vmem:[%s495] sm:$0xff]
      %v518 = vld [vmem:[%s495 + $0x8] sm:$0xff]
      %v519 = vld [vmem:[%s495 + $0x10] sm:$0xff]
      %v520 = vld [vmem:[%s495 + $0x18] sm:$0xff]
      %v521 = vld [vmem:[%s495 + $0x20] sm:$0xff]
      %v522 = vld [vmem:[%s495 + $0x28] sm:$0xff]
      %v523 = vld [vmem:[%s495 + $0x30] sm:$0xff]
      %v524 = vld [vmem:[%s495 + $0x38] sm:$0xff]
      %525 = vset.pattern.permute.xlu0 0
      %526 = vperm.xlu0 %525, %v517
      %v527 = vpop.permute.xlu0 %526
      %528 = vset.pattern.permute.xlu0 0
      %529 = vperm.xlu0 %528, %v518
      %v530 = vpop.permute.xlu0 %529
      %531 = vset.pattern.permute.xlu0 0
      %532 = vperm.xlu0 %531, %v519
      %v533 = vpop.permute.xlu0 %532
      %534 = vset.pattern.permute.xlu0 0
      %535 = vperm.xlu0 %534, %v520
      %v536 = vpop.permute.xlu0 %535
      %537 = vset.pattern.permute.xlu0 0
      %538 = vperm.xlu0 %537, %v521
      %v539 = vpop.permute.xlu0 %538
      %540 = vset.pattern.permute.xlu0 0
      %541 = vperm.xlu0 %540, %v522
      %v542 = vpop.permute.xlu0 %541
      %543 = vset.pattern.permute.xlu0 0
      %544 = vperm.xlu0 %543, %v523
      %v545 = vpop.permute.xlu0 %544
      %546 = vset.pattern.permute.xlu0 0
      %547 = vperm.xlu0 %546, %v524
      %v548 = vpop.permute.xlu0 %547
      %vm549 = vcmp.eq.s32.totalorder %v527, %v516
      %vm550 = vcmp.eq.s32.totalorder %v530, %v516
      %vm551 = vcmp.eq.s32.totalorder %v533, %v516
      %vm552 = vcmp.eq.s32.totalorder %v536, %v516
      %vm553 = vcmp.eq.s32.totalorder %v539, %v516
      %vm554 = vcmp.eq.s32.totalorder %v542, %v516
      %vm555 = vcmp.eq.s32.totalorder %v545, %v516
      %vm556 = vcmp.eq.s32.totalorder %v548, %v516
      %v557 = vsel %vm549, 1, 0
      %v558 = vsel %vm550, 1, 0
      %v559 = vsel %vm551, 1, 0
      %v560 = vsel %vm552, 1, 0
      %v561 = vsel %vm553, 1, 0
      %v562 = vsel %vm554, 1, 0
      %v563 = vsel %vm555, 1, 0
      %v564 = vsel %vm556, 1, 0
      %v565 = vcvt.s32.f32 %v557
      %v566 = vcvt.s32.f32 %v558
      %v567 = vcvt.s32.f32 %v559
      %v568 = vcvt.s32.f32 %v560
      %v569 = vcvt.s32.f32 %v561
      %v570 = vcvt.s32.f32 %v562
      %v571 = vcvt.s32.f32 %v563
      %v572 = vcvt.s32.f32 %v564
      %v573 = vld [vmem:[%s501] sm:$0xff]
      %v574 = vld [vmem:[%s501 + $0x8] sm:$0xff]
      %v575 = vld [vmem:[%s501 + $0x10] sm:$0xff]
      %v576 = vld [vmem:[%s501 + $0x18] sm:$0xff]
      %v577 = vld [vmem:[%s501 + $0x20] sm:$0xff]
      %v578 = vld [vmem:[%s501 + $0x28] sm:$0xff]
      %v579 = vld [vmem:[%s501 + $0x30] sm:$0xff]
      %v580 = vld [vmem:[%s501 + $0x38] sm:$0xff]
      %581 = vset.pattern.permute.xlu0 0
      %582 = vperm.xlu0 %581, %v573
      %v583 = vpop.permute.xlu0 %582
      %584 = vset.pattern.permute.xlu0 0
      %585 = vperm.xlu0 %584, %v574
      %v586 = vpop.permute.xlu0 %585
      %587 = vset.pattern.permute.xlu0 0
      %588 = vperm.xlu0 %587, %v575
      %v589 = vpop.permute.xlu0 %588
      %590 = vset.pattern.permute.xlu0 0
      %591 = vperm.xlu0 %590, %v576
      %v592 = vpop.permute.xlu0 %591
      %593 = vset.pattern.permute.xlu0 0
      %594 = vperm.xlu0 %593, %v577
      %v595 = vpop.permute.xlu0 %594
      %596 = vset.pattern.permute.xlu0 0
      %597 = vperm.xlu0 %596, %v578
      %v598 = vpop.permute.xlu0 %597
      %599 = vset.pattern.permute.xlu0 0
      %600 = vperm.xlu0 %599, %v579
      %v601 = vpop.permute.xlu0 %600
      %602 = vset.pattern.permute.xlu0 0
      %603 = vperm.xlu0 %602, %v580
      %v604 = vpop.permute.xlu0 %603
      %vm605 = vcmp.eq.s32.totalorder %v583, %v516
      %vm606 = vcmp.eq.s32.totalorder %v586, %v516
      %vm607 = vcmp.eq.s32.totalorder %v589, %v516
      %vm608 = vcmp.eq.s32.totalorder %v592, %v516
      %vm609 = vcmp.eq.s32.totalorder %v595, %v516
      %vm610 = vcmp.eq.s32.totalorder %v598, %v516
      %vm611 = vcmp.eq.s32.totalorder %v601, %v516
      %vm612 = vcmp.eq.s32.totalorder %v604, %v516
      %v613 = vsel %vm605, 1, 0
      %v614 = vsel %vm606, 1, 0
      %v615 = vsel %vm607, 1, 0
      %v616 = vsel %vm608, 1, 0
      %v617 = vsel %vm609, 1, 0
      %v618 = vsel %vm610, 1, 0
      %v619 = vsel %vm611, 1, 0
      %v620 = vsel %vm612, 1, 0
      %v621 = vcvt.s32.f32 %v613
      %v622 = vcvt.s32.f32 %v614
      %v623 = vcvt.s32.f32 %v615
      %v624 = vcvt.s32.f32 %v616
      %v625 = vcvt.s32.f32 %v617
      %v626 = vcvt.s32.f32 %v618
      %v627 = vcvt.s32.f32 %v619
      %v628 = vcvt.s32.f32 %v620
      %v629 = vld [vmem:[%s3] sm:$0xff]
      %v630 = vld [vmem:[%s3 + $0x8] sm:$0xff]
      %vm631 = vcmask 130048
      %v633 = vsel %vm631, %v565, 0
      %v636 = vsel %vm631, %v566, 0
      %v639 = vsel %vm631, %v567, 0
      %v642 = vsel %vm631, %v568, 0
      %v645 = vsel %vm631, %v569, 0
      %v648 = vsel %vm631, %v570, 0
      %v651 = vsel %vm631, %v571, 0
      %v654 = vsel %vm631, %v572, 0
      %656 = vmatpush.msra.mxu0 0.0
      %657 = vmatpush.msra.mxu0 0.0
      %658 = vmatpush.msra.mxu0 0.0
      %659 = vmatpush.msra.mxu0 0.0
      %660 = vmatpush.msra.mxu0 0.0
      %661 = vmatpush.msra.mxu0 0.0
      %662 = vmatpush.msra.mxu0 0.0
      %663 = vmatpush.msra.mxu0 0.0
      %664 = vmatpush.msra.mxu0 0.0
      %665 = vmatpush.msra.mxu0 0.0
      %666 = vmatpush.msra.mxu0 0.0
      %667 = vmatpush.msra.mxu0 0.0
      %668 = vmatpush.msra.mxu0 0.0
      %669 = vmatpush.msra.mxu0 0.0
      %670 = vmatpush.msra.mxu0 %v630
      %671 = vmatpush.msra.mxu0 %v629
      %672 = vmatmul.f32.gmra.mxu0 %v633
      %v673 = vpop.f32.mrf.mxu0
      %v674 = vadd.f32 0.0, %v673
      %675 = vmatmul.f32.gmra.mxu0 %v636
      %v676 = vpop.f32.mrf.mxu0
      %v677 = vadd.f32 0.0, %v676
      %678 = vmatmul.f32.gmra.mxu0 %v639
      %v679 = vpop.f32.mrf.mxu0
      %v680 = vadd.f32 0.0, %v679
      %681 = vmatmul.f32.gmra.mxu0 %v642
      %v682 = vpop.f32.mrf.mxu0
      %v683 = vadd.f32 0.0, %v682
      %684 = vmatmul.f32.gmra.mxu0 %v645
      %v685 = vpop.f32.mrf.mxu0
      %v686 = vadd.f32 0.0, %v685
      %687 = vmatmul.f32.gmra.mxu0 %v648
      %v688 = vpop.f32.mrf.mxu0
      %v689 = vadd.f32 0.0, %v688
      %690 = vmatmul.f32.gmra.mxu0 %v651
      %v691 = vpop.f32.mrf.mxu0
      %v692 = vadd.f32 0.0, %v691
      %693 = vmatmul.f32.gmra.mxu0 %v654
      %v694 = vpop.f32.mrf.mxu0
      %v695 = vadd.f32 0.0, %v694
      %696 = vdwg.mxu0
      %v698 = vsel %vm631, %v621, 0
      %v701 = vsel %vm631, %v622, 0
      %v704 = vsel %vm631, %v623, 0
      %v707 = vsel %vm631, %v624, 0
      %v710 = vsel %vm631, %v625, 0
      %v713 = vsel %vm631, %v626, 0
      %v716 = vsel %vm631, %v627, 0
      %v719 = vsel %vm631, %v628, 0
      %721 = vmatpush.msra.mxu0 0.0
      %722 = vmatpush.msra.mxu0 0.0
      %723 = vmatpush.msra.mxu0 0.0
      %724 = vmatpush.msra.mxu0 0.0
      %725 = vmatpush.msra.mxu0 0.0
      %726 = vmatpush.msra.mxu0 0.0
      %727 = vmatpush.msra.mxu0 0.0
      %728 = vmatpush.msra.mxu0 0.0
      %729 = vmatpush.msra.mxu0 0.0
      %730 = vmatpush.msra.mxu0 0.0
      %731 = vmatpush.msra.mxu0 0.0
      %732 = vmatpush.msra.mxu0 0.0
      %733 = vmatpush.msra.mxu0 0.0
      %734 = vmatpush.msra.mxu0 0.0
      %735 = vmatpush.msra.mxu0 %v630
      %736 = vmatpush.msra.mxu0 %v629
      %737 = vmatmul.f32.gmra.mxu0 %v698
      %v738 = vpop.f32.mrf.mxu0
      %v739 = vadd.f32 0.0, %v738
      %740 = vmatmul.f32.gmra.mxu0 %v701
      %v741 = vpop.f32.mrf.mxu0
      %v742 = vadd.f32 0.0, %v741
      %743 = vmatmul.f32.gmra.mxu0 %v704
      %v744 = vpop.f32.mrf.mxu0
      %v745 = vadd.f32 0.0, %v744
      %746 = vmatmul.f32.gmra.mxu0 %v707
      %v747 = vpop.f32.mrf.mxu0
      %v748 = vadd.f32 0.0, %v747
      %749 = vmatmul.f32.gmra.mxu0 %v710
      %v750 = vpop.f32.mrf.mxu0
      %v751 = vadd.f32 0.0, %v750
      %752 = vmatmul.f32.gmra.mxu0 %v713
      %v753 = vpop.f32.mrf.mxu0
      %v754 = vadd.f32 0.0, %v753
      %755 = vmatmul.f32.gmra.mxu0 %v716
      %v756 = vpop.f32.mrf.mxu0
      %v757 = vadd.f32 0.0, %v756
      %758 = vmatmul.f32.gmra.mxu0 %v719
      %v759 = vpop.f32.mrf.mxu0
      %v760 = vadd.f32 0.0, %v759
      %761 = vdwg.mxu0
      %v762 = vld [vmem:[%s4] sm:$0xff]
      %v763 = vld [vmem:[%s4 + $0x8] sm:$0xff]
      %v764 = vld [vmem:[%s4 + $0x10] sm:$0xff]
      %v765 = vld [vmem:[%s4 + $0x18] sm:$0xff]
      %v766 = vld [vmem:[%s5] sm:$0xff]
      %v767 = vld [vmem:[%s5 + $0x8] sm:$0xff]
      %v768 = vld [vmem:[%s5 + $0x10] sm:$0xff]
      %v769 = vld [vmem:[%s5 + $0x18] sm:$0xff]
      %vm770 = vcmask 261120
      %v772 = vsel %vm770, %v739, 0
      %v775 = vsel %vm770, %v742, 0
      %v778 = vsel %vm770, %v745, 0
      %v781 = vsel %vm770, %v748, 0
      %v784 = vsel %vm770, %v751, 0
      %v787 = vsel %vm770, %v754, 0
      %v790 = vsel %vm770, %v757, 0
      %v793 = vsel %vm770, %v760, 0
      %795 = vmatpush.msra.mxu0 0.0
      %796 = vmatpush.msra.mxu0 0.0
      %797 = vmatpush.msra.mxu0 0.0
      %798 = vmatpush.msra.mxu0 0.0
      %799 = vmatpush.msra.mxu0 0.0
      %800 = vmatpush.msra.mxu0 0.0
      %801 = vmatpush.msra.mxu0 0.0
      %802 = vmatpush.msra.mxu0 0.0
      %803 = vmatpush.msra.mxu0 0.0
      %804 = vmatpush.msra.mxu0 0.0
      %805 = vmatpush.msra.mxu0 0.0
      %806 = vmatpush.msra.mxu0 0.0
      %807 = vmatpush.msra.mxu0 %v769
      %808 = vmatpush.msra.mxu0 %v768
      %809 = vmatpush.msra.mxu0 %v767
      %810 = vmatpush.msra.mxu0 %v766
      %811 = vmatmul.f32.gmra.mxu0 %v772
      %v812 = vpop.f32.mrf.mxu0
      %v813 = vadd.f32 0.0, %v812
      %814 = vmatmul.f32.gmra.mxu0 %v775
      %v815 = vpop.f32.mrf.mxu0
      %v816 = vadd.f32 0.0, %v815
      %817 = vmatmul.f32.gmra.mxu0 %v778
      %v818 = vpop.f32.mrf.mxu0
      %v819 = vadd.f32 0.0, %v818
      %820 = vmatmul.f32.gmra.mxu0 %v781
      %v821 = vpop.f32.mrf.mxu0
      %v822 = vadd.f32 0.0, %v821
      %823 = vmatmul.f32.gmra.mxu0 %v784
      %v824 = vpop.f32.mrf.mxu0
      %v825 = vadd.f32 0.0, %v824
      %826 = vmatmul.f32.gmra.mxu0 %v787
      %v827 = vpop.f32.mrf.mxu0
      %v828 = vadd.f32 0.0, %v827
      %829 = vmatmul.f32.gmra.mxu0 %v790
      %v830 = vpop.f32.mrf.mxu0
      %v831 = vadd.f32 0.0, %v830
      %832 = vmatmul.f32.gmra.mxu0 %v793
      %v833 = vpop.f32.mrf.mxu0
      %v834 = vadd.f32 0.0, %v833
      %835 = vdwg.mxu0
      %v837 = vsel %vm770, %v674, 0
      %v840 = vsel %vm770, %v677, 0
      %v843 = vsel %vm770, %v680, 0
      %v846 = vsel %vm770, %v683, 0
      %v849 = vsel %vm770, %v686, 0
      %v852 = vsel %vm770, %v689, 0
      %v855 = vsel %vm770, %v692, 0
      %v858 = vsel %vm770, %v695, 0
      %860 = vmatpush.msra.mxu0 0.0
      %861 = vmatpush.msra.mxu0 0.0
      %862 = vmatpush.msra.mxu0 0.0
      %863 = vmatpush.msra.mxu0 0.0
      %864 = vmatpush.msra.mxu0 0.0
      %865 = vmatpush.msra.mxu0 0.0
      %866 = vmatpush.msra.mxu0 0.0
      %867 = vmatpush.msra.mxu0 0.0
      %868 = vmatpush.msra.mxu0 0.0
      %869 = vmatpush.msra.mxu0 0.0
      %870 = vmatpush.msra.mxu0 0.0
      %871 = vmatpush.msra.mxu0 0.0
      %872 = vmatpush.msra.mxu0 %v765
      %873 = vmatpush.msra.mxu0 %v764
      %874 = vmatpush.msra.mxu0 %v763
      %875 = vmatpush.msra.mxu0 %v762
      %876 = vmatmul.f32.gmra.mxu0 %v837
      %v877 = vpop.f32.mrf.mxu0
      %v878 = vadd.f32 %v813, %v877
      %879 = vmatmul.f32.gmra.mxu0 %v840
      %v880 = vpop.f32.mrf.mxu0
      %v881 = vadd.f32 %v816, %v880
      %882 = vmatmul.f32.gmra.mxu0 %v843
      %v883 = vpop.f32.mrf.mxu0
      %v884 = vadd.f32 %v819, %v883
      %885 = vmatmul.f32.gmra.mxu0 %v846
      %v886 = vpop.f32.mrf.mxu0
      %v887 = vadd.f32 %v822, %v886
      %888 = vmatmul.f32.gmra.mxu0 %v849
      %v889 = vpop.f32.mrf.mxu0
      %v890 = vadd.f32 %v825, %v889
      %891 = vmatmul.f32.gmra.mxu0 %v852
      %v892 = vpop.f32.mrf.mxu0
      %v893 = vadd.f32 %v828, %v892
      %894 = vmatmul.f32.gmra.mxu0 %v855
      %v895 = vpop.f32.mrf.mxu0
      %v896 = vadd.f32 %v831, %v895
      %897 = vmatmul.f32.gmra.mxu0 %v858
      %v898 = vpop.f32.mrf.mxu0
      %v899 = vadd.f32 %v834, %v898
      %900 = vdwg.mxu0
      %v901 = vld [vmem:[%s507] sm:$0xff]
      %v902 = vld [vmem:[%s507 + $0x8] sm:$0xff]
      %v903 = vld [vmem:[%s507 + $0x10] sm:$0xff]
      %v904 = vld [vmem:[%s507 + $0x18] sm:$0xff]
      %v905 = vld [vmem:[%s507 + $0x20] sm:$0xff]
      %v906 = vld [vmem:[%s507 + $0x28] sm:$0xff]
      %v907 = vld [vmem:[%s507 + $0x30] sm:$0xff]
      %v908 = vld [vmem:[%s507 + $0x38] sm:$0xff]
      %v909 = vld [vmem:[%s6] sm:$0xff]
      %v910 = vld [vmem:[%s6 + $0x8] sm:$0xff]
      %v911 = vld [vmem:[%s6 + $0x10] sm:$0xff]
      %v912 = vld [vmem:[%s6 + $0x18] sm:$0xff]
      %v914 = vsel %vm770, %v901, 0
      %v917 = vsel %vm770, %v902, 0
      %v920 = vsel %vm770, %v903, 0
      %v923 = vsel %vm770, %v904, 0
      %v926 = vsel %vm770, %v905, 0
      %v929 = vsel %vm770, %v906, 0
      %v932 = vsel %vm770, %v907, 0
      %v935 = vsel %vm770, %v908, 0
      %937 = vmatpush.msra.mxu0 0.0
      %938 = vmatpush.msra.mxu0 0.0
      %939 = vmatpush.msra.mxu0 0.0
      %940 = vmatpush.msra.mxu0 0.0
      %941 = vmatpush.msra.mxu0 0.0
      %942 = vmatpush.msra.mxu0 0.0
      %943 = vmatpush.msra.mxu0 0.0
      %944 = vmatpush.msra.mxu0 0.0
      %945 = vmatpush.msra.mxu0 0.0
      %946 = vmatpush.msra.mxu0 0.0
      %947 = vmatpush.msra.mxu0 0.0
      %948 = vmatpush.msra.mxu0 0.0
      %949 = vmatpush.msra.mxu0 %v912
      %950 = vmatpush.msra.mxu0 %v911
      %951 = vmatpush.msra.mxu0 %v910
      %952 = vmatpush.msra.mxu0 %v909
      %953 = vmatmul.f32.gmra.mxu0 %v914
      %v954 = vpop.f32.mrf.mxu0
      %v955 = vadd.f32 0.0, %v954
      %956 = vmatmul.f32.gmra.mxu0 %v917
      %v957 = vpop.f32.mrf.mxu0
      %v958 = vadd.f32 0.0, %v957
      %959 = vmatmul.f32.gmra.mxu0 %v920
      %v960 = vpop.f32.mrf.mxu0
      %v961 = vadd.f32 0.0, %v960
      %962 = vmatmul.f32.gmra.mxu0 %v923
      %v963 = vpop.f32.mrf.mxu0
      %v964 = vadd.f32 0.0, %v963
      %965 = vmatmul.f32.gmra.mxu0 %v926
      %v966 = vpop.f32.mrf.mxu0
      %v967 = vadd.f32 0.0, %v966
      %968 = vmatmul.f32.gmra.mxu0 %v929
      %v969 = vpop.f32.mrf.mxu0
      %v970 = vadd.f32 0.0, %v969
      %971 = vmatmul.f32.gmra.mxu0 %v932
      %v972 = vpop.f32.mrf.mxu0
      %v973 = vadd.f32 0.0, %v972
      %974 = vmatmul.f32.gmra.mxu0 %v935
      %v975 = vpop.f32.mrf.mxu0
      %v976 = vadd.f32 0.0, %v975
      %977 = vdwg.mxu0
      %v978 = vadd.f32 %v878, %v955
      %v979 = vadd.f32 %v881, %v958
      %v980 = vadd.f32 %v884, %v961
      %v981 = vadd.f32 %v887, %v964
      %v982 = vadd.f32 %v890, %v967
      %v983 = vadd.f32 %v893, %v970
      %v984 = vadd.f32 %v896, %v973
      %v985 = vadd.f32 %v899, %v976
      %v986 = vld [vmem:[%s7] sm:$0x1]
      %v988 = vperm.slane %v986, 0
      %v990 = vadd.f32 %v978, %v988
      %v991 = vadd.f32 %v979, %v988
      %v992 = vadd.f32 %v980, %v988
      %v993 = vadd.f32 %v981, %v988
      %v994 = vadd.f32 %v982, %v988
      %v995 = vadd.f32 %v983, %v988
      %v996 = vadd.f32 %v984, %v988
      %v997 = vadd.f32 %v985, %v988
      %v998 = vxor.u32 %v990, 2147483648
      %v999 = vxor.u32 %v991, 2147483648
      %v1000 = vxor.u32 %v992, 2147483648
      %v1001 = vxor.u32 %v993, 2147483648
      %v1002 = vxor.u32 %v994, 2147483648
      %v1003 = vxor.u32 %v995, 2147483648
      %v1004 = vxor.u32 %v996, 2147483648
      %v1005 = vxor.u32 %v997, 2147483648
      %v1006 = vmul.f32 %v998, 1.442695
      %v1007 = vpow.pop %v1006
      %v1008 = vmul.f32 %v999, 1.442695
      %v1009 = vpow.pop %v1008
      %v1010 = vmul.f32 %v1000, 1.442695
      %v1011 = vpow.pop %v1010
      %v1012 = vmul.f32 %v1001, 1.442695
      %v1013 = vpow.pop %v1012
      %v1014 = vmul.f32 %v1002, 1.442695
      %v1015 = vpow.pop %v1014
      %v1016 = vmul.f32 %v1003, 1.442695
      %v1017 = vpow.pop %v1016
      %v1018 = vmul.f32 %v1004, 1.442695
      %v1019 = vpow.pop %v1018
      %v1020 = vmul.f32 %v1005, 1.442695
      %v1021 = vpow.pop %v1020
      %v1022 = vadd.f32 %v1007, 1.0
      %v1023 = vadd.f32 %v1009, 1.0
      %v1024 = vadd.f32 %v1011, 1.0
      %v1025 = vadd.f32 %v1013, 1.0
      %v1026 = vadd.f32 %v1015, 1.0
      %v1027 = vadd.f32 %v1017, 1.0
      %v1028 = vadd.f32 %v1019, 1.0
      %v1029 = vadd.f32 %v1021, 1.0
      %v1030 = vrcp.pop %v1022
      %v1031 = vmul.f32 %v1022, %v1030
      %v1032 = vsub.f32 1.0, %v1031
      %v1033 = vmul.f32 %v1030, %v1032
      %v1034 = vadd.f32 %v1030, %v1033
      %vm1035 = vweird.f32 %v1022
      %vm1036 = vweird.f32 %v1030
      %vm1037 = vmor %vm1035, %vm1036
      %v1038 = vsel %vm1037, %v1030, %v1034
      %v1039 = vand.u32 2147483647, %v1022
      %vm1040 = vcmp.eq.f32.partialorder %v1039, 8.507059e+37
      %v1041 = vand.u32 %v1022, 2147483648
      %v1042 = vor.u32 1.1754944e-38, %v1041
      %v1043 = vsel %vm1040, %v1042, %v1038
      %v1044 = vmul.f32 1.0, %v1043
      %v1045 = vrcp.pop %v1023
      %v1046 = vmul.f32 %v1023, %v1045
      %v1047 = vsub.f32 1.0, %v1046
      %v1048 = vmul.f32 %v1045, %v1047
      %v1049 = vadd.f32 %v1045, %v1048
      %vm1050 = vweird.f32 %v1023
      %vm1051 = vweird.f32 %v1045
      %vm1052 = vmor %vm1050, %vm1051
      %v1053 = vsel %vm1052, %v1045, %v1049
      %v1054 = vand.u32 2147483647, %v1023
      %vm1055 = vcmp.eq.f32.partialorder %v1054, 8.507059e+37
      %v1056 = vand.u32 %v1023, 2147483648
      %v1057 = vor.u32 1.1754944e-38, %v1056
      %v1058 = vsel %vm1055, %v1057, %v1053
      %v1059 = vmul.f32 1.0, %v1058
      %v1060 = vrcp.pop %v1024
      %v1061 = vmul.f32 %v1024, %v1060
      %v1062 = vsub.f32 1.0, %v1061
      %v1063 = vmul.f32 %v1060, %v1062
      %v1064 = vadd.f32 %v1060, %v1063
      %vm1065 = vweird.f32 %v1024
      %vm1066 = vweird.f32 %v1060
      %vm1067 = vmor %vm1065, %vm1066
      %v1068 = vsel %vm1067, %v1060, %v1064
      %v1069 = vand.u32 2147483647, %v1024
      %vm1070 = vcmp.eq.f32.partialorder %v1069, 8.507059e+37
      %v1071 = vand.u32 %v1024, 2147483648
      %v1072 = vor.u32 1.1754944e-38, %v1071
      %v1073 = vsel %vm1070, %v1072, %v1068
      %v1074 = vmul.f32 1.0, %v1073
      %v1075 = vrcp.pop %v1025
      %v1076 = vmul.f32 %v1025, %v1075
      %v1077 = vsub.f32 1.0, %v1076
      %v1078 = vmul.f32 %v1075, %v1077
      %v1079 = vadd.f32 %v1075, %v1078
      %vm1080 = vweird.f32 %v1025
      %vm1081 = vweird.f32 %v1075
      %vm1082 = vmor %vm1080, %vm1081
      %v1083 = vsel %vm1082, %v1075, %v1079
      %v1084 = vand.u32 2147483647, %v1025
      %vm1085 = vcmp.eq.f32.partialorder %v1084, 8.507059e+37
      %v1086 = vand.u32 %v1025, 2147483648
      %v1087 = vor.u32 1.1754944e-38, %v1086
      %v1088 = vsel %vm1085, %v1087, %v1083
      %v1089 = vmul.f32 1.0, %v1088
      %v1090 = vrcp.pop %v1026
      %v1091 = vmul.f32 %v1026, %v1090
      %v1092 = vsub.f32 1.0, %v1091
      %v1093 = vmul.f32 %v1090, %v1092
      %v1094 = vadd.f32 %v1090, %v1093
      %vm1095 = vweird.f32 %v1026
      %vm1096 = vweird.f32 %v1090
      %vm1097 = vmor %vm1095, %vm1096
      %v1098 = vsel %vm1097, %v1090, %v1094
      %v1099 = vand.u32 2147483647, %v1026
      %vm1100 = vcmp.eq.f32.partialorder %v1099, 8.507059e+37
      %v1101 = vand.u32 %v1026, 2147483648
      %v1102 = vor.u32 1.1754944e-38, %v1101
      %v1103 = vsel %vm1100, %v1102, %v1098
      %v1104 = vmul.f32 1.0, %v1103
      %v1105 = vrcp.pop %v1027
      %v1106 = vmul.f32 %v1027, %v1105
      %v1107 = vsub.f32 1.0, %v1106
      %v1108 = vmul.f32 %v1105, %v1107
      %v1109 = vadd.f32 %v1105, %v1108
      %vm1110 = vweird.f32 %v1027
      %vm1111 = vweird.f32 %v1105
      %vm1112 = vmor %vm1110, %vm1111
      %v1113 = vsel %vm1112, %v1105, %v1109
      %v1114 = vand.u32 2147483647, %v1027
      %vm1115 = vcmp.eq.f32.partialorder %v1114, 8.507059e+37
      %v1116 = vand.u32 %v1027, 2147483648
      %v1117 = vor.u32 1.1754944e-38, %v1116
      %v1118 = vsel %vm1115, %v1117, %v1113
      %v1119 = vmul.f32 1.0, %v1118
      %v1120 = vrcp.pop %v1028
      %v1121 = vmul.f32 %v1028, %v1120
      %v1122 = vsub.f32 1.0, %v1121
      %v1123 = vmul.f32 %v1120, %v1122
      %v1124 = vadd.f32 %v1120, %v1123
      %vm1125 = vweird.f32 %v1028
      %vm1126 = vweird.f32 %v1120
      %vm1127 = vmor %vm1125, %vm1126
      %v1128 = vsel %vm1127, %v1120, %v1124
      %v1129 = vand.u32 2147483647, %v1028
      %vm1130 = vcmp.eq.f32.partialorder %v1129, 8.507059e+37
      %v1131 = vand.u32 %v1028, 2147483648
      %v1132 = vor.u32 1.1754944e-38, %v1131
      %v1133 = vsel %vm1130, %v1132, %v1128
      %v1134 = vmul.f32 1.0, %v1133
      %v1135 = vrcp.pop %v1029
      %v1136 = vmul.f32 %v1029, %v1135
      %v1137 = vsub.f32 1.0, %v1136
      %v1138 = vmul.f32 %v1135, %v1137
      %v1139 = vadd.f32 %v1135, %v1138
      %vm1140 = vweird.f32 %v1029
      %vm1141 = vweird.f32 %v1135
      %vm1142 = vmor %vm1140, %vm1141
      %v1143 = vsel %vm1142, %v1135, %v1139
      %v1144 = vand.u32 2147483647, %v1029
      %vm1145 = vcmp.eq.f32.partialorder %v1144, 8.507059e+37
      %v1146 = vand.u32 %v1029, 2147483648
      %v1147 = vor.u32 1.1754944e-38, %v1146
      %v1148 = vsel %vm1145, %v1147, %v1143
      %v1149 = vmul.f32 1.0, %v1148
      %v1150 = vmul.f32 %v990, %v1044
      %v1151 = vmul.f32 %v991, %v1059
      %v1152 = vmul.f32 %v992, %v1074
      %v1153 = vmul.f32 %v993, %v1089
      %v1154 = vmul.f32 %v994, %v1104
      %v1155 = vmul.f32 %v995, %v1119
      %v1156 = vmul.f32 %v996, %v1134
      %v1157 = vmul.f32 %v997, %v1149
      %v1158 = vld [vmem:[%s8] sm:$0xff]
      %v1159 = vld [vmem:[%s8 + $0x8] sm:$0xff]
      %v1160 = vld [vmem:[%s8 + $0x10] sm:$0xff]
      %v1161 = vld [vmem:[%s8 + $0x18] sm:$0xff]
      %v1162 = vld [vmem:[%s9] sm:$0x1]
      %v1164 = vperm.slane %v1162, 0
      %v1167 = vsel %vm770, %v1150, 0
      %v1170 = vsel %vm770, %v1151, 0
      %v1173 = vsel %vm770, %v1152, 0
      %v1176 = vsel %vm770, %v1153, 0
      %v1179 = vsel %vm770, %v1154, 0
      %v1182 = vsel %vm770, %v1155, 0
      %v1185 = vsel %vm770, %v1156, 0
      %v1188 = vsel %vm770, %v1157, 0
      %1190 = vmatpush.msra.mxu0 0.0
      %1191 = vmatpush.msra.mxu0 0.0
      %1192 = vmatpush.msra.mxu0 0.0
      %1193 = vmatpush.msra.mxu0 0.0
      %1194 = vmatpush.msra.mxu0 0.0
      %1195 = vmatpush.msra.mxu0 0.0
      %1196 = vmatpush.msra.mxu0 0.0
      %1197 = vmatpush.msra.mxu0 0.0
      %1198 = vmatpush.msra.mxu0 0.0
      %1199 = vmatpush.msra.mxu0 0.0
      %1200 = vmatpush.msra.mxu0 0.0
      %1201 = vmatpush.msra.mxu0 0.0
      %1202 = vmatpush.msra.mxu0 %v1161
      %1203 = vmatpush.msra.mxu0 %v1160
      %1204 = vmatpush.msra.mxu0 %v1159
      %1205 = vmatpush.msra.mxu0 %v1158
      %1206 = vmatmul.f32.gmra.mxu0 %v1167
      %v1207 = vpop.f32.mrf.mxu0
      %v1208 = vadd.f32 %v1164, %v1207
      %1209 = vmatmul.f32.gmra.mxu0 %v1170
      %v1210 = vpop.f32.mrf.mxu0
      %v1211 = vadd.f32 %v1164, %v1210
      %1212 = vmatmul.f32.gmra.mxu0 %v1173
      %v1213 = vpop.f32.mrf.mxu0
      %v1214 = vadd.f32 %v1164, %v1213
      %1215 = vmatmul.f32.gmra.mxu0 %v1176
      %v1216 = vpop.f32.mrf.mxu0
      %v1217 = vadd.f32 %v1164, %v1216
      %1218 = vmatmul.f32.gmra.mxu0 %v1179
      %v1219 = vpop.f32.mrf.mxu0
      %v1220 = vadd.f32 %v1164, %v1219
      %1221 = vmatmul.f32.gmra.mxu0 %v1182
      %v1222 = vpop.f32.mrf.mxu0
      %v1223 = vadd.f32 %v1164, %v1222
      %1224 = vmatmul.f32.gmra.mxu0 %v1185
      %v1225 = vpop.f32.mrf.mxu0
      %v1226 = vadd.f32 %v1164, %v1225
      %1227 = vmatmul.f32.gmra.mxu0 %v1188
      %v1228 = vpop.f32.mrf.mxu0
      %v1229 = vadd.f32 %v1164, %v1228
      %1230 = vdwg.mxu0
      %v1231 = vxor.u32 %v1208, 2147483648
      %v1232 = vxor.u32 %v1211, 2147483648
      %v1233 = vxor.u32 %v1214, 2147483648
      %v1234 = vxor.u32 %v1217, 2147483648
      %v1235 = vxor.u32 %v1220, 2147483648
      %v1236 = vxor.u32 %v1223, 2147483648
      %v1237 = vxor.u32 %v1226, 2147483648
      %v1238 = vxor.u32 %v1229, 2147483648
      %v1239 = vmul.f32 %v1231, 1.442695
      %v1240 = vpow.pop %v1239
      %v1241 = vmul.f32 %v1232, 1.442695
      %v1242 = vpow.pop %v1241
      %v1243 = vmul.f32 %v1233, 1.442695
      %v1244 = vpow.pop %v1243
      %v1245 = vmul.f32 %v1234, 1.442695
      %v1246 = vpow.pop %v1245
      %v1247 = vmul.f32 %v1235, 1.442695
      %v1248 = vpow.pop %v1247
      %v1249 = vmul.f32 %v1236, 1.442695
      %v1250 = vpow.pop %v1249
      %v1251 = vmul.f32 %v1237, 1.442695
      %v1252 = vpow.pop %v1251
      %v1253 = vmul.f32 %v1238, 1.442695
      %v1254 = vpow.pop %v1253
      %v1255 = vadd.f32 %v1240, 1.0
      %v1256 = vadd.f32 %v1242, 1.0
      %v1257 = vadd.f32 %v1244, 1.0
      %v1258 = vadd.f32 %v1246, 1.0
      %v1259 = vadd.f32 %v1248, 1.0
      %v1260 = vadd.f32 %v1250, 1.0
      %v1261 = vadd.f32 %v1252, 1.0
      %v1262 = vadd.f32 %v1254, 1.0
      %v1263 = vrcp.pop %v1255
      %v1264 = vmul.f32 %v1255, %v1263
      %v1265 = vsub.f32 1.0, %v1264
      %v1266 = vmul.f32 %v1263, %v1265
      %v1267 = vadd.f32 %v1263, %v1266
      %vm1268 = vweird.f32 %v1255
      %vm1269 = vweird.f32 %v1263
      %vm1270 = vmor %vm1268, %vm1269
      %v1271 = vsel %vm1270, %v1263, %v1267
      %v1272 = vand.u32 2147483647, %v1255
      %vm1273 = vcmp.eq.f32.partialorder %v1272, 8.507059e+37
      %v1274 = vand.u32 %v1255, 2147483648
      %v1275 = vor.u32 1.1754944e-38, %v1274
      %v1276 = vsel %vm1273, %v1275, %v1271
      %v1277 = vmul.f32 1.0, %v1276
      %v1278 = vrcp.pop %v1256
      %v1279 = vmul.f32 %v1256, %v1278
      %v1280 = vsub.f32 1.0, %v1279
      %v1281 = vmul.f32 %v1278, %v1280
      %v1282 = vadd.f32 %v1278, %v1281
      %vm1283 = vweird.f32 %v1256
      %vm1284 = vweird.f32 %v1278
      %vm1285 = vmor %vm1283, %vm1284
      %v1286 = vsel %vm1285, %v1278, %v1282
      %v1287 = vand.u32 2147483647, %v1256
      %vm1288 = vcmp.eq.f32.partialorder %v1287, 8.507059e+37
      %v1289 = vand.u32 %v1256, 2147483648
      %v1290 = vor.u32 1.1754944e-38, %v1289
      %v1291 = vsel %vm1288, %v1290, %v1286
      %v1292 = vmul.f32 1.0, %v1291
      %v1293 = vrcp.pop %v1257
      %v1294 = vmul.f32 %v1257, %v1293
      %v1295 = vsub.f32 1.0, %v1294
      %v1296 = vmul.f32 %v1293, %v1295
      %v1297 = vadd.f32 %v1293, %v1296
      %vm1298 = vweird.f32 %v1257
      %vm1299 = vweird.f32 %v1293
      %vm1300 = vmor %vm1298, %vm1299
      %v1301 = vsel %vm1300, %v1293, %v1297
      %v1302 = vand.u32 2147483647, %v1257
      %vm1303 = vcmp.eq.f32.partialorder %v1302, 8.507059e+37
      %v1304 = vand.u32 %v1257, 2147483648
      %v1305 = vor.u32 1.1754944e-38, %v1304
      %v1306 = vsel %vm1303, %v1305, %v1301
      %v1307 = vmul.f32 1.0, %v1306
      %v1308 = vrcp.pop %v1258
      %v1309 = vmul.f32 %v1258, %v1308
      %v1310 = vsub.f32 1.0, %v1309
      %v1311 = vmul.f32 %v1308, %v1310
      %v1312 = vadd.f32 %v1308, %v1311
      %vm1313 = vweird.f32 %v1258
      %vm1314 = vweird.f32 %v1308
      %vm1315 = vmor %vm1313, %vm1314
      %v1316 = vsel %vm1315, %v1308, %v1312
      %v1317 = vand.u32 2147483647, %v1258
      %vm1318 = vcmp.eq.f32.partialorder %v1317, 8.507059e+37
      %v1319 = vand.u32 %v1258, 2147483648
      %v1320 = vor.u32 1.1754944e-38, %v1319
      %v1321 = vsel %vm1318, %v1320, %v1316
      %v1322 = vmul.f32 1.0, %v1321
      %v1323 = vrcp.pop %v1259
      %v1324 = vmul.f32 %v1259, %v1323
      %v1325 = vsub.f32 1.0, %v1324
      %v1326 = vmul.f32 %v1323, %v1325
      %v1327 = vadd.f32 %v1323, %v1326
      %vm1328 = vweird.f32 %v1259
      %vm1329 = vweird.f32 %v1323
      %vm1330 = vmor %vm1328, %vm1329
      %v1331 = vsel %vm1330, %v1323, %v1327
      %v1332 = vand.u32 2147483647, %v1259
      %vm1333 = vcmp.eq.f32.partialorder %v1332, 8.507059e+37
      %v1334 = vand.u32 %v1259, 2147483648
      %v1335 = vor.u32 1.1754944e-38, %v1334
      %v1336 = vsel %vm1333, %v1335, %v1331
      %v1337 = vmul.f32 1.0, %v1336
      %v1338 = vrcp.pop %v1260
      %v1339 = vmul.f32 %v1260, %v1338
      %v1340 = vsub.f32 1.0, %v1339
      %v1341 = vmul.f32 %v1338, %v1340
      %v1342 = vadd.f32 %v1338, %v1341
      %vm1343 = vweird.f32 %v1260
      %vm1344 = vweird.f32 %v1338
      %vm1345 = vmor %vm1343, %vm1344
      %v1346 = vsel %vm1345, %v1338, %v1342
      %v1347 = vand.u32 2147483647, %v1260
      %vm1348 = vcmp.eq.f32.partialorder %v1347, 8.507059e+37
      %v1349 = vand.u32 %v1260, 2147483648
      %v1350 = vor.u32 1.1754944e-38, %v1349
      %v1351 = vsel %vm1348, %v1350, %v1346
      %v1352 = vmul.f32 1.0, %v1351
      %v1353 = vrcp.pop %v1261
      %v1354 = vmul.f32 %v1261, %v1353
      %v1355 = vsub.f32 1.0, %v1354
      %v1356 = vmul.f32 %v1353, %v1355
      %v1357 = vadd.f32 %v1353, %v1356
      %vm1358 = vweird.f32 %v1261
      %vm1359 = vweird.f32 %v1353
      %vm1360 = vmor %vm1358, %vm1359
      %v1361 = vsel %vm1360, %v1353, %v1357
      %v1362 = vand.u32 2147483647, %v1261
      %vm1363 = vcmp.eq.f32.partialorder %v1362, 8.507059e+37
      %v1364 = vand.u32 %v1261, 2147483648
      %v1365 = vor.u32 1.1754944e-38, %v1364
      %v1366 = vsel %vm1363, %v1365, %v1361
      %v1367 = vmul.f32 1.0, %v1366
      %v1368 = vrcp.pop %v1262
      %v1369 = vmul.f32 %v1262, %v1368
      %v1370 = vsub.f32 1.0, %v1369
      %v1371 = vmul.f32 %v1368, %v1370
      %v1372 = vadd.f32 %v1368, %v1371
      %vm1373 = vweird.f32 %v1262
      %vm1374 = vweird.f32 %v1368
      %vm1375 = vmor %vm1373, %vm1374
      %v1376 = vsel %vm1375, %v1368, %v1372
      %v1377 = vand.u32 2147483647, %v1262
      %vm1378 = vcmp.eq.f32.partialorder %v1377, 8.507059e+37
      %v1379 = vand.u32 %v1262, 2147483648
      %v1380 = vor.u32 1.1754944e-38, %v1379
      %v1381 = vsel %vm1378, %v1380, %v1376
      %v1382 = vmul.f32 1.0, %v1381
      %v1383 = vmul.f32 %v1208, %v1277
      %v1384 = vmul.f32 %v1211, %v1292
      %v1385 = vmul.f32 %v1214, %v1307
      %v1386 = vmul.f32 %v1217, %v1322
      %v1387 = vmul.f32 %v1220, %v1337
      %v1388 = vmul.f32 %v1223, %v1352
      %v1389 = vmul.f32 %v1226, %v1367
      %v1390 = vmul.f32 %v1229, %v1382
      %v1391 = vld [vmem:[%s10] sm:$0xff]
      %v1392 = vld [vmem:[%s10 + $0x8] sm:$0xff]
      %v1393 = vld [vmem:[%s10 + $0x10] sm:$0xff]
      %v1394 = vld [vmem:[%s10 + $0x18] sm:$0xff]
      %v1395 = vld [vmem:[%s11] sm:$0x1]
      %v1397 = vperm.slane %v1395, 0
      %v1400 = vsel %vm770, %v1383, 0
      %v1403 = vsel %vm770, %v1384, 0
      %v1406 = vsel %vm770, %v1385, 0
      %v1409 = vsel %vm770, %v1386, 0
      %v1412 = vsel %vm770, %v1387, 0
      %v1415 = vsel %vm770, %v1388, 0
      %v1418 = vsel %vm770, %v1389, 0
      %v1421 = vsel %vm770, %v1390, 0
      %1423 = vmatpush.msra.mxu0 0.0
      %1424 = vmatpush.msra.mxu0 0.0
      %1425 = vmatpush.msra.mxu0 0.0
      %1426 = vmatpush.msra.mxu0 0.0
      %1427 = vmatpush.msra.mxu0 0.0
      %1428 = vmatpush.msra.mxu0 0.0
      %1429 = vmatpush.msra.mxu0 0.0
      %1430 = vmatpush.msra.mxu0 0.0
      %1431 = vmatpush.msra.mxu0 0.0
      %1432 = vmatpush.msra.mxu0 0.0
      %1433 = vmatpush.msra.mxu0 0.0
      %1434 = vmatpush.msra.mxu0 0.0
      %1435 = vmatpush.msra.mxu0 %v1394
      %1436 = vmatpush.msra.mxu0 %v1393
      %1437 = vmatpush.msra.mxu0 %v1392
      %1438 = vmatpush.msra.mxu0 %v1391
      %1439 = vmatmul.f32.gmra.mxu0 %v1400
      %v1440 = vpop.f32.mrf.mxu0
      %v1441 = vadd.f32 %v1397, %v1440
      %1442 = vmatmul.f32.gmra.mxu0 %v1403
      %v1443 = vpop.f32.mrf.mxu0
      %v1444 = vadd.f32 %v1397, %v1443
      %1445 = vmatmul.f32.gmra.mxu0 %v1406
      %v1446 = vpop.f32.mrf.mxu0
      %v1447 = vadd.f32 %v1397, %v1446
      %1448 = vmatmul.f32.gmra.mxu0 %v1409
      %v1449 = vpop.f32.mrf.mxu0
      %v1450 = vadd.f32 %v1397, %v1449
      %1451 = vmatmul.f32.gmra.mxu0 %v1412
      %v1452 = vpop.f32.mrf.mxu0
      %v1453 = vadd.f32 %v1397, %v1452
      %1454 = vmatmul.f32.gmra.mxu0 %v1415
      %v1455 = vpop.f32.mrf.mxu0
      %v1456 = vadd.f32 %v1397, %v1455
      %1457 = vmatmul.f32.gmra.mxu0 %v1418
      %v1458 = vpop.f32.mrf.mxu0
      %v1459 = vadd.f32 %v1397, %v1458
      %1460 = vmatmul.f32.gmra.mxu0 %v1421
      %v1461 = vpop.f32.mrf.mxu0
      %v1462 = vadd.f32 %v1397, %v1461
      %1463 = vdwg.mxu0
      %v1464 = vsel %vm770, %v1441, 0.0
      %1465 = vadd.xlane.f32.xlu0 %v1464
      %v1466 = vpop.xlane.xlu0 %1465
      %v1467 = vsel %vm770, %v1444, 0.0
      %1468 = vadd.xlane.f32.xlu0 %v1467
      %v1469 = vpop.xlane.xlu0 %1468
      %v1470 = vsel %vm770, %v1447, 0.0
      %1471 = vadd.xlane.f32.xlu0 %v1470
      %v1472 = vpop.xlane.xlu0 %1471
      %v1473 = vsel %vm770, %v1450, 0.0
      %1474 = vadd.xlane.f32.xlu0 %v1473
      %v1475 = vpop.xlane.xlu0 %1474
      %v1476 = vsel %vm770, %v1453, 0.0
      %1477 = vadd.xlane.f32.xlu0 %v1476
      %v1478 = vpop.xlane.xlu0 %1477
      %v1479 = vsel %vm770, %v1456, 0.0
      %1480 = vadd.xlane.f32.xlu0 %v1479
      %v1481 = vpop.xlane.xlu0 %1480
      %v1482 = vsel %vm770, %v1459, 0.0
      %1483 = vadd.xlane.f32.xlu0 %v1482
      %v1484 = vpop.xlane.xlu0 %1483
      %v1485 = vsel %vm770, %v1462, 0.0
      %1486 = vadd.xlane.f32.xlu0 %v1485
      %v1487 = vpop.xlane.xlu0 %1486
      %v1488 = vrcp.pop 32.0
      %v1489 = vmul.f32 32.0, %v1488
      %v1490 = vsub.f32 1.0, %v1489
      %v1491 = vmul.f32 %v1488, %v1490
      %v1492 = vadd.f32 %v1488, %v1491
      %vm1493 = vweird.f32 %v1488
      %v1494 = vsel %vm1493, %v1488, %v1492
      %v1495 = vmul.f32 %v1466, %v1494
      %v1496 = vmul.f32 %v1469, %v1494
      %v1497 = vmul.f32 %v1472, %v1494
      %v1498 = vmul.f32 %v1475, %v1494
      %v1499 = vmul.f32 %v1478, %v1494
      %v1500 = vmul.f32 %v1481, %v1494
      %v1501 = vmul.f32 %v1484, %v1494
      %v1502 = vmul.f32 %v1487, %v1494
      %v1503 = vsub.f32 %v1441, %v1495
      %v1504 = vsub.f32 %v1444, %v1496
      %v1505 = vsub.f32 %v1447, %v1497
      %v1506 = vsub.f32 %v1450, %v1498
      %v1507 = vsub.f32 %v1453, %v1499
      %v1508 = vsub.f32 %v1456, %v1500
      %v1509 = vsub.f32 %v1459, %v1501
      %v1510 = vsub.f32 %v1462, %v1502
      %v1511 = vmul.f32 %v1503, %v1503
      %v1512 = vmul.f32 %v1504, %v1504
      %v1513 = vmul.f32 %v1505, %v1505
      %v1514 = vmul.f32 %v1506, %v1506
      %v1515 = vmul.f32 %v1507, %v1507
      %v1516 = vmul.f32 %v1508, %v1508
      %v1517 = vmul.f32 %v1509, %v1509
      %v1518 = vmul.f32 %v1510, %v1510
      %v1519 = vsel %vm770, %v1511, 0.0
      %1520 = vadd.xlane.f32.xlu0 %v1519
      %v1521 = vpop.xlane.xlu0 %1520
      %v1522 = vsel %vm770, %v1512, 0.0
      %1523 = vadd.xlane.f32.xlu0 %v1522
      %v1524 = vpop.xlane.xlu0 %1523
      %v1525 = vsel %vm770, %v1513, 0.0
      %1526 = vadd.xlane.f32.xlu0 %v1525
      %v1527 = vpop.xlane.xlu0 %1526
      %v1528 = vsel %vm770, %v1514, 0.0
      %1529 = vadd.xlane.f32.xlu0 %v1528
      %v1530 = vpop.xlane.xlu0 %1529
      %v1531 = vsel %vm770, %v1515, 0.0
      %1532 = vadd.xlane.f32.xlu0 %v1531
      %v1533 = vpop.xlane.xlu0 %1532
      %v1534 = vsel %vm770, %v1516, 0.0
      %1535 = vadd.xlane.f32.xlu0 %v1534
      %v1536 = vpop.xlane.xlu0 %1535
      %v1537 = vsel %vm770, %v1517, 0.0
      %1538 = vadd.xlane.f32.xlu0 %v1537
      %v1539 = vpop.xlane.xlu0 %1538
      %v1540 = vsel %vm770, %v1518, 0.0
      %1541 = vadd.xlane.f32.xlu0 %v1540
      %v1542 = vpop.xlane.xlu0 %1541
      %v1543 = vmul.f32 %v1521, %v1494
      %v1544 = vmul.f32 %v1524, %v1494
      %v1545 = vmul.f32 %v1527, %v1494
      %v1546 = vmul.f32 %v1530, %v1494
      %v1547 = vmul.f32 %v1533, %v1494
      %v1548 = vmul.f32 %v1536, %v1494
      %v1549 = vmul.f32 %v1539, %v1494
      %v1550 = vmul.f32 %v1542, %v1494
      %v1551 = vadd.f32 %v1543, 1e-05
      %v1552 = vadd.f32 %v1544, 1e-05
      %v1553 = vadd.f32 %v1545, 1e-05
      %v1554 = vadd.f32 %v1546, 1e-05
      %v1555 = vadd.f32 %v1547, 1e-05
      %v1556 = vadd.f32 %v1548, 1e-05
      %v1557 = vadd.f32 %v1549, 1e-05
      %v1558 = vadd.f32 %v1550, 1e-05
      %v1559 = vrsqrt.pop %v1551
      %v1560 = vmul.f32 %v1559, %v1551
      %v1561 = vmul.f32 %v1560, %v1559
      %v1562 = vmul.f32 0.5, %v1561
      %v1563 = vsub.f32 1.5, %v1562
      %v1564 = vmul.f32 %v1559, %v1563
      %vm1565 = vweird.f32 %v1551
      %vm1566 = vweird.f32 %v1559
      %vm1567 = vmor %vm1565, %vm1566
      %v1568 = vsel %vm1567, %v1559, %v1564
      %v1569 = vrsqrt.pop %v1552
      %v1570 = vmul.f32 %v1569, %v1552
      %v1571 = vmul.f32 %v1570, %v1569
      %v1572 = vmul.f32 0.5, %v1571
      %v1573 = vsub.f32 1.5, %v1572
      %v1574 = vmul.f32 %v1569, %v1573
      %vm1575 = vweird.f32 %v1552
      %vm1576 = vweird.f32 %v1569
      %vm1577 = vmor %vm1575, %vm1576
      %v1578 = vsel %vm1577, %v1569, %v1574
      %v1579 = vrsqrt.pop %v1553
      %v1580 = vmul.f32 %v1579, %v1553
      %v1581 = vmul.f32 %v1580, %v1579
      %v1582 = vmul.f32 0.5, %v1581
      %v1583 = vsub.f32 1.5, %v1582
      %v1584 = vmul.f32 %v1579, %v1583
      %vm1585 = vweird.f32 %v1553
      %vm1586 = vweird.f32 %v1579
      %vm1587 = vmor %vm1585, %vm1586
      %v1588 = vsel %vm1587, %v1579, %v1584
      %v1589 = vrsqrt.pop %v1554
      %v1590 = vmul.f32 %v1589, %v1554
      %v1591 = vmul.f32 %v1590, %v1589
      %v1592 = vmul.f32 0.5, %v1591
      %v1593 = vsub.f32 1.5, %v1592
      %v1594 = vmul.f32 %v1589, %v1593
      %vm1595 = vweird.f32 %v1554
      %vm1596 = vweird.f32 %v1589
      %vm1597 = vmor %vm1595, %vm1596
      %v1598 = vsel %vm1597, %v1589, %v1594
      %v1599 = vrsqrt.pop %v1555
      %v1600 = vmul.f32 %v1599, %v1555
      %v1601 = vmul.f32 %v1600, %v1599
      %v1602 = vmul.f32 0.5, %v1601
      %v1603 = vsub.f32 1.5, %v1602
      %v1604 = vmul.f32 %v1599, %v1603
      %vm1605 = vweird.f32 %v1555
      %vm1606 = vweird.f32 %v1599
      %vm1607 = vmor %vm1605, %vm1606
      %v1608 = vsel %vm1607, %v1599, %v1604
      %v1609 = vrsqrt.pop %v1556
      %v1610 = vmul.f32 %v1609, %v1556
      %v1611 = vmul.f32 %v1610, %v1609
      %v1612 = vmul.f32 0.5, %v1611
      %v1613 = vsub.f32 1.5, %v1612
      %v1614 = vmul.f32 %v1609, %v1613
      %vm1615 = vweird.f32 %v1556
      %vm1616 = vweird.f32 %v1609
      %vm1617 = vmor %vm1615, %vm1616
      %v1618 = vsel %vm1617, %v1609, %v1614
      %v1619 = vrsqrt.pop %v1557
      %v1620 = vmul.f32 %v1619, %v1557
      %v1621 = vmul.f32 %v1620, %v1619
      %v1622 = vmul.f32 0.5, %v1621
      %v1623 = vsub.f32 1.5, %v1622
      %v1624 = vmul.f32 %v1619, %v1623
      %vm1625 = vweird.f32 %v1557
      %vm1626 = vweird.f32 %v1619
      %vm1627 = vmor %vm1625, %vm1626
      %v1628 = vsel %vm1627, %v1619, %v1624
      %v1629 = vrsqrt.pop %v1558
      %v1630 = vmul.f32 %v1629, %v1558
      %v1631 = vmul.f32 %v1630, %v1629
      %v1632 = vmul.f32 0.5, %v1631
      %v1633 = vsub.f32 1.5, %v1632
      %v1634 = vmul.f32 %v1629, %v1633
      %vm1635 = vweird.f32 %v1558
      %vm1636 = vweird.f32 %v1629
      %vm1637 = vmor %vm1635, %vm1636
      %v1638 = vsel %vm1637, %v1629, %v1634
      %v1639 = vmul.f32 %v1503, %v1568
      %v1640 = vmul.f32 %v1504, %v1578
      %v1641 = vmul.f32 %v1505, %v1588
      %v1642 = vmul.f32 %v1506, %v1598
      %v1643 = vmul.f32 %v1507, %v1608
      %v1644 = vmul.f32 %v1508, %v1618
      %v1645 = vmul.f32 %v1509, %v1628
      %v1646 = vmul.f32 %v1510, %v1638
      %v1647 = vld [vmem:[%s12] sm:$0x1]
      %v1649 = vperm.slane %v1647, 0
      %v1651 = vmul.f32 %v1639, %v1649
      %v1652 = vmul.f32 %v1640, %v1649
      %v1653 = vmul.f32 %v1641, %v1649
      %v1654 = vmul.f32 %v1642, %v1649
      %v1655 = vmul.f32 %v1643, %v1649
      %v1656 = vmul.f32 %v1644, %v1649
      %v1657 = vmul.f32 %v1645, %v1649
      %v1658 = vmul.f32 %v1646, %v1649
      %v1659 = vld [vmem:[%s13] sm:$0x1]
      %v1661 = vperm.slane %v1659, 0
      %v1663 = vadd.f32 %v1651, %v1661
      %v1664 = vadd.f32 %v1652, %v1661
      %v1665 = vadd.f32 %v1653, %v1661
      %v1666 = vadd.f32 %v1654, %v1661
      %v1667 = vadd.f32 %v1655, %v1661
      %v1668 = vadd.f32 %v1656, %v1661
      %v1669 = vadd.f32 %v1657, %v1661
      %v1670 = vadd.f32 %v1658, %v1661
      %v1671 = vadd.f32 %v901, %v1663
      %v1672 = vadd.f32 %v902, %v1664
      %v1673 = vadd.f32 %v903, %v1665
      %v1674 = vadd.f32 %v904, %v1666
      %v1675 = vadd.f32 %v905, %v1667
      %v1676 = vadd.f32 %v906, %v1668
      %v1677 = vadd.f32 %v907, %v1669
      %v1678 = vadd.f32 %v908, %v1670
      %1679 = vst.msk [vmem:[%s513] sm:$0xff] %vm770, %v1671
      %1680 = vst.msk [vmem:[%s513 + $0x8] sm:$0xff] %vm770, %v1672
      %1681 = vst.msk [vmem:[%s513 + $0x10] sm:$0xff] %vm770, %v1673
      %1682 = vst.msk [vmem:[%s513 + $0x18] sm:$0xff] %vm770, %v1674
      %1683 = vst.msk [vmem:[%s513 + $0x20] sm:$0xff] %vm770, %v1675
      %1684 = vst.msk [vmem:[%s513 + $0x28] sm:$0xff] %vm770, %v1676
      %1685 = vst.msk [vmem:[%s513 + $0x30] sm:$0xff] %vm770, %v1677
      %1686 = vst.msk [vmem:[%s513 + $0x38] sm:$0xff] %vm770, %v1678
      %s1687 = smul.u32 8, %s25
      %p1688 = scmp.lt.s32.totalorder %s1687, 31
      %s1689 = scalar_select %p1688, %s1687, 31
      %s1690 = smul.addr %s1689, 8
      %s1691 = scalar_lea.vmem %s14, %s1690
      // Predicated region
      $region77: #{tpu_custom_call.1} parent=75 // pred_check
        %p1692 = pneg %p352
      $region78: #{tpu_custom_call.1} parent=75 // pred_check_branch
        %1694 = sbr.rel (%p1692) target = $region80
      $region79: #{tpu_custom_call.1} parent=75 // pred_region
        %s1695 = smul.u32 8, %s25
      $region80: #{tpu_custom_call.1} parent=75 // pred_fallthru
        _
    $region76: #{tpu_custom_call.1} parent=5 // pred_fallthru
      _
    %p1696 = scmp.le.s32.totalorder 2, %s20
    // Predicated region
    $region81: #{tpu_custom_call.1} parent=5 // pred_check
      %p1697 = pneg %p1696
    $region82: #{tpu_custom_call.1} parent=5 // pred_check_branch
      %1699 = sbr.rel (%p1697) target = $region84
    $region83: #{tpu_custom_call.1} parent=5 // pred_region
      %s1700 = ssub.s32 %s20, 2
      // Predicated region
      $region85: #{tpu_custom_call.1} parent=83 // pred_check
        %p1701 = pneg %p358
      $region86: #{tpu_custom_call.1} parent=83 // pred_check_branch
        %1703 = sbr.rel (%p1701) target = $region88
      $region87: #{tpu_custom_call.1} parent=83 // pred_region
        %s1704 = smul.u32 8, %s26
        %p1705 = scmp.lt.s32.totalorder %s1704, 31
        %s1706 = scalar_select %p1705, %s1704, 31
        %s1707 = smul.addr %s1706, 8
        %s1708 = scalar_lea.vmem %s14, %s1707
      $region88: #{tpu_custom_call.1} parent=83 // pred_fallthru
        _
    $region84: #{tpu_custom_call.1} parent=5 // pred_fallthru
      _
  $region6: #{tpu_custom_call.1} parent=0 // loop_footer
    %s24 = sadd.s32 1, %s20
  $region7: #{tpu_custom_call.1} parent=0 // loop_footer_branch
    %19 = sbr.rel target = $region3
  $region8: #{tpu_custom_call.1} parent=0 // loop_exit
    _

</llo_original>
